<compile_context>
chip_gen: v6e
topology: v6e:2x2x1
jax: 0.10.0
libtpu: 0.0.40
codegen_flags: <defaults>
</compile_context>

<pallas_src>
import functools
import math

import jax
import jax.numpy as jnp
from jax import lax
from jax.experimental import pallas as pl
from jax.experimental.pallas import tpu as pltpu


_BLOCK_PARAM_ORDER = ("ln1_g", "ln1_b", "w_qkv", "b_qkv", "w_o", "b_o",
                      "ln2_g", "ln2_b", "w_fc", "b_fc", "w_proj", "b_proj")


# ----------------------------------------------------------------------------
# In-kernel helpers (operate on VMEM-resident jnp values)
# ----------------------------------------------------------------------------

def _ln(x, g, b, eps=1e-5):
    """LayerNorm over the last axis.  x:(M,D) f32, g/b:(1,D) f32."""
    mean = jnp.mean(x, axis=-1, keepdims=True)
    cen = x - mean
    var = jnp.mean(cen * cen, axis=-1, keepdims=True)
    return cen * lax.rsqrt(var + eps) * g + b


def _residual_block(x, p, *, B, S, n_heads, causal):
    """Pre-LN CLIP residual attention block on a VMEM-resident (B*S, D) f32 value.

    bf16 operands on every MXU matmul, f32 accumulation, residuals fused in.
    """
    D = x.shape[-1]
    d = D // n_heads
    scale = 1.0 / math.sqrt(d)

    # ---- attention ----
    h = _ln(x, p["ln1_g"], p["ln1_b"])
    qkv = jnp.dot(h.astype(jnp.bfloat16), p["w_qkv"],
                  preferred_element_type=jnp.float32) + p["b_qkv"]          # (B*S, 3D)

    if causal:
        row = lax.broadcasted_iota(jnp.int32, (S, S), 0)
        col = lax.broadcasted_iota(jnp.int32, (S, S), 1)
        neg = jnp.where(col <= row, 0.0, -1e30).astype(jnp.float32)         # additive (S,S)

    attn = None
    for hh in range(n_heads):            # static unroll; heads never leave VMEM/vregs
        q = qkv[:, hh * d:(hh + 1) * d].reshape(B, S, d)
        k = qkv[:, D + hh * d:D + (hh + 1) * d].reshape(B, S, d)
        v = qkv[:, 2 * D + hh * d:2 * D + (hh + 1) * d].reshape(B, S, d)
        s = jnp.einsum('bqd,bkd->bqk', q.astype(jnp.bfloat16), k.astype(jnp.bfloat16),
                       preferred_element_type=jnp.float32) * scale          # (B,S,S) f32
        if causal:
            s = s + neg[None, :, :]
        s = s - jnp.max(s, axis=-1, keepdims=True)
        e = jnp.exp(s)
        pr = e * pl.reciprocal(jnp.sum(e, axis=-1, keepdims=True), approx=True)
        o = jnp.einsum('bqk,bkd->bqd', pr.astype(jnp.bfloat16), v.astype(jnp.bfloat16),
                       preferred_element_type=jnp.float32)                  # (B,S,d)
        # fold this head's slice of the output projection in here (avoids a lane concat)
        contrib = jnp.dot(o.reshape(B * S, d).astype(jnp.bfloat16),
                          p["w_o"][hh * d:(hh + 1) * d, :],
                          preferred_element_type=jnp.float32)               # (B*S, D)
        attn = contrib if attn is None else attn + contrib

    x = x + attn + p["b_o"]              # residual fused in-kernel

    # ---- MLP (QuickGELU) ----
    h = _ln(x, p["ln2_g"], p["ln2_b"])
    f = jnp.dot(h.astype(jnp.bfloat16), p["w_fc"],
                preferred_element_type=jnp.float32) + p["b_fc"]
    f = f * jax.nn.sigmoid(1.702 * f)
    f = jnp.dot(f.astype(jnp.bfloat16), p["w_proj"],
                preferred_element_type=jnp.float32) + p["b_proj"]
    return x + f                          # residual fused in-kernel


# ----------------------------------------------------------------------------
# The single fused Pallas kernel: ViT vision encoder + text encoder + CLIP head
# ----------------------------------------------------------------------------

def _clip_forward_kernel(*refs, B, Sv, heads_v, n_cls, St, heads_t, scale):
    # ---- unpack refs (inputs first, then outputs) ----
    (patches_ref, convw_ref, addpos_ref, lnpre_g_ref, lnpre_b_ref) = refs[0:5]
    v_blk_refs = refs[5:17]
    (lnpost_g_ref, lnpost_b_ref, vproj_ref) = refs[17:20]
    (prompts_ref, tpos_ref) = refs[20:22]
    t_blk_refs = refs[22:34]
    (lnf_g_ref, lnf_b_ref, sel_ref, tproj_ref) = refs[34:38]
    logits_ref, txtn_ref = refs[38], refs[39]

    # ---------- vision encoder ----------
    Dv = addpos_ref.shape[-1]
    # conv1 as a patch matmul (bf16 in, f32 acc); row 0 of each image is the zero CLS slot
    pe = jnp.dot(patches_ref[...], convw_ref[...],
                 preferred_element_type=jnp.float32)                         # (B*Sv, Dv)
    # addpos == pos_emb with class_embedding folded into row 0
    xv = (pe.reshape(B, Sv, Dv) + addpos_ref[...][None, :, :]).reshape(B * Sv, Dv)
    xv = _ln(xv, lnpre_g_ref[...], lnpre_b_ref[...])
    v_blk = dict(zip(_BLOCK_PARAM_ORDER, (r[...] for r in v_blk_refs)))
    xv = _residual_block(xv, v_blk, B=B, S=Sv, n_heads=heads_v, causal=False)
    cls_tok = xv.reshape(B, Sv, Dv)[:, 0, :]                                 # CLS token
    cls_tok = _ln(cls_tok, lnpost_g_ref[...], lnpost_b_ref[...])
    img = jnp.dot(cls_tok.astype(jnp.bfloat16), vproj_ref[...],
                  preferred_element_type=jnp.float32)                        # (B, E)

    # ---------- text encoder ----------
    Dt = tpos_ref.shape[-1]
    xt = (prompts_ref[...] + tpos_ref[...][None, :, :]).reshape(n_cls * St, Dt)
    t_blk = dict(zip(_BLOCK_PARAM_ORDER, (r[...] for r in t_blk_refs)))
    xt = _residual_block(xt, t_blk, B=n_cls, S=St, n_heads=heads_t, causal=True)
    xt = _ln(xt, lnf_g_ref[...], lnf_b_ref[...])                             # (n_cls*St, Dt)
    # EOT-token gather as a one-hot row-selection matmul -- stays in VMEM
    sel = jnp.dot(sel_ref[...], xt, preferred_element_type=jnp.float32)      # (n_cls, Dt)
    txt = jnp.dot(sel.astype(jnp.bfloat16), tproj_ref[...],
                  preferred_element_type=jnp.float32)                        # (n_cls, E)

    # ---------- CLIP head: L2-normalize + logit_scale.exp() * img_n @ txt_n.T ----------
    # tiny eps guards an all-zero feature row from producing inf/NaN logits
    imgn = img * lax.rsqrt(jnp.sum(img * img, axis=-1, keepdims=True) + 1e-12)
    txtn = txt * lax.rsqrt(jnp.sum(txt * txt, axis=-1, keepdims=True) + 1e-12)
    txtn_ref[...] = txtn
    logits_ref[...] = scale * lax.dot_general(
        imgn, txtn, (((1,), (1,)), ((), ())), preferred_element_type=jnp.float32)


# ----------------------------------------------------------------------------
# Wrappers (pallas_call setup; layout glue in plain JAX, all under one jit)
# ----------------------------------------------------------------------------

def _whole_specs(arrays):
    """Whole-array VMEM blocks for a grid=(1,) call (block == full dims)."""
    return [pl.BlockSpec(a.shape, lambda i, nd=a.ndim: (0,) * nd) for a in arrays]


def prompt_learner_forward(tp):
    """PromptLearner.forward (class_token_position == 'end', learned_cls=False)."""
    n_cls = tp["token_prefix"].shape[0]
    ctx = jnp.broadcast_to(tp["ctx"][None, :, :], (n_cls,) + tp["ctx"].shape)
    return jnp.concatenate([tp["token_prefix"], ctx, tp["token_suffix"]], axis=1)


def clip_test_time_tuning_forward(image, params):
    """ClipTestTimeTuning.forward for a 4-D image input -> inference(image)."""
    vp, tp = params["visual"], params["text"]
    patch, heads_v, heads_t = params["patch"], params["heads_v"], params["heads_t"]

    # ---- vision-side layout glue: conv1 (stride == kernel, no bias) as patch extraction ----
    B, C, H, W = image.shape
    gh, gw = H // patch, W // patch
    NP = gh * gw
    Sv = NP + 1
    CPP = C * patch * patch
    E = vp["proj"].shape[-1]

    patches = image.reshape(B, C, gh, patch, gw, patch)
    patches = patches.transpose(0, 2, 4, 1, 3, 5).reshape(B, NP, CPP)
    # prepend a zero "patch" per image for the CLS slot (class emb added via addpos)
    patches = jnp.concatenate([jnp.zeros((B, 1, CPP), patches.dtype), patches], axis=1)
    patches = patches.reshape(B * Sv, CPP).astype(jnp.bfloat16)

    # positional embedding with the class embedding folded into row 0
    addpos = vp["pos_emb"].at[0, :].add(vp["class_emb"][0])

    # ---- text-side layout glue: PromptLearner concat + EOT one-hot selection ----
    prompts = prompt_learner_forward(tp)                                     # (n_cls, St, Dt)
    n_cls, St, Dt = prompts.shape
    eot = jnp.argmax(tp["tokenized_prompts"], axis=-1)
    sel = jax.nn.one_hot(jnp.arange(n_cls) * St + eot, n_cls * St, dtype=jnp.float32)

    v_blk, t_blk = vp["block"], tp["block"]
    inputs = ([patches, vp["conv1_w"], addpos, vp["ln_pre_g"], vp["ln_pre_b"]]
              + [v_blk[n] for n in _BLOCK_PARAM_ORDER]
              + [vp["ln_post_g"], vp["ln_post_b"], vp["proj"]]
              + [prompts.astype(jnp.float32), tp["pos_emb"]]
              + [t_blk[n] for n in _BLOCK_PARAM_ORDER]
              + [tp["ln_final_g"], tp["ln_final_b"], sel, tp["text_projection"]])

    # logit_scale is frozen in CLIP inference; exp() baked in at trace time.
    kernel = functools.partial(_clip_forward_kernel,
                               B=B, Sv=Sv, heads_v=heads_v,
                               n_cls=n_cls, St=St, heads_t=heads_t,
                               scale=float(math.exp(params["logit_scale"])))

    logits, text_features = pl.pallas_call(
        kernel,
        out_shape=(jax.ShapeDtypeStruct((B, n_cls), jnp.float32),
                   jax.ShapeDtypeStruct((n_cls, E), jnp.float32)),
        grid=(1,),
        in_specs=_whole_specs(inputs),
        out_specs=(pl.BlockSpec((B, n_cls), lambda i: (0, 0)),
                   pl.BlockSpec((n_cls, E), lambda i: (0, 0))),
        compiler_params=pltpu.CompilerParams(dimension_semantics=("arbitrary",)),
    )(*inputs)
    return logits, text_features


# ----------------------------------------------------------------------------
# Deterministic synthetic parameters (matmul weights stored once in bf16)
# ----------------------------------------------------------------------------

def init_params(key, *, B, C, img, patch, Dv, heads_v, Dt, heads_t, E,
                n_cls, n_ctx, suffix_len):
    keys = iter(jax.random.split(key, 32))

    def nrm(shape, std=0.02):
        return jax.random.normal(next(keys), shape, jnp.float32) * std

    def block_params(D):
        return {
            "ln1_g": jnp.ones((1, D), jnp.float32), "ln1_b": jnp.zeros((1, D), jnp.float32),
            "w_qkv": nrm((D, 3 * D)).astype(jnp.bfloat16),
            "b_qkv": jnp.zeros((1, 3 * D), jnp.float32),
            "w_o": nrm((D, D)).astype(jnp.bfloat16),
            "b_o": jnp.zeros((1, D), jnp.float32),
            "ln2_g": jnp.ones((1, D), jnp.float32), "ln2_b": jnp.zeros((1, D), jnp.float32),
            "w_fc": nrm((D, 4 * D)).astype(jnp.bfloat16),
            "b_fc": jnp.zeros((1, 4 * D), jnp.float32),
            "w_proj": nrm((4 * D, D)).astype(jnp.bfloat16),
            "b_proj": jnp.zeros((1, D), jnp.float32),
        }

    n_patches = (img // patch) ** 2
    seq_t = 1 + n_ctx + suffix_len

    conv1_w = nrm((Dv, C, patch, patch))              # torch conv layout (out, in, kh, kw)
    visual = {
        # stored once in matmul layout (C*P*P, Dv), bf16 for the MXU
        "conv1_w": conv1_w.reshape(Dv, C * patch * patch).T.astype(jnp.bfloat16),
        "class_emb": nrm((1, Dv)),
        "pos_emb": nrm((1 + n_patches, Dv), std=0.01),
        "ln_pre_g": jnp.ones((1, Dv), jnp.float32), "ln_pre_b": jnp.zeros((1, Dv), jnp.float32),
        "block": block_params(Dv),
        "ln_post_g": jnp.ones((1, Dv), jnp.float32), "ln_post_b": jnp.zeros((1, Dv), jnp.float32),
        "proj": nrm((Dv, E)).astype(jnp.bfloat16),
    }

    # tokenized prompts: deterministic int ids whose argmax marks the EOT token
    eot_pos = jnp.array([1 + n_ctx + 1, 1 + n_ctx + 1, 1 + n_ctx + 2])[:n_cls] % seq_t
    base = jnp.tile(jnp.arange(seq_t, dtype=jnp.int32)[None, :], (n_cls, 1)) % 5 + 1
    tokenized = base.at[jnp.arange(n_cls), eot_pos].set(1000)

    text = {
        "ctx": nrm((n_ctx, Dt)),                       # PromptLearner.ctx  (std=0.02)
        "token_prefix": nrm((n_cls, 1, Dt)),           # SOS embedding
        "token_suffix": nrm((n_cls, suffix_len, Dt)),  # class name + EOS embeddings
        "tokenized_prompts": tokenized,
        "pos_emb": nrm((seq_t, Dt), std=0.01),
        "block": block_params(Dt),
        "ln_final_g": jnp.ones((1, Dt), jnp.float32), "ln_final_b": jnp.zeros((1, Dt), jnp.float32),
        "text_projection": nrm((Dt, E)).astype(jnp.bfloat16),
    }

    return {
        "visual": visual, "text": text,
        "patch": patch, "heads_v": heads_v, "heads_t": heads_t,
        "logit_scale": float(math.log(1.0 / 0.07)),    # clip.logit_scale.data
    }


# ----------------------------------------------------------------------------

if __name__ == "__main__":
    B, C, IMG, PATCH = 2, 3, 16, 8
    Dv, HEADS_V = 32, 2
    Dt, HEADS_T = 32, 2
    E = 32
    N_CLS, N_CTX, SUFFIX = 3, 4, 3

    key = jax.random.PRNGKey(0)
    k_params, k_img = jax.random.split(key)
    params = init_params(k_params, B=B, C=C, img=IMG, patch=PATCH, Dv=Dv,
                         heads_v=HEADS_V, Dt=Dt, heads_t=HEADS_T, E=E,
                         n_cls=N_CLS, n_ctx=N_CTX, suffix_len=SUFFIX)

    image = jax.random.normal(k_img, (B, C, IMG, IMG), jnp.float32)   # NCHW

    # One jit-compiled computation per forward: layout glue + single fused pallas_call.
    fwd = jax.jit(functools.partial(clip_test_time_tuning_forward, params=params))
    logits, text_features = fwd(image)
    jax.block_until_ready(logits)
    jax.block_until_ready(text_features)

    assert logits.shape == (B, N_CLS)
    assert text_features.shape == (N_CLS, E)
    print("KERNEL_OK")
</pallas_src>

<mosaic_0001>
module attributes {stable_mosaic.version = 11 : i64} {
  func.func @_clip_forward_kernel(%arg0: i32, %arg1: memref<10x192xbf16, #tpu.memory_space<vmem>>, %arg2: memref<192x32xbf16, #tpu.memory_space<vmem>>, %arg3: memref<5x32xf32, #tpu.memory_space<vmem>>, %arg4: memref<1x32xf32, #tpu.memory_space<vmem>>, %arg5: memref<1x32xf32, #tpu.memory_space<vmem>>, %arg6: memref<1x32xf32, #tpu.memory_space<vmem>>, %arg7: memref<1x32xf32, #tpu.memory_space<vmem>>, %arg8: memref<32x96xbf16, #tpu.memory_space<vmem>>, %arg9: memref<1x96xf32, #tpu.memory_space<vmem>>, %arg10: memref<32x32xbf16, #tpu.memory_space<vmem>>, %arg11: memref<1x32xf32, #tpu.memory_space<vmem>>, %arg12: memref<1x32xf32, #tpu.memory_space<vmem>>, %arg13: memref<1x32xf32, #tpu.memory_space<vmem>>, %arg14: memref<32x128xbf16, #tpu.memory_space<vmem>>, %arg15: memref<1x128xf32, #tpu.memory_space<vmem>>, %arg16: memref<128x32xbf16, #tpu.memory_space<vmem>>, %arg17: memref<1x32xf32, #tpu.memory_space<vmem>>, %arg18: memref<1x32xf32, #tpu.memory_space<vmem>>, %arg19: memref<1x32xf32, #tpu.memory_space<vmem>>, %arg20: memref<32x32xbf16, #tpu.memory_space<vmem>>, %arg21: memref<3x8x32xf32, #tpu.memory_space<vmem>>, %arg22: memref<8x32xf32, #tpu.memory_space<vmem>>, %arg23: memref<1x32xf32, #tpu.memory_space<vmem>>, %arg24: memref<1x32xf32, #tpu.memory_space<vmem>>, %arg25: memref<32x96xbf16, #tpu.memory_space<vmem>>, %arg26: memref<1x96xf32, #tpu.memory_space<vmem>>, %arg27: memref<32x32xbf16, #tpu.memory_space<vmem>>, %arg28: memref<1x32xf32, #tpu.memory_space<vmem>>, %arg29: memref<1x32xf32, #tpu.memory_space<vmem>>, %arg30: memref<1x32xf32, #tpu.memory_space<vmem>>, %arg31: memref<32x128xbf16, #tpu.memory_space<vmem>>, %arg32: memref<1x128xf32, #tpu.memory_space<vmem>>, %arg33: memref<128x32xbf16, #tpu.memory_space<vmem>>, %arg34: memref<1x32xf32, #tpu.memory_space<vmem>>, %arg35: memref<1x32xf32, #tpu.memory_space<vmem>>, %arg36: memref<1x32xf32, #tpu.memory_space<vmem>>, %arg37: memref<3x24xf32, #tpu.memory_space<vmem>>, %arg38: memref<32x32xbf16, #tpu.memory_space<vmem>>, %arg39: memref<2x3xf32, #tpu.memory_space<vmem>>, %arg40: memref<3x32xf32, #tpu.memory_space<vmem>>) attributes {dimension_semantics = [#tpu.dimension_semantics<arbitrary>], iteration_bounds = array<i64: 1>, scalar_prefetch = 0 : i64, scratch_operands = 0 : i64, tpu.core_type = #tpu.core_type<tc>, window_params = [{pipeline_mode = #tpu.pipeline_mode<synchronous>, transform_indices = @transform_0, window_bounds = array<i64: 10, 192>}, {pipeline_mode = #tpu.pipeline_mode<synchronous>, transform_indices = @transform_1, window_bounds = array<i64: 192, 32>}, {pipeline_mode = #tpu.pipeline_mode<synchronous>, transform_indices = @transform_2, window_bounds = array<i64: 5, 32>}, {pipeline_mode = #tpu.pipeline_mode<synchronous>, transform_indices = @transform_3, window_bounds = array<i64: 1, 32>}, {pipeline_mode = #tpu.pipeline_mode<synchronous>, transform_indices = @transform_4, window_bounds = array<i64: 1, 32>}, {pipeline_mode = #tpu.pipeline_mode<synchronous>, transform_indices = @transform_5, window_bounds = array<i64: 1, 32>}, {pipeline_mode = #tpu.pipeline_mode<synchronous>, transform_indices = @transform_6, window_bounds = array<i64: 1, 32>}, {pipeline_mode = #tpu.pipeline_mode<synchronous>, transform_indices = @transform_7, window_bounds = array<i64: 32, 96>}, {pipeline_mode = #tpu.pipeline_mode<synchronous>, transform_indices = @transform_8, window_bounds = array<i64: 1, 96>}, {pipeline_mode = #tpu.pipeline_mode<synchronous>, transform_indices = @transform_9, window_bounds = array<i64: 32, 32>}, {pipeline_mode = #tpu.pipeline_mode<synchronous>, transform_indices = @transform_10, window_bounds = array<i64: 1, 32>}, {pipeline_mode = #tpu.pipeline_mode<synchronous>, transform_indices = @transform_11, window_bounds = array<i64: 1, 32>}, {pipeline_mode = #tpu.pipeline_mode<synchronous>, transform_indices = @transform_12, window_bounds = array<i64: 1, 32>}, {pipeline_mode = #tpu.pipeline_mode<synchronous>, transform_indices = @transform_13, window_bounds = array<i64: 32, 128>}, {pipeline_mode = #tpu.pipeline_mode<synchronous>, transform_indices = @transform_14, window_bounds = array<i64: 1, 128>}, {pipeline_mode = #tpu.pipeline_mode<synchronous>, transform_indices = @transform_15, window_bounds = array<i64: 128, 32>}, {pipeline_mode = #tpu.pipeline_mode<synchronous>, transform_indices = @transform_16, window_bounds = array<i64: 1, 32>}, {pipeline_mode = #tpu.pipeline_mode<synchronous>, transform_indices = @transform_17, window_bounds = array<i64: 1, 32>}, {pipeline_mode = #tpu.pipeline_mode<synchronous>, transform_indices = @transform_18, window_bounds = array<i64: 1, 32>}, {pipeline_mode = #tpu.pipeline_mode<synchronous>, transform_indices = @transform_19, window_bounds = array<i64: 32, 32>}, {pipeline_mode = #tpu.pipeline_mode<synchronous>, transform_indices = @transform_20, window_bounds = array<i64: 3, 8, 32>}, {pipeline_mode = #tpu.pipeline_mode<synchronous>, transform_indices = @transform_21, window_bounds = array<i64: 8, 32>}, {pipeline_mode = #tpu.pipeline_mode<synchronous>, transform_indices = @transform_22, window_bounds = array<i64: 1, 32>}, {pipeline_mode = #tpu.pipeline_mode<synchronous>, transform_indices = @transform_23, window_bounds = array<i64: 1, 32>}, {pipeline_mode = #tpu.pipeline_mode<synchronous>, transform_indices = @transform_24, window_bounds = array<i64: 32, 96>}, {pipeline_mode = #tpu.pipeline_mode<synchronous>, transform_indices = @transform_25, window_bounds = array<i64: 1, 96>}, {pipeline_mode = #tpu.pipeline_mode<synchronous>, transform_indices = @transform_26, window_bounds = array<i64: 32, 32>}, {pipeline_mode = #tpu.pipeline_mode<synchronous>, transform_indices = @transform_27, window_bounds = array<i64: 1, 32>}, {pipeline_mode = #tpu.pipeline_mode<synchronous>, transform_indices = @transform_28, window_bounds = array<i64: 1, 32>}, {pipeline_mode = #tpu.pipeline_mode<synchronous>, transform_indices = @transform_29, window_bounds = array<i64: 1, 32>}, {pipeline_mode = #tpu.pipeline_mode<synchronous>, transform_indices = @transform_30, window_bounds = array<i64: 32, 128>}, {pipeline_mode = #tpu.pipeline_mode<synchronous>, transform_indices = @transform_31, window_bounds = array<i64: 1, 128>}, {pipeline_mode = #tpu.pipeline_mode<synchronous>, transform_indices = @transform_32, window_bounds = array<i64: 128, 32>}, {pipeline_mode = #tpu.pipeline_mode<synchronous>, transform_indices = @transform_33, window_bounds = array<i64: 1, 32>}, {pipeline_mode = #tpu.pipeline_mode<synchronous>, transform_indices = @transform_34, window_bounds = array<i64: 1, 32>}, {pipeline_mode = #tpu.pipeline_mode<synchronous>, transform_indices = @transform_35, window_bounds = array<i64: 1, 32>}, {pipeline_mode = #tpu.pipeline_mode<synchronous>, transform_indices = @transform_36, window_bounds = array<i64: 3, 24>}, {pipeline_mode = #tpu.pipeline_mode<synchronous>, transform_indices = @transform_37, window_bounds = array<i64: 32, 32>}, {pipeline_mode = #tpu.pipeline_mode<synchronous>, transform_indices = @transform_38, window_bounds = array<i64: 2, 3>}, {pipeline_mode = #tpu.pipeline_mode<synchronous>, transform_indices = @transform_39, window_bounds = array<i64: 3, 32>}]} {
    %c0 = arith.constant 0 : index
    %c0_0 = arith.constant 0 : index
    %0 = vector.load %arg1[%c0, %c0_0] : memref<10x192xbf16, #tpu.memory_space<vmem>>, vector<10x192xbf16>
    %c0_1 = arith.constant 0 : index
    %c0_2 = arith.constant 0 : index
    %1 = vector.load %arg2[%c0_1, %c0_2] : memref<192x32xbf16, #tpu.memory_space<vmem>>, vector<192x32xbf16>
    %cst = arith.constant dense<0.000000e+00> : vector<10x32xf32>
    %2 = tpu.matmul %0, %1, %cst {dimension_numbers = #tpu.dot_dimension_numbers<[1], [0], [0], [1], [0, 0, 1, 1], [], []>} : vector<10x192xbf16>, vector<192x32xbf16>, vector<10x32xf32> -> vector<10x32xf32>
    %3 = vector.shape_cast %2 : vector<10x32xf32> to vector<2x5x32xf32>
    %c0_3 = arith.constant 0 : index
    %c0_4 = arith.constant 0 : index
    %4 = vector.load %arg3[%c0_3, %c0_4] : memref<5x32xf32, #tpu.memory_space<vmem>>, vector<5x32xf32>
    %5 = vector.shape_cast %4 : vector<5x32xf32> to vector<1x5x32xf32>
    %6 = vector.broadcast %5 : vector<1x5x32xf32> to vector<2x5x32xf32>
    %7 = arith.addf %3, %6 : vector<2x5x32xf32>
    %8 = vector.shape_cast %7 : vector<2x5x32xf32> to vector<10x32xf32>
    %c0_5 = arith.constant 0 : index
    %c0_6 = arith.constant 0 : index
    %9 = vector.load %arg4[%c0_5, %c0_6] : memref<1x32xf32, #tpu.memory_space<vmem>>, vector<1x32xf32>
    %c0_7 = arith.constant 0 : index
    %c0_8 = arith.constant 0 : index
    %10 = vector.load %arg5[%c0_7, %c0_8] : memref<1x32xf32, #tpu.memory_space<vmem>>, vector<1x32xf32>
    %cst_9 = arith.constant dense<0.000000e+00> : vector<10xf32>
    %11 = vector.multi_reduction <add>, %8, %cst_9 [1] : vector<10x32xf32> to vector<10xf32>
    %12 = vector.shape_cast %11 : vector<10xf32> to vector<10x1xf32>
    %cst_10 = arith.constant 3.200000e+01 : f32
    %13 = vector.broadcast %cst_10 : f32 to vector<10x1xf32>
    %14 = arith.divf %12, %13 : vector<10x1xf32>
    %15 = vector.broadcast %14 : vector<10x1xf32> to vector<10x32xf32>
    %16 = arith.subf %8, %15 : vector<10x32xf32>
    %17 = arith.mulf %16, %16 : vector<10x32xf32>
    %cst_11 = arith.constant dense<0.000000e+00> : vector<10xf32>
    %18 = vector.multi_reduction <add>, %17, %cst_11 [1] : vector<10x32xf32> to vector<10xf32>
    %19 = vector.shape_cast %18 : vector<10xf32> to vector<10x1xf32>
    %cst_12 = arith.constant 3.200000e+01 : f32
    %20 = vector.broadcast %cst_12 : f32 to vector<10x1xf32>
    %21 = arith.divf %19, %20 : vector<10x1xf32>
    %cst_13 = arith.constant 9.99999974E-6 : f32
    %22 = vector.broadcast %cst_13 : f32 to vector<10x1xf32>
    %23 = arith.addf %21, %22 : vector<10x1xf32>
    %24 = math.rsqrt %23 : vector<10x1xf32>
    %25 = vector.broadcast %24 : vector<10x1xf32> to vector<10x32xf32>
    %26 = arith.mulf %16, %25 : vector<10x32xf32>
    %27 = vector.broadcast %9 : vector<1x32xf32> to vector<10x32xf32>
    %28 = arith.mulf %26, %27 : vector<10x32xf32>
    %29 = vector.broadcast %10 : vector<1x32xf32> to vector<10x32xf32>
    %30 = arith.addf %28, %29 : vector<10x32xf32>
    %c0_14 = arith.constant 0 : index
    %c0_15 = arith.constant 0 : index
    %31 = vector.load %arg6[%c0_14, %c0_15] : memref<1x32xf32, #tpu.memory_space<vmem>>, vector<1x32xf32>
    %c0_16 = arith.constant 0 : index
    %c0_17 = arith.constant 0 : index
    %32 = vector.load %arg7[%c0_16, %c0_17] : memref<1x32xf32, #tpu.memory_space<vmem>>, vector<1x32xf32>
    %c0_18 = arith.constant 0 : index
    %c0_19 = arith.constant 0 : index
    %33 = vector.load %arg8[%c0_18, %c0_19] : memref<32x96xbf16, #tpu.memory_space<vmem>>, vector<32x96xbf16>
    %c0_20 = arith.constant 0 : index
    %c0_21 = arith.constant 0 : index
    %34 = vector.load %arg9[%c0_20, %c0_21] : memref<1x96xf32, #tpu.memory_space<vmem>>, vector<1x96xf32>
    %c0_22 = arith.constant 0 : index
    %c0_23 = arith.constant 0 : index
    %35 = vector.load %arg10[%c0_22, %c0_23] : memref<32x32xbf16, #tpu.memory_space<vmem>>, vector<32x32xbf16>
    %c0_24 = arith.constant 0 : index
    %c0_25 = arith.constant 0 : index
    %36 = vector.load %arg11[%c0_24, %c0_25] : memref<1x32xf32, #tpu.memory_space<vmem>>, vector<1x32xf32>
    %c0_26 = arith.constant 0 : index
    %c0_27 = arith.constant 0 : index
    %37 = vector.load %arg12[%c0_26, %c0_27] : memref<1x32xf32, #tpu.memory_space<vmem>>, vector<1x32xf32>
    %c0_28 = arith.constant 0 : index
    %c0_29 = arith.constant 0 : index
    %38 = vector.load %arg13[%c0_28, %c0_29] : memref<1x32xf32, #tpu.memory_space<vmem>>, vector<1x32xf32>
    %c0_30 = arith.constant 0 : index
    %c0_31 = arith.constant 0 : index
    %39 = vector.load %arg14[%c0_30, %c0_31] : memref<32x128xbf16, #tpu.memory_space<vmem>>, vector<32x128xbf16>
    %c0_32 = arith.constant 0 : index
    %c0_33 = arith.constant 0 : index
    %40 = vector.load %arg15[%c0_32, %c0_33] : memref<1x128xf32, #tpu.memory_space<vmem>>, vector<1x128xf32>
    %c0_34 = arith.constant 0 : index
    %c0_35 = arith.constant 0 : index
    %41 = vector.load %arg16[%c0_34, %c0_35] : memref<128x32xbf16, #tpu.memory_space<vmem>>, vector<128x32xbf16>
    %c0_36 = arith.constant 0 : index
    %c0_37 = arith.constant 0 : index
    %42 = vector.load %arg17[%c0_36, %c0_37] : memref<1x32xf32, #tpu.memory_space<vmem>>, vector<1x32xf32>
    %cst_38 = arith.constant dense<0.000000e+00> : vector<10xf32>
    %43 = vector.multi_reduction <add>, %30, %cst_38 [1] : vector<10x32xf32> to vector<10xf32>
    %44 = vector.shape_cast %43 : vector<10xf32> to vector<10x1xf32>
    %cst_39 = arith.constant 3.200000e+01 : f32
    %45 = vector.broadcast %cst_39 : f32 to vector<10x1xf32>
    %46 = arith.divf %44, %45 : vector<10x1xf32>
    %47 = vector.broadcast %46 : vector<10x1xf32> to vector<10x32xf32>
    %48 = arith.subf %30, %47 : vector<10x32xf32>
    %49 = arith.mulf %48, %48 : vector<10x32xf32>
    %cst_40 = arith.constant dense<0.000000e+00> : vector<10xf32>
    %50 = vector.multi_reduction <add>, %49, %cst_40 [1] : vector<10x32xf32> to vector<10xf32>
    %51 = vector.shape_cast %50 : vector<10xf32> to vector<10x1xf32>
    %cst_41 = arith.constant 3.200000e+01 : f32
    %52 = vector.broadcast %cst_41 : f32 to vector<10x1xf32>
    %53 = arith.divf %51, %52 : vector<10x1xf32>
    %cst_42 = arith.constant 9.99999974E-6 : f32
    %54 = vector.broadcast %cst_42 : f32 to vector<10x1xf32>
    %55 = arith.addf %53, %54 : vector<10x1xf32>
    %56 = math.rsqrt %55 : vector<10x1xf32>
    %57 = vector.broadcast %56 : vector<10x1xf32> to vector<10x32xf32>
    %58 = arith.mulf %48, %57 : vector<10x32xf32>
    %59 = vector.broadcast %31 : vector<1x32xf32> to vector<10x32xf32>
    %60 = arith.mulf %58, %59 : vector<10x32xf32>
    %61 = vector.broadcast %32 : vector<1x32xf32> to vector<10x32xf32>
    %62 = arith.addf %60, %61 : vector<10x32xf32>
    %63 = arith.truncf %62 : vector<10x32xf32> to vector<10x32xbf16>
    %cst_43 = arith.constant dense<0.000000e+00> : vector<10x96xf32>
    %64 = tpu.matmul %63, %33, %cst_43 {dimension_numbers = #tpu.dot_dimension_numbers<[1], [0], [0], [1], [0, 0, 1, 1], [], []>} : vector<10x32xbf16>, vector<32x96xbf16>, vector<10x96xf32> -> vector<10x96xf32>
    %65 = vector.broadcast %34 : vector<1x96xf32> to vector<10x96xf32>
    %66 = arith.addf %64, %65 : vector<10x96xf32>
    %67 = vector.extract_strided_slice %66 {offsets = [0, 0], sizes = [10, 16], strides = [1, 1]} : vector<10x96xf32> to vector<10x16xf32>
    %68 = vector.shape_cast %67 : vector<10x16xf32> to vector<2x5x16xf32>
    %69 = vector.extract_strided_slice %66 {offsets = [0, 32], sizes = [10, 16], strides = [1, 1]} : vector<10x96xf32> to vector<10x16xf32>
    %70 = vector.shape_cast %69 : vector<10x16xf32> to vector<2x5x16xf32>
    %71 = vector.extract_strided_slice %66 {offsets = [0, 64], sizes = [10, 16], strides = [1, 1]} : vector<10x96xf32> to vector<10x16xf32>
    %72 = vector.shape_cast %71 : vector<10x16xf32> to vector<2x5x16xf32>
    %73 = arith.truncf %68 : vector<2x5x16xf32> to vector<2x5x16xbf16>
    %74 = arith.truncf %70 : vector<2x5x16xf32> to vector<2x5x16xbf16>
    "tpu.trace_start"() <{level = 10 : i32, message = "bqd,bkd->bqk"}> : () -> ()
    %cst_44 = arith.constant dense<0.000000e+00> : vector<2x5x5xf32>
    %75 = tpu.matmul %73, %74, %cst_44 {dimension_numbers = #tpu.dot_dimension_numbers<[2], [2], [1], [1], [0, 0, 0, 1, 1, 1], [0], [0]>} : vector<2x5x16xbf16>, vector<2x5x16xbf16>, vector<2x5x5xf32> -> vector<2x5x5xf32>
    "tpu.trace_stop"() : () -> ()
    %cst_45 = arith.constant 2.500000e-01 : f32
    %76 = vector.broadcast %cst_45 : f32 to vector<2x5x5xf32>
    %77 = arith.mulf %75, %76 : vector<2x5x5xf32>
    %cst_46 = arith.constant dense<0xFF800000> : vector<2x5xf32>
    %78 = vector.multi_reduction <maximumf>, %77, %cst_46 [2] : vector<2x5x5xf32> to vector<2x5xf32>
    %79 = vector.shape_cast %78 : vector<2x5xf32> to vector<2x5x1xf32>
    %80 = vector.broadcast %79 : vector<2x5x1xf32> to vector<2x5x5xf32>
    %81 = arith.subf %77, %80 : vector<2x5x5xf32>
    %82 = math.exp %81 : vector<2x5x5xf32>
    %cst_47 = arith.constant dense<0.000000e+00> : vector<2x5xf32>
    %83 = vector.multi_reduction <add>, %82, %cst_47 [2] : vector<2x5x5xf32> to vector<2x5xf32>
    %84 = vector.shape_cast %83 : vector<2x5xf32> to vector<2x5x1xf32>
    %85 = tpu.reciprocal %84 {approx = true} : vector<2x5x1xf32> -> vector<2x5x1xf32>
    %86 = vector.broadcast %85 : vector<2x5x1xf32> to vector<2x5x5xf32>
    %87 = arith.mulf %82, %86 : vector<2x5x5xf32>
    %88 = arith.truncf %87 : vector<2x5x5xf32> to vector<2x5x5xbf16>
    %89 = arith.truncf %72 : vector<2x5x16xf32> to vector<2x5x16xbf16>
    "tpu.trace_start"() <{level = 10 : i32, message = "bqk,bkd->bqd"}> : () -> ()
    %cst_48 = arith.constant dense<0.000000e+00> : vector<2x5x16xf32>
    %90 = tpu.matmul %88, %89, %cst_48 {dimension_numbers = #tpu.dot_dimension_numbers<[2], [1], [1], [2], [0, 0, 0, 1, 1, 2], [0], [0]>} : vector<2x5x5xbf16>, vector<2x5x16xbf16>, vector<2x5x16xf32> -> vector<2x5x16xf32>
    "tpu.trace_stop"() : () -> ()
    %91 = vector.shape_cast %90 : vector<2x5x16xf32> to vector<10x16xf32>
    %92 = arith.truncf %91 : vector<10x16xf32> to vector<10x16xbf16>
    %93 = vector.extract_strided_slice %35 {offsets = [0, 0], sizes = [16, 32], strides = [1, 1]} : vector<32x32xbf16> to vector<16x32xbf16>
    %cst_49 = arith.constant dense<0.000000e+00> : vector<10x32xf32>
    %94 = tpu.matmul %92, %93, %cst_49 {dimension_numbers = #tpu.dot_dimension_numbers<[1], [0], [0], [1], [0, 0, 1, 1], [], []>} : vector<10x16xbf16>, vector<16x32xbf16>, vector<10x32xf32> -> vector<10x32xf32>
    %95 = vector.extract_strided_slice %66 {offsets = [0, 16], sizes = [10, 16], strides = [1, 1]} : vector<10x96xf32> to vector<10x16xf32>
    %96 = vector.shape_cast %95 : vector<10x16xf32> to vector<2x5x16xf32>
    %97 = vector.extract_strided_slice %66 {offsets = [0, 48], sizes = [10, 16], strides = [1, 1]} : vector<10x96xf32> to vector<10x16xf32>
    %98 = vector.shape_cast %97 : vector<10x16xf32> to vector<2x5x16xf32>
    %99 = vector.extract_strided_slice %66 {offsets = [0, 80], sizes = [10, 16], strides = [1, 1]} : vector<10x96xf32> to vector<10x16xf32>
    %100 = vector.shape_cast %99 : vector<10x16xf32> to vector<2x5x16xf32>
    %101 = arith.truncf %96 : vector<2x5x16xf32> to vector<2x5x16xbf16>
    %102 = arith.truncf %98 : vector<2x5x16xf32> to vector<2x5x16xbf16>
    "tpu.trace_start"() <{level = 10 : i32, message = "bqd,bkd->bqk"}> : () -> ()
    %cst_50 = arith.constant dense<0.000000e+00> : vector<2x5x5xf32>
    %103 = tpu.matmul %101, %102, %cst_50 {dimension_numbers = #tpu.dot_dimension_numbers<[2], [2], [1], [1], [0, 0, 0, 1, 1, 1], [0], [0]>} : vector<2x5x16xbf16>, vector<2x5x16xbf16>, vector<2x5x5xf32> -> vector<2x5x5xf32>
    "tpu.trace_stop"() : () -> ()
    %cst_51 = arith.constant 2.500000e-01 : f32
    %104 = vector.broadcast %cst_51 : f32 to vector<2x5x5xf32>
    %105 = arith.mulf %103, %104 : vector<2x5x5xf32>
    %cst_52 = arith.constant dense<0xFF800000> : vector<2x5xf32>
    %106 = vector.multi_reduction <maximumf>, %105, %cst_52 [2] : vector<2x5x5xf32> to vector<2x5xf32>
    %107 = vector.shape_cast %106 : vector<2x5xf32> to vector<2x5x1xf32>
    %108 = vector.broadcast %107 : vector<2x5x1xf32> to vector<2x5x5xf32>
    %109 = arith.subf %105, %108 : vector<2x5x5xf32>
    %110 = math.exp %109 : vector<2x5x5xf32>
    %cst_53 = arith.constant dense<0.000000e+00> : vector<2x5xf32>
    %111 = vector.multi_reduction <add>, %110, %cst_53 [2] : vector<2x5x5xf32> to vector<2x5xf32>
    %112 = vector.shape_cast %111 : vector<2x5xf32> to vector<2x5x1xf32>
    %113 = tpu.reciprocal %112 {approx = true} : vector<2x5x1xf32> -> vector<2x5x1xf32>
    %114 = vector.broadcast %113 : vector<2x5x1xf32> to vector<2x5x5xf32>
    %115 = arith.mulf %110, %114 : vector<2x5x5xf32>
    %116 = arith.truncf %115 : vector<2x5x5xf32> to vector<2x5x5xbf16>
    %117 = arith.truncf %100 : vector<2x5x16xf32> to vector<2x5x16xbf16>
    "tpu.trace_start"() <{level = 10 : i32, message = "bqk,bkd->bqd"}> : () -> ()
    %cst_54 = arith.constant dense<0.000000e+00> : vector<2x5x16xf32>
    %118 = tpu.matmul %116, %117, %cst_54 {dimension_numbers = #tpu.dot_dimension_numbers<[2], [1], [1], [2], [0, 0, 0, 1, 1, 2], [0], [0]>} : vector<2x5x5xbf16>, vector<2x5x16xbf16>, vector<2x5x16xf32> -> vector<2x5x16xf32>
    "tpu.trace_stop"() : () -> ()
    %119 = vector.shape_cast %118 : vector<2x5x16xf32> to vector<10x16xf32>
    %120 = arith.truncf %119 : vector<10x16xf32> to vector<10x16xbf16>
    %121 = vector.extract_strided_slice %35 {offsets = [16, 0], sizes = [16, 32], strides = [1, 1]} : vector<32x32xbf16> to vector<16x32xbf16>
    %cst_55 = arith.constant dense<0.000000e+00> : vector<10x32xf32>
    %122 = tpu.matmul %120, %121, %cst_55 {dimension_numbers = #tpu.dot_dimension_numbers<[1], [0], [0], [1], [0, 0, 1, 1], [], []>} : vector<10x16xbf16>, vector<16x32xbf16>, vector<10x32xf32> -> vector<10x32xf32>
    %123 = arith.addf %94, %122 : vector<10x32xf32>
    %124 = arith.addf %30, %123 : vector<10x32xf32>
    %125 = vector.broadcast %36 : vector<1x32xf32> to vector<10x32xf32>
    %126 = arith.addf %124, %125 : vector<10x32xf32>
    %cst_56 = arith.constant dense<0.000000e+00> : vector<10xf32>
    %127 = vector.multi_reduction <add>, %126, %cst_56 [1] : vector<10x32xf32> to vector<10xf32>
    %128 = vector.shape_cast %127 : vector<10xf32> to vector<10x1xf32>
    %cst_57 = arith.constant 3.200000e+01 : f32
    %129 = vector.broadcast %cst_57 : f32 to vector<10x1xf32>
    %130 = arith.divf %128, %129 : vector<10x1xf32>
    %131 = vector.broadcast %130 : vector<10x1xf32> to vector<10x32xf32>
    %132 = arith.subf %126, %131 : vector<10x32xf32>
    %133 = arith.mulf %132, %132 : vector<10x32xf32>
    %cst_58 = arith.constant dense<0.000000e+00> : vector<10xf32>
    %134 = vector.multi_reduction <add>, %133, %cst_58 [1] : vector<10x32xf32> to vector<10xf32>
    %135 = vector.shape_cast %134 : vector<10xf32> to vector<10x1xf32>
    %cst_59 = arith.constant 3.200000e+01 : f32
    %136 = vector.broadcast %cst_59 : f32 to vector<10x1xf32>
    %137 = arith.divf %135, %136 : vector<10x1xf32>
    %cst_60 = arith.constant 9.99999974E-6 : f32
    %138 = vector.broadcast %cst_60 : f32 to vector<10x1xf32>
    %139 = arith.addf %137, %138 : vector<10x1xf32>
    %140 = math.rsqrt %139 : vector<10x1xf32>
    %141 = vector.broadcast %140 : vector<10x1xf32> to vector<10x32xf32>
    %142 = arith.mulf %132, %141 : vector<10x32xf32>
    %143 = vector.broadcast %37 : vector<1x32xf32> to vector<10x32xf32>
    %144 = arith.mulf %142, %143 : vector<10x32xf32>
    %145 = vector.broadcast %38 : vector<1x32xf32> to vector<10x32xf32>
    %146 = arith.addf %144, %145 : vector<10x32xf32>
    %147 = arith.truncf %146 : vector<10x32xf32> to vector<10x32xbf16>
    %cst_61 = arith.constant dense<0.000000e+00> : vector<10x128xf32>
    %148 = tpu.matmul %147, %39, %cst_61 {dimension_numbers = #tpu.dot_dimension_numbers<[1], [0], [0], [1], [0, 0, 1, 1], [], []>} : vector<10x32xbf16>, vector<32x128xbf16>, vector<10x128xf32> -> vector<10x128xf32>
    %149 = vector.broadcast %40 : vector<1x128xf32> to vector<10x128xf32>
    %150 = arith.addf %148, %149 : vector<10x128xf32>
    %cst_62 = arith.constant 1.702000e+00 : f32
    %151 = vector.broadcast %cst_62 : f32 to vector<10x128xf32>
    %152 = arith.mulf %151, %150 : vector<10x128xf32>
    %153 = arith.negf %152 : vector<10x128xf32>
    %154 = math.exp %153 : vector<10x128xf32>
    %cst_63 = arith.constant 1.000000e+00 : f32
    %155 = vector.broadcast %cst_63 : f32 to vector<10x128xf32>
    %156 = arith.addf %155, %154 : vector<10x128xf32>
    %157 = arith.divf %155, %156 : vector<10x128xf32>
    %158 = arith.mulf %150, %157 : vector<10x128xf32>
    %159 = arith.truncf %158 : vector<10x128xf32> to vector<10x128xbf16>
    %cst_64 = arith.constant dense<0.000000e+00> : vector<10x32xf32>
    %160 = tpu.matmul %159, %41, %cst_64 {dimension_numbers = #tpu.dot_dimension_numbers<[1], [0], [0], [1], [0, 0, 1, 1], [], []>} : vector<10x128xbf16>, vector<128x32xbf16>, vector<10x32xf32> -> vector<10x32xf32>
    %161 = vector.broadcast %42 : vector<1x32xf32> to vector<10x32xf32>
    %162 = arith.addf %160, %161 : vector<10x32xf32>
    %163 = arith.addf %126, %162 : vector<10x32xf32>
    %164 = vector.shape_cast %163 : vector<10x32xf32> to vector<2x5x32xf32>
    %165 = vector.extract_strided_slice %164 {offsets = [0, 0, 0], sizes = [2, 1, 32], strides = [1, 1, 1]} : vector<2x5x32xf32> to vector<2x1x32xf32>
    %166 = vector.shape_cast %165 : vector<2x1x32xf32> to vector<2x32xf32>
    %c0_65 = arith.constant 0 : index
    %c0_66 = arith.constant 0 : index
    %167 = vector.load %arg18[%c0_65, %c0_66] : memref<1x32xf32, #tpu.memory_space<vmem>>, vector<1x32xf32>
    %c0_67 = arith.constant 0 : index
    %c0_68 = arith.constant 0 : index
    %168 = vector.load %arg19[%c0_67, %c0_68] : memref<1x32xf32, #tpu.memory_space<vmem>>, vector<1x32xf32>
    %cst_69 = arith.constant dense<0.000000e+00> : vector<2xf32>
    %169 = vector.multi_reduction <add>, %166, %cst_69 [1] : vector<2x32xf32> to vector<2xf32>
    %170 = vector.shape_cast %169 : vector<2xf32> to vector<2x1xf32>
    %cst_70 = arith.constant 3.200000e+01 : f32
    %171 = vector.broadcast %cst_70 : f32 to vector<2x1xf32>
    %172 = arith.divf %170, %171 : vector<2x1xf32>
    %173 = vector.broadcast %172 : vector<2x1xf32> to vector<2x32xf32>
    %174 = arith.subf %166, %173 : vector<2x32xf32>
    %175 = arith.mulf %174, %174 : vector<2x32xf32>
    %cst_71 = arith.constant dense<0.000000e+00> : vector<2xf32>
    %176 = vector.multi_reduction <add>, %175, %cst_71 [1] : vector<2x32xf32> to vector<2xf32>
    %177 = vector.shape_cast %176 : vector<2xf32> to vector<2x1xf32>
    %cst_72 = arith.constant 3.200000e+01 : f32
    %178 = vector.broadcast %cst_72 : f32 to vector<2x1xf32>
    %179 = arith.divf %177, %178 : vector<2x1xf32>
    %cst_73 = arith.constant 9.99999974E-6 : f32
    %180 = vector.broadcast %cst_73 : f32 to vector<2x1xf32>
    %181 = arith.addf %179, %180 : vector<2x1xf32>
    %182 = math.rsqrt %181 : vector<2x1xf32>
    %183 = vector.broadcast %182 : vector<2x1xf32> to vector<2x32xf32>
    %184 = arith.mulf %174, %183 : vector<2x32xf32>
    %185 = vector.broadcast %167 : vector<1x32xf32> to vector<2x32xf32>
    %186 = arith.mulf %184, %185 : vector<2x32xf32>
    %187 = vector.broadcast %168 : vector<1x32xf32> to vector<2x32xf32>
    %188 = arith.addf %186, %187 : vector<2x32xf32>
    %189 = arith.truncf %188 : vector<2x32xf32> to vector<2x32xbf16>
    %c0_74 = arith.constant 0 : index
    %c0_75 = arith.constant 0 : index
    %190 = vector.load %arg20[%c0_74, %c0_75] : memref<32x32xbf16, #tpu.memory_space<vmem>>, vector<32x32xbf16>
    %cst_76 = arith.constant dense<0.000000e+00> : vector<2x32xf32>
    %191 = tpu.matmul %189, %190, %cst_76 {dimension_numbers = #tpu.dot_dimension_numbers<[1], [0], [0], [1], [0, 0, 1, 1], [], []>} : vector<2x32xbf16>, vector<32x32xbf16>, vector<2x32xf32> -> vector<2x32xf32>
    %c0_77 = arith.constant 0 : index
    %c0_78 = arith.constant 0 : index
    %c0_79 = arith.constant 0 : index
    %192 = vector.load %arg21[%c0_77, %c0_78, %c0_79] : memref<3x8x32xf32, #tpu.memory_space<vmem>>, vector<3x8x32xf32>
    %c0_80 = arith.constant 0 : index
    %c0_81 = arith.constant 0 : index
    %193 = vector.load %arg22[%c0_80, %c0_81] : memref<8x32xf32, #tpu.memory_space<vmem>>, vector<8x32xf32>
    %194 = vector.shape_cast %193 : vector<8x32xf32> to vector<1x8x32xf32>
    %195 = vector.broadcast %194 : vector<1x8x32xf32> to vector<3x8x32xf32>
    %196 = arith.addf %192, %195 : vector<3x8x32xf32>
    %197 = vector.shape_cast %196 : vector<3x8x32xf32> to vector<24x32xf32>
    %c0_82 = arith.constant 0 : index
    %c0_83 = arith.constant 0 : index
    %198 = vector.load %arg23[%c0_82, %c0_83] : memref<1x32xf32, #tpu.memory_space<vmem>>, vector<1x32xf32>
    %c0_84 = arith.constant 0 : index
    %c0_85 = arith.constant 0 : index
    %199 = vector.load %arg24[%c0_84, %c0_85] : memref<1x32xf32, #tpu.memory_space<vmem>>, vector<1x32xf32>
    %c0_86 = arith.constant 0 : index
    %c0_87 = arith.constant 0 : index
    %200 = vector.load %arg25[%c0_86, %c0_87] : memref<32x96xbf16, #tpu.memory_space<vmem>>, vector<32x96xbf16>
    %c0_88 = arith.constant 0 : index
    %c0_89 = arith.constant 0 : index
    %201 = vector.load %arg26[%c0_88, %c0_89] : memref<1x96xf32, #tpu.memory_space<vmem>>, vector<1x96xf32>
    %c0_90 = arith.constant 0 : index
    %c0_91 = arith.constant 0 : index
    %202 = vector.load %arg27[%c0_90, %c0_91] : memref<32x32xbf16, #tpu.memory_space<vmem>>, vector<32x32xbf16>
    %c0_92 = arith.constant 0 : index
    %c0_93 = arith.constant 0 : index
    %203 = vector.load %arg28[%c0_92, %c0_93] : memref<1x32xf32, #tpu.memory_space<vmem>>, vector<1x32xf32>
    %c0_94 = arith.constant 0 : index
    %c0_95 = arith.constant 0 : index
    %204 = vector.load %arg29[%c0_94, %c0_95] : memref<1x32xf32, #tpu.memory_space<vmem>>, vector<1x32xf32>
    %c0_96 = arith.constant 0 : index
    %c0_97 = arith.constant 0 : index
    %205 = vector.load %arg30[%c0_96, %c0_97] : memref<1x32xf32, #tpu.memory_space<vmem>>, vector<1x32xf32>
    %c0_98 = arith.constant 0 : index
    %c0_99 = arith.constant 0 : index
    %206 = vector.load %arg31[%c0_98, %c0_99] : memref<32x128xbf16, #tpu.memory_space<vmem>>, vector<32x128xbf16>
    %c0_100 = arith.constant 0 : index
    %c0_101 = arith.constant 0 : index
    %207 = vector.load %arg32[%c0_100, %c0_101] : memref<1x128xf32, #tpu.memory_space<vmem>>, vector<1x128xf32>
    %c0_102 = arith.constant 0 : index
    %c0_103 = arith.constant 0 : index
    %208 = vector.load %arg33[%c0_102, %c0_103] : memref<128x32xbf16, #tpu.memory_space<vmem>>, vector<128x32xbf16>
    %c0_104 = arith.constant 0 : index
    %c0_105 = arith.constant 0 : index
    %209 = vector.load %arg34[%c0_104, %c0_105] : memref<1x32xf32, #tpu.memory_space<vmem>>, vector<1x32xf32>
    %cst_106 = arith.constant dense<0.000000e+00> : vector<24xf32>
    %210 = vector.multi_reduction <add>, %197, %cst_106 [1] : vector<24x32xf32> to vector<24xf32>
    %211 = vector.shape_cast %210 : vector<24xf32> to vector<24x1xf32>
    %cst_107 = arith.constant 3.200000e+01 : f32
    %212 = vector.broadcast %cst_107 : f32 to vector<24x1xf32>
    %213 = arith.divf %211, %212 : vector<24x1xf32>
    %214 = vector.broadcast %213 : vector<24x1xf32> to vector<24x32xf32>
    %215 = arith.subf %197, %214 : vector<24x32xf32>
    %216 = arith.mulf %215, %215 : vector<24x32xf32>
    %cst_108 = arith.constant dense<0.000000e+00> : vector<24xf32>
    %217 = vector.multi_reduction <add>, %216, %cst_108 [1] : vector<24x32xf32> to vector<24xf32>
    %218 = vector.shape_cast %217 : vector<24xf32> to vector<24x1xf32>
    %cst_109 = arith.constant 3.200000e+01 : f32
    %219 = vector.broadcast %cst_109 : f32 to vector<24x1xf32>
    %220 = arith.divf %218, %219 : vector<24x1xf32>
    %cst_110 = arith.constant 9.99999974E-6 : f32
    %221 = vector.broadcast %cst_110 : f32 to vector<24x1xf32>
    %222 = arith.addf %220, %221 : vector<24x1xf32>
    %223 = math.rsqrt %222 : vector<24x1xf32>
    %224 = vector.broadcast %223 : vector<24x1xf32> to vector<24x32xf32>
    %225 = arith.mulf %215, %224 : vector<24x32xf32>
    %226 = vector.broadcast %198 : vector<1x32xf32> to vector<24x32xf32>
    %227 = arith.mulf %225, %226 : vector<24x32xf32>
    %228 = vector.broadcast %199 : vector<1x32xf32> to vector<24x32xf32>
    %229 = arith.addf %227, %228 : vector<24x32xf32>
    %230 = arith.truncf %229 : vector<24x32xf32> to vector<24x32xbf16>
    %cst_111 = arith.constant dense<0.000000e+00> : vector<24x96xf32>
    %231 = tpu.matmul %230, %200, %cst_111 {dimension_numbers = #tpu.dot_dimension_numbers<[1], [0], [0], [1], [0, 0, 1, 1], [], []>} : vector<24x32xbf16>, vector<32x96xbf16>, vector<24x96xf32> -> vector<24x96xf32>
    %232 = vector.broadcast %201 : vector<1x96xf32> to vector<24x96xf32>
    %233 = arith.addf %231, %232 : vector<24x96xf32>
    %234 = tpu.iota {dimensions = array<i32: 0>} : vector<8x8xi32>
    %235 = tpu.iota {dimensions = array<i32: 1>} : vector<8x8xi32>
    %236 = arith.cmpi sle, %235, %234 : vector<8x8xi32>
    %cst_112 = arith.constant 0.000000e+00 : f32
    %cst_113 = arith.constant -1.000000e+30 : f32
    %237 = vector.broadcast %cst_112 : f32 to vector<8x8xf32>
    %238 = vector.broadcast %cst_113 : f32 to vector<8x8xf32>
    %239 = arith.select %236, %237, %238 : vector<8x8xi1>, vector<8x8xf32>
    %240 = vector.extract_strided_slice %233 {offsets = [0, 0], sizes = [24, 16], strides = [1, 1]} : vector<24x96xf32> to vector<24x16xf32>
    %241 = vector.shape_cast %240 : vector<24x16xf32> to vector<3x8x16xf32>
    %242 = vector.extract_strided_slice %233 {offsets = [0, 32], sizes = [24, 16], strides = [1, 1]} : vector<24x96xf32> to vector<24x16xf32>
    %243 = vector.shape_cast %242 : vector<24x16xf32> to vector<3x8x16xf32>
    %244 = vector.extract_strided_slice %233 {offsets = [0, 64], sizes = [24, 16], strides = [1, 1]} : vector<24x96xf32> to vector<24x16xf32>
    %245 = vector.shape_cast %244 : vector<24x16xf32> to vector<3x8x16xf32>
    %246 = arith.truncf %241 : vector<3x8x16xf32> to vector<3x8x16xbf16>
    %247 = arith.truncf %243 : vector<3x8x16xf32> to vector<3x8x16xbf16>
    "tpu.trace_start"() <{level = 10 : i32, message = "bqd,bkd->bqk"}> : () -> ()
    %cst_114 = arith.constant dense<0.000000e+00> : vector<3x8x8xf32>
    %248 = tpu.matmul %246, %247, %cst_114 {dimension_numbers = #tpu.dot_dimension_numbers<[2], [2], [1], [1], [0, 0, 0, 1, 1, 1], [0], [0]>} : vector<3x8x16xbf16>, vector<3x8x16xbf16>, vector<3x8x8xf32> -> vector<3x8x8xf32>
    "tpu.trace_stop"() : () -> ()
    %cst_115 = arith.constant 2.500000e-01 : f32
    %249 = vector.broadcast %cst_115 : f32 to vector<3x8x8xf32>
    %250 = arith.mulf %248, %249 : vector<3x8x8xf32>
    %251 = vector.shape_cast %239 : vector<8x8xf32> to vector<1x8x8xf32>
    %252 = vector.broadcast %251 : vector<1x8x8xf32> to vector<3x8x8xf32>
    %253 = arith.addf %250, %252 : vector<3x8x8xf32>
    %cst_116 = arith.constant dense<0xFF800000> : vector<3x8xf32>
    %254 = vector.multi_reduction <maximumf>, %253, %cst_116 [2] : vector<3x8x8xf32> to vector<3x8xf32>
    %255 = vector.shape_cast %254 : vector<3x8xf32> to vector<3x8x1xf32>
    %256 = vector.broadcast %255 : vector<3x8x1xf32> to vector<3x8x8xf32>
    %257 = arith.subf %253, %256 : vector<3x8x8xf32>
    %258 = math.exp %257 : vector<3x8x8xf32>
    %cst_117 = arith.constant dense<0.000000e+00> : vector<3x8xf32>
    %259 = vector.multi_reduction <add>, %258, %cst_117 [2] : vector<3x8x8xf32> to vector<3x8xf32>
    %260 = vector.shape_cast %259 : vector<3x8xf32> to vector<3x8x1xf32>
    %261 = tpu.reciprocal %260 {approx = true} : vector<3x8x1xf32> -> vector<3x8x1xf32>
    %262 = vector.broadcast %261 : vector<3x8x1xf32> to vector<3x8x8xf32>
    %263 = arith.mulf %258, %262 : vector<3x8x8xf32>
    %264 = arith.truncf %263 : vector<3x8x8xf32> to vector<3x8x8xbf16>
    %265 = arith.truncf %245 : vector<3x8x16xf32> to vector<3x8x16xbf16>
    "tpu.trace_start"() <{level = 10 : i32, message = "bqk,bkd->bqd"}> : () -> ()
    %cst_118 = arith.constant dense<0.000000e+00> : vector<3x8x16xf32>
    %266 = tpu.matmul %264, %265, %cst_118 {dimension_numbers = #tpu.dot_dimension_numbers<[2], [1], [1], [2], [0, 0, 0, 1, 1, 2], [0], [0]>} : vector<3x8x8xbf16>, vector<3x8x16xbf16>, vector<3x8x16xf32> -> vector<3x8x16xf32>
    "tpu.trace_stop"() : () -> ()
    %267 = vector.shape_cast %266 : vector<3x8x16xf32> to vector<24x16xf32>
    %268 = arith.truncf %267 : vector<24x16xf32> to vector<24x16xbf16>
    %269 = vector.extract_strided_slice %202 {offsets = [0, 0], sizes = [16, 32], strides = [1, 1]} : vector<32x32xbf16> to vector<16x32xbf16>
    %cst_119 = arith.constant dense<0.000000e+00> : vector<24x32xf32>
    %270 = tpu.matmul %268, %269, %cst_119 {dimension_numbers = #tpu.dot_dimension_numbers<[1], [0], [0], [1], [0, 0, 1, 1], [], []>} : vector<24x16xbf16>, vector<16x32xbf16>, vector<24x32xf32> -> vector<24x32xf32>
    %271 = vector.extract_strided_slice %233 {offsets = [0, 16], sizes = [24, 16], strides = [1, 1]} : vector<24x96xf32> to vector<24x16xf32>
    %272 = vector.shape_cast %271 : vector<24x16xf32> to vector<3x8x16xf32>
    %273 = vector.extract_strided_slice %233 {offsets = [0, 48], sizes = [24, 16], strides = [1, 1]} : vector<24x96xf32> to vector<24x16xf32>
    %274 = vector.shape_cast %273 : vector<24x16xf32> to vector<3x8x16xf32>
    %275 = vector.extract_strided_slice %233 {offsets = [0, 80], sizes = [24, 16], strides = [1, 1]} : vector<24x96xf32> to vector<24x16xf32>
    %276 = vector.shape_cast %275 : vector<24x16xf32> to vector<3x8x16xf32>
    %277 = arith.truncf %272 : vector<3x8x16xf32> to vector<3x8x16xbf16>
    %278 = arith.truncf %274 : vector<3x8x16xf32> to vector<3x8x16xbf16>
    "tpu.trace_start"() <{level = 10 : i32, message = "bqd,bkd->bqk"}> : () -> ()
    %cst_120 = arith.constant dense<0.000000e+00> : vector<3x8x8xf32>
    %279 = tpu.matmul %277, %278, %cst_120 {dimension_numbers = #tpu.dot_dimension_numbers<[2], [2], [1], [1], [0, 0, 0, 1, 1, 1], [0], [0]>} : vector<3x8x16xbf16>, vector<3x8x16xbf16>, vector<3x8x8xf32> -> vector<3x8x8xf32>
    "tpu.trace_stop"() : () -> ()
    %cst_121 = arith.constant 2.500000e-01 : f32
    %280 = vector.broadcast %cst_121 : f32 to vector<3x8x8xf32>
    %281 = arith.mulf %279, %280 : vector<3x8x8xf32>
    %282 = vector.shape_cast %239 : vector<8x8xf32> to vector<1x8x8xf32>
    %283 = vector.broadcast %282 : vector<1x8x8xf32> to vector<3x8x8xf32>
    %284 = arith.addf %281, %283 : vector<3x8x8xf32>
    %cst_122 = arith.constant dense<0xFF800000> : vector<3x8xf32>
    %285 = vector.multi_reduction <maximumf>, %284, %cst_122 [2] : vector<3x8x8xf32> to vector<3x8xf32>
    %286 = vector.shape_cast %285 : vector<3x8xf32> to vector<3x8x1xf32>
    %287 = vector.broadcast %286 : vector<3x8x1xf32> to vector<3x8x8xf32>
    %288 = arith.subf %284, %287 : vector<3x8x8xf32>
    %289 = math.exp %288 : vector<3x8x8xf32>
    %cst_123 = arith.constant dense<0.000000e+00> : vector<3x8xf32>
    %290 = vector.multi_reduction <add>, %289, %cst_123 [2] : vector<3x8x8xf32> to vector<3x8xf32>
    %291 = vector.shape_cast %290 : vector<3x8xf32> to vector<3x8x1xf32>
    %292 = tpu.reciprocal %291 {approx = true} : vector<3x8x1xf32> -> vector<3x8x1xf32>
    %293 = vector.broadcast %292 : vector<3x8x1xf32> to vector<3x8x8xf32>
    %294 = arith.mulf %289, %293 : vector<3x8x8xf32>
    %295 = arith.truncf %294 : vector<3x8x8xf32> to vector<3x8x8xbf16>
    %296 = arith.truncf %276 : vector<3x8x16xf32> to vector<3x8x16xbf16>
    "tpu.trace_start"() <{level = 10 : i32, message = "bqk,bkd->bqd"}> : () -> ()
    %cst_124 = arith.constant dense<0.000000e+00> : vector<3x8x16xf32>
    %297 = tpu.matmul %295, %296, %cst_124 {dimension_numbers = #tpu.dot_dimension_numbers<[2], [1], [1], [2], [0, 0, 0, 1, 1, 2], [0], [0]>} : vector<3x8x8xbf16>, vector<3x8x16xbf16>, vector<3x8x16xf32> -> vector<3x8x16xf32>
    "tpu.trace_stop"() : () -> ()
    %298 = vector.shape_cast %297 : vector<3x8x16xf32> to vector<24x16xf32>
    %299 = arith.truncf %298 : vector<24x16xf32> to vector<24x16xbf16>
    %300 = vector.extract_strided_slice %202 {offsets = [16, 0], sizes = [16, 32], strides = [1, 1]} : vector<32x32xbf16> to vector<16x32xbf16>
    %cst_125 = arith.constant dense<0.000000e+00> : vector<24x32xf32>
    %301 = tpu.matmul %299, %300, %cst_125 {dimension_numbers = #tpu.dot_dimension_numbers<[1], [0], [0], [1], [0, 0, 1, 1], [], []>} : vector<24x16xbf16>, vector<16x32xbf16>, vector<24x32xf32> -> vector<24x32xf32>
    %302 = arith.addf %270, %301 : vector<24x32xf32>
    %303 = arith.addf %197, %302 : vector<24x32xf32>
    %304 = vector.broadcast %203 : vector<1x32xf32> to vector<24x32xf32>
    %305 = arith.addf %303, %304 : vector<24x32xf32>
    %cst_126 = arith.constant dense<0.000000e+00> : vector<24xf32>
    %306 = vector.multi_reduction <add>, %305, %cst_126 [1] : vector<24x32xf32> to vector<24xf32>
    %307 = vector.shape_cast %306 : vector<24xf32> to vector<24x1xf32>
    %cst_127 = arith.constant 3.200000e+01 : f32
    %308 = vector.broadcast %cst_127 : f32 to vector<24x1xf32>
    %309 = arith.divf %307, %308 : vector<24x1xf32>
    %310 = vector.broadcast %309 : vector<24x1xf32> to vector<24x32xf32>
    %311 = arith.subf %305, %310 : vector<24x32xf32>
    %312 = arith.mulf %311, %311 : vector<24x32xf32>
    %cst_128 = arith.constant dense<0.000000e+00> : vector<24xf32>
    %313 = vector.multi_reduction <add>, %312, %cst_128 [1] : vector<24x32xf32> to vector<24xf32>
    %314 = vector.shape_cast %313 : vector<24xf32> to vector<24x1xf32>
    %cst_129 = arith.constant 3.200000e+01 : f32
    %315 = vector.broadcast %cst_129 : f32 to vector<24x1xf32>
    %316 = arith.divf %314, %315 : vector<24x1xf32>
    %cst_130 = arith.constant 9.99999974E-6 : f32
    %317 = vector.broadcast %cst_130 : f32 to vector<24x1xf32>
    %318 = arith.addf %316, %317 : vector<24x1xf32>
    %319 = math.rsqrt %318 : vector<24x1xf32>
    %320 = vector.broadcast %319 : vector<24x1xf32> to vector<24x32xf32>
    %321 = arith.mulf %311, %320 : vector<24x32xf32>
    %322 = vector.broadcast %204 : vector<1x32xf32> to vector<24x32xf32>
    %323 = arith.mulf %321, %322 : vector<24x32xf32>
    %324 = vector.broadcast %205 : vector<1x32xf32> to vector<24x32xf32>
    %325 = arith.addf %323, %324 : vector<24x32xf32>
    %326 = arith.truncf %325 : vector<24x32xf32> to vector<24x32xbf16>
    %cst_131 = arith.constant dense<0.000000e+00> : vector<24x128xf32>
    %327 = tpu.matmul %326, %206, %cst_131 {dimension_numbers = #tpu.dot_dimension_numbers<[1], [0], [0], [1], [0, 0, 1, 1], [], []>} : vector<24x32xbf16>, vector<32x128xbf16>, vector<24x128xf32> -> vector<24x128xf32>
    %328 = vector.broadcast %207 : vector<1x128xf32> to vector<24x128xf32>
    %329 = arith.addf %327, %328 : vector<24x128xf32>
    %cst_132 = arith.constant 1.702000e+00 : f32
    %330 = vector.broadcast %cst_132 : f32 to vector<24x128xf32>
    %331 = arith.mulf %330, %329 : vector<24x128xf32>
    %332 = arith.negf %331 : vector<24x128xf32>
    %333 = math.exp %332 : vector<24x128xf32>
    %cst_133 = arith.constant 1.000000e+00 : f32
    %334 = vector.broadcast %cst_133 : f32 to vector<24x128xf32>
    %335 = arith.addf %334, %333 : vector<24x128xf32>
    %336 = arith.divf %334, %335 : vector<24x128xf32>
    %337 = arith.mulf %329, %336 : vector<24x128xf32>
    %338 = arith.truncf %337 : vector<24x128xf32> to vector<24x128xbf16>
    %cst_134 = arith.constant dense<0.000000e+00> : vector<24x32xf32>
    %339 = tpu.matmul %338, %208, %cst_134 {dimension_numbers = #tpu.dot_dimension_numbers<[1], [0], [0], [1], [0, 0, 1, 1], [], []>} : vector<24x128xbf16>, vector<128x32xbf16>, vector<24x32xf32> -> vector<24x32xf32>
    %340 = vector.broadcast %209 : vector<1x32xf32> to vector<24x32xf32>
    %341 = arith.addf %339, %340 : vector<24x32xf32>
    %342 = arith.addf %305, %341 : vector<24x32xf32>
    %c0_135 = arith.constant 0 : index
    %c0_136 = arith.constant 0 : index
    %343 = vector.load %arg35[%c0_135, %c0_136] : memref<1x32xf32, #tpu.memory_space<vmem>>, vector<1x32xf32>
    %c0_137 = arith.constant 0 : index
    %c0_138 = arith.constant 0 : index
    %344 = vector.load %arg36[%c0_137, %c0_138] : memref<1x32xf32, #tpu.memory_space<vmem>>, vector<1x32xf32>
    %cst_139 = arith.constant dense<0.000000e+00> : vector<24xf32>
    %345 = vector.multi_reduction <add>, %342, %cst_139 [1] : vector<24x32xf32> to vector<24xf32>
    %346 = vector.shape_cast %345 : vector<24xf32> to vector<24x1xf32>
    %cst_140 = arith.constant 3.200000e+01 : f32
    %347 = vector.broadcast %cst_140 : f32 to vector<24x1xf32>
    %348 = arith.divf %346, %347 : vector<24x1xf32>
    %349 = vector.broadcast %348 : vector<24x1xf32> to vector<24x32xf32>
    %350 = arith.subf %342, %349 : vector<24x32xf32>
    %351 = arith.mulf %350, %350 : vector<24x32xf32>
    %cst_141 = arith.constant dense<0.000000e+00> : vector<24xf32>
    %352 = vector.multi_reduction <add>, %351, %cst_141 [1] : vector<24x32xf32> to vector<24xf32>
    %353 = vector.shape_cast %352 : vector<24xf32> to vector<24x1xf32>
    %cst_142 = arith.constant 3.200000e+01 : f32
    %354 = vector.broadcast %cst_142 : f32 to vector<24x1xf32>
    %355 = arith.divf %353, %354 : vector<24x1xf32>
    %cst_143 = arith.constant 9.99999974E-6 : f32
    %356 = vector.broadcast %cst_143 : f32 to vector<24x1xf32>
    %357 = arith.addf %355, %356 : vector<24x1xf32>
    %358 = math.rsqrt %357 : vector<24x1xf32>
    %359 = vector.broadcast %358 : vector<24x1xf32> to vector<24x32xf32>
    %360 = arith.mulf %350, %359 : vector<24x32xf32>
    %361 = vector.broadcast %343 : vector<1x32xf32> to vector<24x32xf32>
    %362 = arith.mulf %360, %361 : vector<24x32xf32>
    %363 = vector.broadcast %344 : vector<1x32xf32> to vector<24x32xf32>
    %364 = arith.addf %362, %363 : vector<24x32xf32>
    %c0_144 = arith.constant 0 : index
    %c0_145 = arith.constant 0 : index
    %365 = vector.load %arg37[%c0_144, %c0_145] : memref<3x24xf32, #tpu.memory_space<vmem>>, vector<3x24xf32>
    %cst_146 = arith.constant dense<0.000000e+00> : vector<3x32xf32>
    %366 = tpu.matmul %365, %364, %cst_146 {dimension_numbers = #tpu.dot_dimension_numbers<[1], [0], [0], [1], [0, 0, 1, 1], [], []>} : vector<3x24xf32>, vector<24x32xf32>, vector<3x32xf32> -> vector<3x32xf32>
    %367 = arith.truncf %366 : vector<3x32xf32> to vector<3x32xbf16>
    %c0_147 = arith.constant 0 : index
    %c0_148 = arith.constant 0 : index
    %368 = vector.load %arg38[%c0_147, %c0_148] : memref<32x32xbf16, #tpu.memory_space<vmem>>, vector<32x32xbf16>
    %cst_149 = arith.constant dense<0.000000e+00> : vector<3x32xf32>
    %369 = tpu.matmul %367, %368, %cst_149 {dimension_numbers = #tpu.dot_dimension_numbers<[1], [0], [0], [1], [0, 0, 1, 1], [], []>} : vector<3x32xbf16>, vector<32x32xbf16>, vector<3x32xf32> -> vector<3x32xf32>
    %370 = arith.mulf %191, %191 : vector<2x32xf32>
    %cst_150 = arith.constant dense<0.000000e+00> : vector<2xf32>
    %371 = vector.multi_reduction <add>, %370, %cst_150 [1] : vector<2x32xf32> to vector<2xf32>
    %372 = vector.shape_cast %371 : vector<2xf32> to vector<2x1xf32>
    %cst_151 = arith.constant 9.99999996E-13 : f32
    %373 = vector.broadcast %cst_151 : f32 to vector<2x1xf32>
    %374 = arith.addf %372, %373 : vector<2x1xf32>
    %375 = math.rsqrt %374 : vector<2x1xf32>
    %376 = vector.broadcast %375 : vector<2x1xf32> to vector<2x32xf32>
    %377 = arith.mulf %191, %376 : vector<2x32xf32>
    %378 = arith.mulf %369, %369 : vector<3x32xf32>
    %cst_152 = arith.constant dense<0.000000e+00> : vector<3xf32>
    %379 = vector.multi_reduction <add>, %378, %cst_152 [1] : vector<3x32xf32> to vector<3xf32>
    %380 = vector.shape_cast %379 : vector<3xf32> to vector<3x1xf32>
    %cst_153 = arith.constant 9.99999996E-13 : f32
    %381 = vector.broadcast %cst_153 : f32 to vector<3x1xf32>
    %382 = arith.addf %380, %381 : vector<3x1xf32>
    %383 = math.rsqrt %382 : vector<3x1xf32>
    %384 = vector.broadcast %383 : vector<3x1xf32> to vector<3x32xf32>
    %385 = arith.mulf %369, %384 : vector<3x32xf32>
    %c0_154 = arith.constant 0 : index
    %c0_155 = arith.constant 0 : index
    %386 = vector.load %arg40[%c0_154, %c0_155] : memref<3x32xf32, #tpu.memory_space<vmem>>, vector<3x32xf32>
    tpu.vector_store %arg40[%c0_154, %c0_155], %385 {strides = array<i32>} : memref<3x32xf32, #tpu.memory_space<vmem>>, vector<3x32xf32>,
    %cst_156 = arith.constant dense<0.000000e+00> : vector<2x3xf32>
    %387 = tpu.matmul %377, %385, %cst_156 {dimension_numbers = #tpu.dot_dimension_numbers<[1], [1], [0], [0], [0, 0, 1, 0], [], []>} : vector<2x32xf32>, vector<3x32xf32>, vector<2x3xf32> -> vector<2x3xf32>
    %cst_157 = arith.constant 14.2857141 : f32
    %388 = vector.broadcast %cst_157 : f32 to vector<2x3xf32>
    %389 = arith.mulf %388, %387 : vector<2x3xf32>
    %c0_158 = arith.constant 0 : index
    %c0_159 = arith.constant 0 : index
    %390 = vector.load %arg39[%c0_158, %c0_159] : memref<2x3xf32, #tpu.memory_space<vmem>>, vector<2x3xf32>
    tpu.vector_store %arg39[%c0_158, %c0_159], %389 {strides = array<i32>} : memref<2x3xf32, #tpu.memory_space<vmem>>, vector<2x3xf32>,
    return
  }
  func.func @transform_0(%arg0: i32) -> (i32, i32) {
    %c0_i32 = arith.constant 0 : i32
    %c0_i32_0 = arith.constant 0 : i32
    %c0_i32_1 = arith.constant 0 : i32
    return %c0_i32, %c0_i32_0 : i32, i32
  }
  func.func @transform_1(%arg0: i32) -> (i32, i32) {
    %c0_i32 = arith.constant 0 : i32
    %c0_i32_0 = arith.constant 0 : i32
    %c0_i32_1 = arith.constant 0 : i32
    return %c0_i32, %c0_i32_0 : i32, i32
  }
  func.func @transform_2(%arg0: i32) -> (i32, i32) {
    %c0_i32 = arith.constant 0 : i32
    %c0_i32_0 = arith.constant 0 : i32
    %c0_i32_1 = arith.constant 0 : i32
    return %c0_i32, %c0_i32_0 : i32, i32
  }
  func.func @transform_3(%arg0: i32) -> (i32, i32) {
    %c0_i32 = arith.constant 0 : i32
    %c0_i32_0 = arith.constant 0 : i32
    %c0_i32_1 = arith.constant 0 : i32
    return %c0_i32, %c0_i32_0 : i32, i32
  }
  func.func @transform_4(%arg0: i32) -> (i32, i32) {
    %c0_i32 = arith.constant 0 : i32
    %c0_i32_0 = arith.constant 0 : i32
    %c0_i32_1 = arith.constant 0 : i32
    return %c0_i32, %c0_i32_0 : i32, i32
  }
  func.func @transform_5(%arg0: i32) -> (i32, i32) {
    %c0_i32 = arith.constant 0 : i32
    %c0_i32_0 = arith.constant 0 : i32
    %c0_i32_1 = arith.constant 0 : i32
    return %c0_i32, %c0_i32_0 : i32, i32
  }
  func.func @transform_6(%arg0: i32) -> (i32, i32) {
    %c0_i32 = arith.constant 0 : i32
    %c0_i32_0 = arith.constant 0 : i32
    %c0_i32_1 = arith.constant 0 : i32
    return %c0_i32, %c0_i32_0 : i32, i32
  }
  func.func @transform_7(%arg0: i32) -> (i32, i32) {
    %c0_i32 = arith.constant 0 : i32
    %c0_i32_0 = arith.constant 0 : i32
    %c0_i32_1 = arith.constant 0 : i32
    return %c0_i32, %c0_i32_0 : i32, i32
  }
  func.func @transform_8(%arg0: i32) -> (i32, i32) {
    %c0_i32 = arith.constant 0 : i32
    %c0_i32_0 = arith.constant 0 : i32
    %c0_i32_1 = arith.constant 0 : i32
    return %c0_i32, %c0_i32_0 : i32, i32
  }
  func.func @transform_9(%arg0: i32) -> (i32, i32) {
    %c0_i32 = arith.constant 0 : i32
    %c0_i32_0 = arith.constant 0 : i32
    %c0_i32_1 = arith.constant 0 : i32
    return %c0_i32, %c0_i32_0 : i32, i32
  }
  func.func @transform_10(%arg0: i32) -> (i32, i32) {
    %c0_i32 = arith.constant 0 : i32
    %c0_i32_0 = arith.constant 0 : i32
    %c0_i32_1 = arith.constant 0 : i32
    return %c0_i32, %c0_i32_0 : i32, i32
  }
  func.func @transform_11(%arg0: i32) -> (i32, i32) {
    %c0_i32 = arith.constant 0 : i32
    %c0_i32_0 = arith.constant 0 : i32
    %c0_i32_1 = arith.constant 0 : i32
    return %c0_i32, %c0_i32_0 : i32, i32
  }
  func.func @transform_12(%arg0: i32) -> (i32, i32) {
    %c0_i32 = arith.constant 0 : i32
    %c0_i32_0 = arith.constant 0 : i32
    %c0_i32_1 = arith.constant 0 : i32
    return %c0_i32, %c0_i32_0 : i32, i32
  }
  func.func @transform_13(%arg0: i32) -> (i32, i32) {
    %c0_i32 = arith.constant 0 : i32
    %c0_i32_0 = arith.constant 0 : i32
    %c0_i32_1 = arith.constant 0 : i32
    return %c0_i32, %c0_i32_0 : i32, i32
  }
  func.func @transform_14(%arg0: i32) -> (i32, i32) {
    %c0_i32 = arith.constant 0 : i32
    %c0_i32_0 = arith.constant 0 : i32
    %c0_i32_1 = arith.constant 0 : i32
    return %c0_i32, %c0_i32_0 : i32, i32
  }
  func.func @transform_15(%arg0: i32) -> (i32, i32) {
    %c0_i32 = arith.constant 0 : i32
    %c0_i32_0 = arith.constant 0 : i32
    %c0_i32_1 = arith.constant 0 : i32
    return %c0_i32, %c0_i32_0 : i32, i32
  }
  func.func @transform_16(%arg0: i32) -> (i32, i32) {
    %c0_i32 = arith.constant 0 : i32
    %c0_i32_0 = arith.constant 0 : i32
    %c0_i32_1 = arith.constant 0 : i32
    return %c0_i32, %c0_i32_0 : i32, i32
  }
  func.func @transform_17(%arg0: i32) -> (i32, i32) {
    %c0_i32 = arith.constant 0 : i32
    %c0_i32_0 = arith.constant 0 : i32
    %c0_i32_1 = arith.constant 0 : i32
    return %c0_i32, %c0_i32_0 : i32, i32
  }
  func.func @transform_18(%arg0: i32) -> (i32, i32) {
    %c0_i32 = arith.constant 0 : i32
    %c0_i32_0 = arith.constant 0 : i32
    %c0_i32_1 = arith.constant 0 : i32
    return %c0_i32, %c0_i32_0 : i32, i32
  }
  func.func @transform_19(%arg0: i32) -> (i32, i32) {
    %c0_i32 = arith.constant 0 : i32
    %c0_i32_0 = arith.constant 0 : i32
    %c0_i32_1 = arith.constant 0 : i32
    return %c0_i32, %c0_i32_0 : i32, i32
  }
  func.func @transform_20(%arg0: i32) -> (i32, i32, i32) {
    %c0_i32 = arith.constant 0 : i32
    %c0_i32_0 = arith.constant 0 : i32
    %c0_i32_1 = arith.constant 0 : i32
    %c0_i32_2 = arith.constant 0 : i32
    return %c0_i32, %c0_i32_0, %c0_i32_1 : i32, i32, i32
  }
  func.func @transform_21(%arg0: i32) -> (i32, i32) {
    %c0_i32 = arith.constant 0 : i32
    %c0_i32_0 = arith.constant 0 : i32
    %c0_i32_1 = arith.constant 0 : i32
    return %c0_i32, %c0_i32_0 : i32, i32
  }
  func.func @transform_22(%arg0: i32) -> (i32, i32) {
    %c0_i32 = arith.constant 0 : i32
    %c0_i32_0 = arith.constant 0 : i32
    %c0_i32_1 = arith.constant 0 : i32
    return %c0_i32, %c0_i32_0 : i32, i32
  }
  func.func @transform_23(%arg0: i32) -> (i32, i32) {
    %c0_i32 = arith.constant 0 : i32
    %c0_i32_0 = arith.constant 0 : i32
    %c0_i32_1 = arith.constant 0 : i32
    return %c0_i32, %c0_i32_0 : i32, i32
  }
  func.func @transform_24(%arg0: i32) -> (i32, i32) {
    %c0_i32 = arith.constant 0 : i32
    %c0_i32_0 = arith.constant 0 : i32
    %c0_i32_1 = arith.constant 0 : i32
    return %c0_i32, %c0_i32_0 : i32, i32
  }
  func.func @transform_25(%arg0: i32) -> (i32, i32) {
    %c0_i32 = arith.constant 0 : i32
    %c0_i32_0 = arith.constant 0 : i32
    %c0_i32_1 = arith.constant 0 : i32
    return %c0_i32, %c0_i32_0 : i32, i32
  }
  func.func @transform_26(%arg0: i32) -> (i32, i32) {
    %c0_i32 = arith.constant 0 : i32
    %c0_i32_0 = arith.constant 0 : i32
    %c0_i32_1 = arith.constant 0 : i32
    return %c0_i32, %c0_i32_0 : i32, i32
  }
  func.func @transform_27(%arg0: i32) -> (i32, i32) {
    %c0_i32 = arith.constant 0 : i32
    %c0_i32_0 = arith.constant 0 : i32
    %c0_i32_1 = arith.constant 0 : i32
    return %c0_i32, %c0_i32_0 : i32, i32
  }
  func.func @transform_28(%arg0: i32) -> (i32, i32) {
    %c0_i32 = arith.constant 0 : i32
    %c0_i32_0 = arith.constant 0 : i32
    %c0_i32_1 = arith.constant 0 : i32
    return %c0_i32, %c0_i32_0 : i32, i32
  }
  func.func @transform_29(%arg0: i32) -> (i32, i32) {
    %c0_i32 = arith.constant 0 : i32
    %c0_i32_0 = arith.constant 0 : i32
    %c0_i32_1 = arith.constant 0 : i32
    return %c0_i32, %c0_i32_0 : i32, i32
  }
  func.func @transform_30(%arg0: i32) -> (i32, i32) {
    %c0_i32 = arith.constant 0 : i32
    %c0_i32_0 = arith.constant 0 : i32
    %c0_i32_1 = arith.constant 0 : i32
    return %c0_i32, %c0_i32_0 : i32, i32
  }
  func.func @transform_31(%arg0: i32) -> (i32, i32) {
    %c0_i32 = arith.constant 0 : i32
    %c0_i32_0 = arith.constant 0 : i32
    %c0_i32_1 = arith.constant 0 : i32
    return %c0_i32, %c0_i32_0 : i32, i32
  }
  func.func @transform_32(%arg0: i32) -> (i32, i32) {
    %c0_i32 = arith.constant 0 : i32
    %c0_i32_0 = arith.constant 0 : i32
    %c0_i32_1 = arith.constant 0 : i32
    return %c0_i32, %c0_i32_0 : i32, i32
  }
  func.func @transform_33(%arg0: i32) -> (i32, i32) {
    %c0_i32 = arith.constant 0 : i32
    %c0_i32_0 = arith.constant 0 : i32
    %c0_i32_1 = arith.constant 0 : i32
    return %c0_i32, %c0_i32_0 : i32, i32
  }
  func.func @transform_34(%arg0: i32) -> (i32, i32) {
    %c0_i32 = arith.constant 0 : i32
    %c0_i32_0 = arith.constant 0 : i32
    %c0_i32_1 = arith.constant 0 : i32
    return %c0_i32, %c0_i32_0 : i32, i32
  }
  func.func @transform_35(%arg0: i32) -> (i32, i32) {
    %c0_i32 = arith.constant 0 : i32
    %c0_i32_0 = arith.constant 0 : i32
    %c0_i32_1 = arith.constant 0 : i32
    return %c0_i32, %c0_i32_0 : i32, i32
  }
  func.func @transform_36(%arg0: i32) -> (i32, i32) {
    %c0_i32 = arith.constant 0 : i32
    %c0_i32_0 = arith.constant 0 : i32
    %c0_i32_1 = arith.constant 0 : i32
    return %c0_i32, %c0_i32_0 : i32, i32
  }
  func.func @transform_37(%arg0: i32) -> (i32, i32) {
    %c0_i32 = arith.constant 0 : i32
    %c0_i32_0 = arith.constant 0 : i32
    %c0_i32_1 = arith.constant 0 : i32
    return %c0_i32, %c0_i32_0 : i32, i32
  }
  func.func @transform_38(%arg0: i32) -> (i32, i32) {
    %c0_i32 = arith.constant 0 : i32
    %c0_i32_0 = arith.constant 0 : i32
    %c0_i32_1 = arith.constant 0 : i32
    return %c0_i32, %c0_i32_0 : i32, i32
  }
  func.func @transform_39(%arg0: i32) -> (i32, i32) {
    %c0_i32 = arith.constant 0 : i32
    %c0_i32_0 = arith.constant 0 : i32
    %c0_i32_1 = arith.constant 0 : i32
    return %c0_i32, %c0_i32_0 : i32, i32
  }
}

</mosaic_0001>

<llo_original>
// kernel: clip_test_time_tuning_forward.1
$region0: #{clip_test_time_tuning_forward.1}
  #allocation0 [shape = 'u32[]', space=smem, size = 0x4, offset = 0x4, fixed_abs, tag = 'smem constant byte address 0x4 - core index']
  #allocation1 [shape = 'u32[144,128]{1,0:T(1,128)}', space=vmem, size = 0x12000, scoped, tag = 'internal scratch']
  %s0 = inlined_call_operand.smem [shape: u32[40], index: -1, kind: input, shape index: {}]
  %s1 = sld [smem:[%s0]]
  %s2 = scalar_lea.smem %s0, 1
  %s3 = sld [smem:[%s2]]
  %s4 = scalar_lea.smem %s0, 2
  %s5 = sld [smem:[%s4]]
  %s6 = scalar_lea.smem %s0, 3
  %s7 = sld [smem:[%s6]]
  %s8 = scalar_lea.smem %s0, 4
  %s9 = sld [smem:[%s8]]
  %s10 = scalar_lea.smem %s0, 5
  %s11 = sld [smem:[%s10]]
  %s12 = scalar_lea.smem %s0, 6
  %s13 = sld [smem:[%s12]]
  %s14 = scalar_lea.smem %s0, 7
  %s15 = sld [smem:[%s14]]
  %s16 = scalar_lea.smem %s0, 8
  %s17 = sld [smem:[%s16]]
  %s18 = scalar_lea.smem %s0, 9
  %s19 = sld [smem:[%s18]]
  %s20 = scalar_lea.smem %s0, 10
  %s21 = sld [smem:[%s20]]
  %s22 = scalar_lea.smem %s0, 11
  %s23 = sld [smem:[%s22]]
  %s24 = scalar_lea.smem %s0, 12
  %s25 = sld [smem:[%s24]]
  %s26 = scalar_lea.smem %s0, 13
  %s27 = sld [smem:[%s26]]
  %s28 = scalar_lea.smem %s0, 14
  %s29 = sld [smem:[%s28]]
  %s30 = scalar_lea.smem %s0, 15
  %s31 = sld [smem:[%s30]]
  %s32 = scalar_lea.smem %s0, 16
  %s33 = sld [smem:[%s32]]
  %s34 = scalar_lea.smem %s0, 17
  %s35 = sld [smem:[%s34]]
  %s36 = scalar_lea.smem %s0, 18
  %s37 = sld [smem:[%s36]]
  %s38 = scalar_lea.smem %s0, 19
  %s39 = sld [smem:[%s38]]
  %s40 = scalar_lea.smem %s0, 20
  %s41 = sld [smem:[%s40]]
  %s42 = scalar_lea.smem %s0, 21
  %s43 = sld [smem:[%s42]]
  %s44 = scalar_lea.smem %s0, 22
  %s45 = sld [smem:[%s44]]
  %s46 = scalar_lea.smem %s0, 23
  %s47 = sld [smem:[%s46]]
  %s48 = scalar_lea.smem %s0, 24
  %s49 = sld [smem:[%s48]]
  %s50 = scalar_lea.smem %s0, 25
  %s51 = sld [smem:[%s50]]
  %s52 = scalar_lea.smem %s0, 26
  %s53 = sld [smem:[%s52]]
  %s54 = scalar_lea.smem %s0, 27
  %s55 = sld [smem:[%s54]]
  %s56 = scalar_lea.smem %s0, 28
  %s57 = sld [smem:[%s56]]
  %s58 = scalar_lea.smem %s0, 29
  %s59 = sld [smem:[%s58]]
  %s60 = scalar_lea.smem %s0, 30
  %s61 = sld [smem:[%s60]]
  %s62 = scalar_lea.smem %s0, 31
  %s63 = sld [smem:[%s62]]
  %s64 = scalar_lea.smem %s0, 32
  %s65 = sld [smem:[%s64]]
  %s66 = scalar_lea.smem %s0, 33
  %s67 = sld [smem:[%s66]]
  %s68 = scalar_lea.smem %s0, 34
  %s69 = sld [smem:[%s68]]
  %s70 = scalar_lea.smem %s0, 35
  %s71 = sld [smem:[%s70]]
  %s72 = scalar_lea.smem %s0, 36
  %s73 = sld [smem:[%s72]]
  %s74 = scalar_lea.smem %s0, 37
  %s75 = sld [smem:[%s74]]
  %s76 = scalar_lea.smem %s0, 38
  %s77 = sld [smem:[%s76]]
  %s78 = scalar_lea.smem %s0, 39
  %s79 = sld [smem:[%s78]]
  %80 = xla_tuple %s77, %s79
  %s81 = sld [smem:[#allocation0]]
  $region170: #{clip_test_time_tuning_forward.1} parent=0
    _
  %s83 = ssub.s32 1, %s81
  %s84 = scalar_select 0, %s83, %s81
  $region1: #{clip_test_time_tuning_forward.1} parent=0
    #allocation2 [shape = 'u8[1024]{0}', space=vmem, size = 0x400, scoped, tag = 'output window, operand 0, single buffered']
    #allocation3 [shape = 's32[1]{0}', space=sflag, size = 0x4, scoped, tag = 'scoped memory for clip_test_time_tuning_forward.1']
    #allocation4 [shape = 'u8[2048]{0}', space=vmem, size = 0x800, scoped, tag = 'output window, operand 1, single buffered']
    #allocation5 [shape = 's32[1]{0}', space=sflag, size = 0x4, scoped, tag = 'scoped memory for clip_test_time_tuning_forward.1']
    %85 = vsyncpa [#allocation3], 0
    %86 = vsyncpa [#allocation5], 0
    // Predicated region
    $region2: #{clip_test_time_tuning_forward.1} parent=1 // pred_check
      _
    $region3: #{clip_test_time_tuning_forward.1} parent=1 // pred_check_branch
      %88 = sbr.rel (0) target = $region5
    $region4: #{clip_test_time_tuning_forward.1} parent=1 // pred_region
      _
    $region5: #{clip_test_time_tuning_forward.1} parent=1 // pred_fallthru
      _
    // Predicated region
    $region6: #{clip_test_time_tuning_forward.1} parent=1 // pred_check
      _
    $region7: #{clip_test_time_tuning_forward.1} parent=1 // pred_check_branch
      %90 = sbr.rel (0) target = $region9
    $region8: #{clip_test_time_tuning_forward.1} parent=1 // pred_region
      _
    $region9: #{clip_test_time_tuning_forward.1} parent=1 // pred_fallthru
      _
    // Predicated region
    $region10: #{clip_test_time_tuning_forward.1} parent=1 // pred_check
      _
    $region11: #{clip_test_time_tuning_forward.1} parent=1 // pred_check_branch
      %92 = sbr.rel (0) target = $region13
    $region12: #{clip_test_time_tuning_forward.1} parent=1 // pred_region
      _
    $region13: #{clip_test_time_tuning_forward.1} parent=1 // pred_fallthru
      _
    // Predicated region
    $region14: #{clip_test_time_tuning_forward.1} parent=1 // pred_check
      _
    $region15: #{clip_test_time_tuning_forward.1} parent=1 // pred_check_branch
      %94 = sbr.rel (0) target = $region17
    $region16: #{clip_test_time_tuning_forward.1} parent=1 // pred_region
      _
    $region17: #{clip_test_time_tuning_forward.1} parent=1 // pred_fallthru
      _
    // Predicated region
    $region18: #{clip_test_time_tuning_forward.1} parent=1 // pred_check
      _
    $region19: #{clip_test_time_tuning_forward.1} parent=1 // pred_check_branch
      %96 = sbr.rel (0) target = $region21
    $region20: #{clip_test_time_tuning_forward.1} parent=1 // pred_region
      _
    $region21: #{clip_test_time_tuning_forward.1} parent=1 // pred_fallthru
      _
    // Predicated region
    $region22: #{clip_test_time_tuning_forward.1} parent=1 // pred_check
      _
    $region23: #{clip_test_time_tuning_forward.1} parent=1 // pred_check_branch
      %98 = sbr.rel (0) target = $region25
    $region24: #{clip_test_time_tuning_forward.1} parent=1 // pred_region
      _
    $region25: #{clip_test_time_tuning_forward.1} parent=1 // pred_fallthru
      _
    // Predicated region
    $region26: #{clip_test_time_tuning_forward.1} parent=1 // pred_check
      _
    $region27: #{clip_test_time_tuning_forward.1} parent=1 // pred_check_branch
      %100 = sbr.rel (0) target = $region29
    $region28: #{clip_test_time_tuning_forward.1} parent=1 // pred_region
      _
    $region29: #{clip_test_time_tuning_forward.1} parent=1 // pred_fallthru
      _
    // Predicated region
    $region30: #{clip_test_time_tuning_forward.1} parent=1 // pred_check
      _
    $region31: #{clip_test_time_tuning_forward.1} parent=1 // pred_check_branch
      %102 = sbr.rel (0) target = $region33
    $region32: #{clip_test_time_tuning_forward.1} parent=1 // pred_region
      _
    $region33: #{clip_test_time_tuning_forward.1} parent=1 // pred_fallthru
      _
    // Predicated region
    $region34: #{clip_test_time_tuning_forward.1} parent=1 // pred_check
      _
    $region35: #{clip_test_time_tuning_forward.1} parent=1 // pred_check_branch
      %104 = sbr.rel (0) target = $region37
    $region36: #{clip_test_time_tuning_forward.1} parent=1 // pred_region
      _
    $region37: #{clip_test_time_tuning_forward.1} parent=1 // pred_fallthru
      _
    // Predicated region
    $region38: #{clip_test_time_tuning_forward.1} parent=1 // pred_check
      _
    $region39: #{clip_test_time_tuning_forward.1} parent=1 // pred_check_branch
      %106 = sbr.rel (0) target = $region41
    $region40: #{clip_test_time_tuning_forward.1} parent=1 // pred_region
      _
    $region41: #{clip_test_time_tuning_forward.1} parent=1 // pred_fallthru
      _
    // Predicated region
    $region42: #{clip_test_time_tuning_forward.1} parent=1 // pred_check
      _
    $region43: #{clip_test_time_tuning_forward.1} parent=1 // pred_check_branch
      %108 = sbr.rel (0) target = $region45
    $region44: #{clip_test_time_tuning_forward.1} parent=1 // pred_region
      _
    $region45: #{clip_test_time_tuning_forward.1} parent=1 // pred_fallthru
      _
    // Predicated region
    $region46: #{clip_test_time_tuning_forward.1} parent=1 // pred_check
      _
    $region47: #{clip_test_time_tuning_forward.1} parent=1 // pred_check_branch
      %110 = sbr.rel (0) target = $region49
    $region48: #{clip_test_time_tuning_forward.1} parent=1 // pred_region
      _
    $region49: #{clip_test_time_tuning_forward.1} parent=1 // pred_fallthru
      _
    // Predicated region
    $region50: #{clip_test_time_tuning_forward.1} parent=1 // pred_check
      _
    $region51: #{clip_test_time_tuning_forward.1} parent=1 // pred_check_branch
      %112 = sbr.rel (0) target = $region53
    $region52: #{clip_test_time_tuning_forward.1} parent=1 // pred_region
      _
    $region53: #{clip_test_time_tuning_forward.1} parent=1 // pred_fallthru
      _
    // Predicated region
    $region54: #{clip_test_time_tuning_forward.1} parent=1 // pred_check
      _
    $region55: #{clip_test_time_tuning_forward.1} parent=1 // pred_check_branch
      %114 = sbr.rel (0) target = $region57
    $region56: #{clip_test_time_tuning_forward.1} parent=1 // pred_region
      _
    $region57: #{clip_test_time_tuning_forward.1} parent=1 // pred_fallthru
      _
    // Predicated region
    $region58: #{clip_test_time_tuning_forward.1} parent=1 // pred_check
      _
    $region59: #{clip_test_time_tuning_forward.1} parent=1 // pred_check_branch
      %116 = sbr.rel (0) target = $region61
    $region60: #{clip_test_time_tuning_forward.1} parent=1 // pred_region
      _
    $region61: #{clip_test_time_tuning_forward.1} parent=1 // pred_fallthru
      _
    // Predicated region
    $region62: #{clip_test_time_tuning_forward.1} parent=1 // pred_check
      _
    $region63: #{clip_test_time_tuning_forward.1} parent=1 // pred_check_branch
      %118 = sbr.rel (0) target = $region65
    $region64: #{clip_test_time_tuning_forward.1} parent=1 // pred_region
      _
    $region65: #{clip_test_time_tuning_forward.1} parent=1 // pred_fallthru
      _
    // Predicated region
    $region66: #{clip_test_time_tuning_forward.1} parent=1 // pred_check
      _
    $region67: #{clip_test_time_tuning_forward.1} parent=1 // pred_check_branch
      %120 = sbr.rel (0) target = $region69
    $region68: #{clip_test_time_tuning_forward.1} parent=1 // pred_region
      _
    $region69: #{clip_test_time_tuning_forward.1} parent=1 // pred_fallthru
      _
    // Predicated region
    $region70: #{clip_test_time_tuning_forward.1} parent=1 // pred_check
      _
    $region71: #{clip_test_time_tuning_forward.1} parent=1 // pred_check_branch
      %122 = sbr.rel (0) target = $region73
    $region72: #{clip_test_time_tuning_forward.1} parent=1 // pred_region
      _
    $region73: #{clip_test_time_tuning_forward.1} parent=1 // pred_fallthru
      _
    // Predicated region
    $region74: #{clip_test_time_tuning_forward.1} parent=1 // pred_check
      _
    $region75: #{clip_test_time_tuning_forward.1} parent=1 // pred_check_branch
      %124 = sbr.rel (0) target = $region77
    $region76: #{clip_test_time_tuning_forward.1} parent=1 // pred_region
      _
    $region77: #{clip_test_time_tuning_forward.1} parent=1 // pred_fallthru
      _
    // Predicated region
    $region78: #{clip_test_time_tuning_forward.1} parent=1 // pred_check
      _
    $region79: #{clip_test_time_tuning_forward.1} parent=1 // pred_check_branch
      %126 = sbr.rel (0) target = $region81
    $region80: #{clip_test_time_tuning_forward.1} parent=1 // pred_region
      _
    $region81: #{clip_test_time_tuning_forward.1} parent=1 // pred_fallthru
      _
    // Predicated region
    $region82: #{clip_test_time_tuning_forward.1} parent=1 // pred_check
      _
    $region83: #{clip_test_time_tuning_forward.1} parent=1 // pred_check_branch
      %128 = sbr.rel (0) target = $region85
    $region84: #{clip_test_time_tuning_forward.1} parent=1 // pred_region
      _
    $region85: #{clip_test_time_tuning_forward.1} parent=1 // pred_fallthru
      _
    // Predicated region
    $region86: #{clip_test_time_tuning_forward.1} parent=1 // pred_check
      _
    $region87: #{clip_test_time_tuning_forward.1} parent=1 // pred_check_branch
      %130 = sbr.rel (0) target = $region89
    $region88: #{clip_test_time_tuning_forward.1} parent=1 // pred_region
      _
    $region89: #{clip_test_time_tuning_forward.1} parent=1 // pred_fallthru
      _
    // Predicated region
    $region90: #{clip_test_time_tuning_forward.1} parent=1 // pred_check
      _
    $region91: #{clip_test_time_tuning_forward.1} parent=1 // pred_check_branch
      %132 = sbr.rel (0) target = $region93
    $region92: #{clip_test_time_tuning_forward.1} parent=1 // pred_region
      _
    $region93: #{clip_test_time_tuning_forward.1} parent=1 // pred_fallthru
      _
    // Predicated region
    $region94: #{clip_test_time_tuning_forward.1} parent=1 // pred_check
      _
    $region95: #{clip_test_time_tuning_forward.1} parent=1 // pred_check_branch
      %134 = sbr.rel (0) target = $region97
    $region96: #{clip_test_time_tuning_forward.1} parent=1 // pred_region
      _
    $region97: #{clip_test_time_tuning_forward.1} parent=1 // pred_fallthru
      _
    // Predicated region
    $region98: #{clip_test_time_tuning_forward.1} parent=1 // pred_check
      _
    $region99: #{clip_test_time_tuning_forward.1} parent=1 // pred_check_branch
      %136 = sbr.rel (0) target = $region101
    $region100: #{clip_test_time_tuning_forward.1} parent=1 // pred_region
      _
    $region101: #{clip_test_time_tuning_forward.1} parent=1 // pred_fallthru
      _
    // Predicated region
    $region102: #{clip_test_time_tuning_forward.1} parent=1 // pred_check
      _
    $region103: #{clip_test_time_tuning_forward.1} parent=1 // pred_check_branch
      %138 = sbr.rel (0) target = $region105
    $region104: #{clip_test_time_tuning_forward.1} parent=1 // pred_region
      _
    $region105: #{clip_test_time_tuning_forward.1} parent=1 // pred_fallthru
      _
    // Predicated region
    $region106: #{clip_test_time_tuning_forward.1} parent=1 // pred_check
      _
    $region107: #{clip_test_time_tuning_forward.1} parent=1 // pred_check_branch
      %140 = sbr.rel (0) target = $region109
    $region108: #{clip_test_time_tuning_forward.1} parent=1 // pred_region
      _
    $region109: #{clip_test_time_tuning_forward.1} parent=1 // pred_fallthru
      _
    // Predicated region
    $region110: #{clip_test_time_tuning_forward.1} parent=1 // pred_check
      _
    $region111: #{clip_test_time_tuning_forward.1} parent=1 // pred_check_branch
      %142 = sbr.rel (0) target = $region113
    $region112: #{clip_test_time_tuning_forward.1} parent=1 // pred_region
      _
    $region113: #{clip_test_time_tuning_forward.1} parent=1 // pred_fallthru
      _
    // Predicated region
    $region114: #{clip_test_time_tuning_forward.1} parent=1 // pred_check
      _
    $region115: #{clip_test_time_tuning_forward.1} parent=1 // pred_check_branch
      %144 = sbr.rel (0) target = $region117
    $region116: #{clip_test_time_tuning_forward.1} parent=1 // pred_region
      _
    $region117: #{clip_test_time_tuning_forward.1} parent=1 // pred_fallthru
      _
    // Predicated region
    $region118: #{clip_test_time_tuning_forward.1} parent=1 // pred_check
      _
    $region119: #{clip_test_time_tuning_forward.1} parent=1 // pred_check_branch
      %146 = sbr.rel (0) target = $region121
    $region120: #{clip_test_time_tuning_forward.1} parent=1 // pred_region
      _
    $region121: #{clip_test_time_tuning_forward.1} parent=1 // pred_fallthru
      _
    // Predicated region
    $region122: #{clip_test_time_tuning_forward.1} parent=1 // pred_check
      _
    $region123: #{clip_test_time_tuning_forward.1} parent=1 // pred_check_branch
      %148 = sbr.rel (0) target = $region125
    $region124: #{clip_test_time_tuning_forward.1} parent=1 // pred_region
      _
    $region125: #{clip_test_time_tuning_forward.1} parent=1 // pred_fallthru
      _
    // Predicated region
    $region126: #{clip_test_time_tuning_forward.1} parent=1 // pred_check
      _
    $region127: #{clip_test_time_tuning_forward.1} parent=1 // pred_check_branch
      %150 = sbr.rel (0) target = $region129
    $region128: #{clip_test_time_tuning_forward.1} parent=1 // pred_region
      _
    $region129: #{clip_test_time_tuning_forward.1} parent=1 // pred_fallthru
      _
    // Predicated region
    $region130: #{clip_test_time_tuning_forward.1} parent=1 // pred_check
      _
    $region131: #{clip_test_time_tuning_forward.1} parent=1 // pred_check_branch
      %152 = sbr.rel (0) target = $region133
    $region132: #{clip_test_time_tuning_forward.1} parent=1 // pred_region
      _
    $region133: #{clip_test_time_tuning_forward.1} parent=1 // pred_fallthru
      _
    // Predicated region
    $region134: #{clip_test_time_tuning_forward.1} parent=1 // pred_check
      _
    $region135: #{clip_test_time_tuning_forward.1} parent=1 // pred_check_branch
      %154 = sbr.rel (0) target = $region137
    $region136: #{clip_test_time_tuning_forward.1} parent=1 // pred_region
      _
    $region137: #{clip_test_time_tuning_forward.1} parent=1 // pred_fallthru
      _
    // Predicated region
    $region138: #{clip_test_time_tuning_forward.1} parent=1 // pred_check
      _
    $region139: #{clip_test_time_tuning_forward.1} parent=1 // pred_check_branch
      %156 = sbr.rel (0) target = $region141
    $region140: #{clip_test_time_tuning_forward.1} parent=1 // pred_region
      _
    $region141: #{clip_test_time_tuning_forward.1} parent=1 // pred_fallthru
      _
    // Predicated region
    $region142: #{clip_test_time_tuning_forward.1} parent=1 // pred_check
      _
    $region143: #{clip_test_time_tuning_forward.1} parent=1 // pred_check_branch
      %158 = sbr.rel (0) target = $region145
    $region144: #{clip_test_time_tuning_forward.1} parent=1 // pred_region
      _
    $region145: #{clip_test_time_tuning_forward.1} parent=1 // pred_fallthru
      _
    // Predicated region
    $region146: #{clip_test_time_tuning_forward.1} parent=1 // pred_check
      _
    $region147: #{clip_test_time_tuning_forward.1} parent=1 // pred_check_branch
      %160 = sbr.rel (0) target = $region149
    $region148: #{clip_test_time_tuning_forward.1} parent=1 // pred_region
      _
    $region149: #{clip_test_time_tuning_forward.1} parent=1 // pred_fallthru
      _
    // Predicated region
    $region150: #{clip_test_time_tuning_forward.1} parent=1 // pred_check
      _
    $region151: #{clip_test_time_tuning_forward.1} parent=1 // pred_check_branch
      %162 = sbr.rel (0) target = $region153
    $region152: #{clip_test_time_tuning_forward.1} parent=1 // pred_region
      _
    $region153: #{clip_test_time_tuning_forward.1} parent=1 // pred_fallthru
      _
    %v164 = vld [vmem:[%s1] sm:$0xff]
    %v165 = vld [vmem:[%s1 + $0x8] sm:$0x11]
    %v166 = vld [vmem:[%s3] sm:$0xf]
    %v167 = vld [vmem:[%s3 + $0x4] sm:$0xf]
    %v168 = vld [vmem:[%s3 + $0x8] sm:$0xf]
    %v169 = vld [vmem:[%s3 + $0xc] sm:$0xf]
    %v170 = vld [vmem:[%s3 + $0x10] sm:$0xf]
    %v171 = vld [vmem:[%s3 + $0x14] sm:$0xf]
    %v172 = vld [vmem:[%s3 + $0x18] sm:$0xf]
    %v173 = vld [vmem:[%s3 + $0x1c] sm:$0xf]
    %v174 = vld [vmem:[%s3 + $0x20] sm:$0xf]
    %v175 = vld [vmem:[%s3 + $0x24] sm:$0xf]
    %v176 = vld [vmem:[%s3 + $0x28] sm:$0xf]
    %v177 = vld [vmem:[%s3 + $0x2c] sm:$0xf]
    %v178 = vld [vmem:[%s3 + $0x30] sm:$0xf]
    %v179 = vld [vmem:[%s3 + $0x34] sm:$0xf]
    %v180 = vld [vmem:[%s3 + $0x38] sm:$0xf]
    %v181 = vld [vmem:[%s3 + $0x3c] sm:$0xf]
    %v182 = vld [vmem:[%s3 + $0x40] sm:$0xf]
    %v183 = vld [vmem:[%s3 + $0x44] sm:$0xf]
    %v184 = vld [vmem:[%s3 + $0x48] sm:$0xf]
    %v185 = vld [vmem:[%s3 + $0x4c] sm:$0xf]
    %v186 = vld [vmem:[%s3 + $0x50] sm:$0xf]
    %v187 = vld [vmem:[%s3 + $0x54] sm:$0xf]
    %v188 = vld [vmem:[%s3 + $0x58] sm:$0xf]
    %v189 = vld [vmem:[%s3 + $0x5c] sm:$0xf]
    %v192 = vunpack.c.l.b16 %v164
    %v193 = vunpack.c.h.b16 %v164
    %v194 = vunpack.c.l.b16 %v165
    %v195 = vunpack.c.h.b16 %v165
    %v196 = vpack.c.b16 %v194, %v192
    %v197 = vpack.c.b16 %v195, %v193
    %v223 = vunpack.c.l.b16 %v166
    %v224 = vunpack.c.l.b16 %v167
    %v225 = vunpack.c.l.b16 %v168
    %v226 = vunpack.c.l.b16 %v169
    %v227 = vunpack.c.l.b16 %v170
    %v228 = vunpack.c.l.b16 %v171
    %v229 = vunpack.c.l.b16 %v172
    %v230 = vunpack.c.l.b16 %v173
    %v231 = vunpack.c.l.b16 %v174
    %v232 = vunpack.c.l.b16 %v175
    %v233 = vunpack.c.l.b16 %v176
    %v234 = vunpack.c.l.b16 %v177
    %v235 = vunpack.c.l.b16 %v178
    %v236 = vunpack.c.l.b16 %v179
    %v237 = vunpack.c.l.b16 %v180
    %v238 = vunpack.c.l.b16 %v181
    %v239 = vunpack.c.l.b16 %v182
    %v240 = vunpack.c.l.b16 %v183
    %v241 = vunpack.c.l.b16 %v184
    %v242 = vunpack.c.l.b16 %v185
    %v243 = vunpack.c.l.b16 %v186
    %v244 = vunpack.c.l.b16 %v187
    %v245 = vunpack.c.l.b16 %v188
    %v246 = vunpack.c.l.b16 %v189
    %v247 = vpack.c.b16 %v224, %v223
    %v248 = vpack.c.b16 %v226, %v225
    %v249 = vpack.c.b16 %v228, %v227
    %v250 = vpack.c.b16 %v230, %v229
    %v251 = vpack.c.b16 %v232, %v231
    %v252 = vpack.c.b16 %v234, %v233
    %v253 = vpack.c.b16 %v236, %v235
    %v254 = vpack.c.b16 %v238, %v237
    %v255 = vpack.c.b16 %v240, %v239
    %v256 = vpack.c.b16 %v242, %v241
    %v257 = vpack.c.b16 %v244, %v243
    %v258 = vpack.c.b16 %v246, %v245
    %vm271 = vcmask 523264
    %v273 = vsel %vm271, %v197, 0
    %275 = vmatprep.subr.bf16.mxu0 0
    %276 = vmatpush1.bf16.msra.mxu0 %v254
    %277 = vmatprep.subr.bf16.mxu0 0
    %278 = vmatpush1.bf16.msra.mxu0 %v253
    %279 = vmatprep.subr.bf16.mxu0 0
    %280 = vmatpush1.bf16.msra.mxu0 %v252
    %281 = vmatprep.subr.bf16.mxu0 0
    %282 = vmatpush1.bf16.msra.mxu0 %v251
    %283 = vmatprep.subr.bf16.mxu0 0
    %284 = vmatpush1.bf16.msra.mxu0 %v250
    %285 = vmatprep.subr.bf16.mxu0 0
    %286 = vmatpush1.bf16.msra.mxu0 %v249
    %287 = vmatprep.subr.bf16.mxu0 0
    %288 = vmatpush1.bf16.msra.mxu0 %v248
    %289 = vmatprep.subr.bf16.mxu0 0
    %290 = vmatpush1.bf16.msra.mxu0 %v247
    %291 = vmatprep.subr.bf16.mxu0 0
    %292 = vmatpush2.bf16.msra.mxu0 0
    %293 = vmatprep.subr.bf16.mxu0 0
    %294 = vmatpush2.bf16.msra.mxu0 0
    %295 = vmatprep.subr.bf16.mxu0 0
    %296 = vmatpush2.bf16.msra.mxu0 0
    %297 = vmatprep.subr.bf16.mxu0 0
    %298 = vmatpush2.bf16.msra.mxu0 0
    %299 = vmatprep.subr.bf16.mxu0 0
    %300 = vmatpush2.bf16.msra.mxu0 %v258
    %301 = vmatprep.subr.bf16.mxu0 0
    %302 = vmatpush2.bf16.msra.mxu0 %v257
    %303 = vmatprep.subr.bf16.mxu0 0
    %304 = vmatpush2.bf16.msra.mxu0 %v256
    %305 = vmatprep.subr.bf16.mxu0 0
    %306 = vmatpush2.bf16.msra.mxu0 %v255
    %307 = vmatprep.mubr.bf16.mxu0 %v273
    %308 = vmatmul.mubr.bf16.gmra.mxu0 %v196
    %v309 = vpop.f32.mrf.mxu0
    %v310 = vadd.f32 0.0, %v309
    %v311 = vpop.f32.mrf.mxu0
    %v312 = vpop.f32.mrf.mxu0
    %v313 = vadd.f32 0.0, %v312
    %v314 = vpop.f32.mrf.mxu0
    %315 = vdwg.mxu0
    %v318 = vcombine.high %v310, %v310
    %v320 = vunpack.c.l.s4 1966171168
    %v321 = vunpack.c.0.s8 %v320
    %v322 = vlaneseq
    %v323 = vshrl.u32 %v322, 7
    %v324 = vsub.s32 %v321, %v323
    %v325 = vrot.slane %v310, %v324
    %v327 = vunpack.c.l.s4 1966171168
    %v328 = vunpack.c.0.s8 %v327
    %v329 = vlaneseq
    %v330 = vshrl.u32 %v329, 7
    %v331 = vsub.s32 %v328, %v330
    %v332 = vrot.slane %v318, %v331
    %v333 = vcombine.high %v325, %v325
    %v334 = vcombine.high %v332, %v332
    %v336 = vunpack.c.l.s4 1966171168
    %v337 = vunpack.c.0.s8 %v336
    %v338 = vlaneseq
    %v339 = vshrl.u32 %v338, 7
    %v340 = vsub.s32 %v337, %v339
    %v341 = vrot.slane %v325, %v340
    %v343 = vunpack.c.l.s4 1966171168
    %v344 = vunpack.c.0.s8 %v343
    %v345 = vlaneseq
    %v346 = vshrl.u32 %v345, 7
    %v347 = vsub.s32 %v344, %v346
    %v348 = vrot.slane %v332, %v347
    %v350 = vunpack.c.l.s4 1966171168
    %v351 = vunpack.c.0.s8 %v350
    %v352 = vlaneseq
    %v353 = vshrl.u32 %v352, 7
    %v354 = vsub.s32 %v351, %v353
    %v355 = vrot.slane %v333, %v354
    %v357 = vunpack.c.l.s4 1966171168
    %v358 = vunpack.c.0.s8 %v357
    %v359 = vlaneseq
    %v360 = vshrl.u32 %v359, 7
    %v361 = vsub.s32 %v358, %v360
    %v362 = vrot.slane %v334, %v361
    %v363 = vcombine.high %v341, %v341
    %v364 = vcombine.high %v348, %v348
    %v365 = vcombine.high %v355, %v355
    %v366 = vcombine.high %v362, %v362
    %v368 = vunpack.c.l.s4 1966171168
    %v369 = vunpack.c.0.s8 %v368
    %v370 = vlaneseq
    %v371 = vshrl.u32 %v370, 7
    %v372 = vsub.s32 %v369, %v371
    %v373 = vrot.slane %v313, %v372
    %v374 = vcombine.high %v373, %v373
    %v376 = vunpack.c.l.s4 1966171168
    %v377 = vunpack.c.0.s8 %v376
    %v378 = vlaneseq
    %v379 = vshrl.u32 %v378, 7
    %v380 = vsub.s32 %v377, %v379
    %v381 = vrot.slane %v373, %v380
    %v383 = vunpack.c.l.s4 1966171168
    %v384 = vunpack.c.0.s8 %v383
    %v385 = vlaneseq
    %v386 = vshrl.u32 %v385, 7
    %v387 = vsub.s32 %v384, %v386
    %v388 = vrot.slane %v374, %v387
    %v399 = vld [vmem:[%s5] sm:$0x1f]
    %v401 = vcombine.high %v399, %v399
    %v403 = vunpack.c.l.s4 1966171168
    %v404 = vunpack.c.0.s8 %v403
    %v405 = vlaneseq
    %v406 = vshrl.u32 %v405, 7
    %v407 = vsub.s32 %v404, %v406
    %v408 = vrot.slane %v399, %v407
    %v410 = vunpack.c.l.s4 1966171168
    %v411 = vunpack.c.0.s8 %v410
    %v412 = vlaneseq
    %v413 = vshrl.u32 %v412, 7
    %v414 = vsub.s32 %v411, %v413
    %v415 = vrot.slane %v401, %v414
    %v416 = vcombine.high %v408, %v408
    %v418 = vunpack.c.l.s4 1966171168
    %v419 = vunpack.c.0.s8 %v418
    %v420 = vlaneseq
    %v421 = vshrl.u32 %v420, 7
    %v422 = vsub.s32 %v419, %v421
    %v423 = vrot.slane %v408, %v422
    %v425 = vunpack.c.l.s4 1966171168
    %v426 = vunpack.c.0.s8 %v425
    %v427 = vlaneseq
    %v428 = vshrl.u32 %v427, 7
    %v429 = vsub.s32 %v426, %v428
    %v430 = vrot.slane %v415, %v429
    %v432 = vunpack.c.l.s4 1966171168
    %v433 = vunpack.c.0.s8 %v432
    %v434 = vlaneseq
    %v435 = vshrl.u32 %v434, 7
    %v436 = vsub.s32 %v433, %v435
    %v437 = vrot.slane %v416, %v436
    %v438 = vcombine.high %v423, %v423
    %v439 = vcombine.high %v437, %v437
    %v445 = vadd.f32 %v341, %v423
    %v446 = vadd.f32 %v355, %v437
    %v447 = vadd.f32 %v363, %v438
    %v448 = vadd.f32 %v365, %v439
    %v449 = vadd.f32 %v348, %v430
    %v450 = vadd.f32 %v362, %v423
    %v451 = vadd.f32 %v364, %v437
    %v452 = vadd.f32 %v366, %v438
    %v453 = vadd.f32 %v381, %v439
    %v454 = vadd.f32 %v388, %v430
    %v455 = vld [vmem:[%s7] sm:$0x1]
    %v456 = vld [vmem:[%s9] sm:$0x1]
    %v467 = vcombine.low %v445, %v446
    %v468 = vcombine.low %v447, %v448
    %v469 = vcombine.low %v449, %v450
    %v470 = vcombine.low %v451, %v452
    %v472 = vunpack.c.l.s4 1966171168
    %v473 = vunpack.c.0.s8 %v472
    %v474 = vlaneseq
    %v475 = vshrl.u32 %v474, 7
    %v476 = vsub.s32 %v473, %v475
    %v477 = vrot.slane %v467, %v476
    %v479 = vunpack.c.l.s4 1966171168
    %v480 = vunpack.c.0.s8 %v479
    %v481 = vlaneseq
    %v482 = vshrl.u32 %v481, 7
    %v483 = vsub.s32 %v480, %v482
    %v484 = vrot.slane %v468, %v483
    %v486 = vunpack.c.l.s4 1966171168
    %v487 = vunpack.c.0.s8 %v486
    %v488 = vlaneseq
    %v489 = vshrl.u32 %v488, 7
    %v490 = vsub.s32 %v487, %v489
    %v491 = vrot.slane %v469, %v490
    %v493 = vunpack.c.l.s4 1966171168
    %v494 = vunpack.c.0.s8 %v493
    %v495 = vlaneseq
    %v496 = vshrl.u32 %v495, 7
    %v497 = vsub.s32 %v494, %v496
    %v498 = vrot.slane %v470, %v497
    %v499 = vcombine.low %v477, %v484
    %v500 = vcombine.low %v491, %v498
    %v502 = vunpack.c.l.s4 1966171168
    %v503 = vunpack.c.0.s8 %v502
    %v504 = vlaneseq
    %v505 = vshrl.u32 %v504, 7
    %v506 = vsub.s32 %v503, %v505
    %v507 = vrot.slane %v499, %v506
    %v509 = vunpack.c.l.s4 1966171168
    %v510 = vunpack.c.0.s8 %v509
    %v511 = vlaneseq
    %v512 = vshrl.u32 %v511, 7
    %v513 = vsub.s32 %v510, %v512
    %v514 = vrot.slane %v500, %v513
    %v515 = vcombine.low %v507, %v514
    %v516 = vcombine.low %v453, %v454
    %v518 = vunpack.c.l.s4 1966171168
    %v519 = vunpack.c.0.s8 %v518
    %v520 = vlaneseq
    %v521 = vshrl.u32 %v520, 7
    %v522 = vsub.s32 %v519, %v521
    %v523 = vrot.slane %v516, %v522
    %v525 = vunpack.c.l.s4 1966171168
    %v526 = vunpack.c.0.s8 %v525
    %v527 = vlaneseq
    %v528 = vshrl.u32 %v527, 7
    %v529 = vsub.s32 %v526, %v528
    %v530 = vrot.slane %v523, %v529
    %vm533 = vcmask 261120
    %v534 = vsel %vm533, %v515, 0.0
    %535 = vadd.xlane.f32.xlu0 %v534
    %v536 = vpop.xlane.xlu0 %535
    %vm537 = vcmask 254976
    %v538 = vsel %vm537, %v530, 0.0
    %539 = vadd.xlane.f32.xlu0 %v538
    %v540 = vpop.xlane.xlu0 %539
    %v541 = vrcp.pop 32.0
    %v542 = vmul.f32 %v536, %v541
    %v543 = vmul.f32 %v540, %v541
    %v546 = vlaneseq
    %v547 = vshrl.u32 %v546, 7
    %v548 = vsub.s32 0, %v547
    %v549 = vrot.slane %v542, %v548
    %v550 = vlaneseq
    %v551 = vshrl.u32 %v550, 7
    %v552 = vsub.s32 1, %v551
    %v553 = vrot.slane %v542, %v552
    %v554 = vlaneseq
    %v555 = vshrl.u32 %v554, 7
    %v556 = vsub.s32 2, %v555
    %v557 = vrot.slane %v542, %v556
    %v558 = vlaneseq
    %v559 = vshrl.u32 %v558, 7
    %v560 = vsub.s32 3, %v559
    %v561 = vrot.slane %v542, %v560
    %v562 = vlaneseq
    %v563 = vshrl.u32 %v562, 7
    %v564 = vsub.s32 4, %v563
    %v565 = vrot.slane %v542, %v564
    %v566 = vlaneseq
    %v567 = vshrl.u32 %v566, 7
    %v568 = vsub.s32 5, %v567
    %v569 = vrot.slane %v542, %v568
    %v570 = vlaneseq
    %v571 = vshrl.u32 %v570, 7
    %v572 = vsub.s32 6, %v571
    %v573 = vrot.slane %v542, %v572
    %v574 = vlaneseq
    %v575 = vshrl.u32 %v574, 7
    %v576 = vsub.s32 7, %v575
    %v577 = vrot.slane %v542, %v576
    %v578 = vlaneseq
    %v579 = vshrl.u32 %v578, 7
    %v580 = vsub.s32 0, %v579
    %v581 = vrot.slane %v543, %v580
    %v582 = vlaneseq
    %v583 = vshrl.u32 %v582, 7
    %v584 = vsub.s32 1, %v583
    %v585 = vrot.slane %v543, %v584
    %v596 = vsub.f32 %v445, %v549
    %v597 = vsub.f32 %v446, %v553
    %v598 = vsub.f32 %v447, %v557
    %v599 = vsub.f32 %v448, %v561
    %v600 = vsub.f32 %v449, %v565
    %v601 = vsub.f32 %v450, %v569
    %v602 = vsub.f32 %v451, %v573
    %v603 = vsub.f32 %v452, %v577
    %v604 = vsub.f32 %v453, %v581
    %v605 = vsub.f32 %v454, %v585
    %v606 = vmul.f32 %v596, %v596
    %v607 = vmul.f32 %v597, %v597
    %v608 = vmul.f32 %v598, %v598
    %v609 = vmul.f32 %v599, %v599
    %v610 = vmul.f32 %v600, %v600
    %v611 = vmul.f32 %v601, %v601
    %v612 = vmul.f32 %v602, %v602
    %v613 = vmul.f32 %v603, %v603
    %v614 = vmul.f32 %v604, %v604
    %v615 = vmul.f32 %v605, %v605
    %v626 = vcombine.low %v606, %v607
    %v627 = vcombine.low %v608, %v609
    %v628 = vcombine.low %v610, %v611
    %v629 = vcombine.low %v612, %v613
    %v631 = vunpack.c.l.s4 1966171168
    %v632 = vunpack.c.0.s8 %v631
    %v633 = vlaneseq
    %v634 = vshrl.u32 %v633, 7
    %v635 = vsub.s32 %v632, %v634
    %v636 = vrot.slane %v626, %v635
    %v638 = vunpack.c.l.s4 1966171168
    %v639 = vunpack.c.0.s8 %v638
    %v640 = vlaneseq
    %v641 = vshrl.u32 %v640, 7
    %v642 = vsub.s32 %v639, %v641
    %v643 = vrot.slane %v627, %v642
    %v645 = vunpack.c.l.s4 1966171168
    %v646 = vunpack.c.0.s8 %v645
    %v647 = vlaneseq
    %v648 = vshrl.u32 %v647, 7
    %v649 = vsub.s32 %v646, %v648
    %v650 = vrot.slane %v628, %v649
    %v652 = vunpack.c.l.s4 1966171168
    %v653 = vunpack.c.0.s8 %v652
    %v654 = vlaneseq
    %v655 = vshrl.u32 %v654, 7
    %v656 = vsub.s32 %v653, %v655
    %v657 = vrot.slane %v629, %v656
    %v658 = vcombine.low %v636, %v643
    %v659 = vcombine.low %v650, %v657
    %v661 = vunpack.c.l.s4 1966171168
    %v662 = vunpack.c.0.s8 %v661
    %v663 = vlaneseq
    %v664 = vshrl.u32 %v663, 7
    %v665 = vsub.s32 %v662, %v664
    %v666 = vrot.slane %v658, %v665
    %v668 = vunpack.c.l.s4 1966171168
    %v669 = vunpack.c.0.s8 %v668
    %v670 = vlaneseq
    %v671 = vshrl.u32 %v670, 7
    %v672 = vsub.s32 %v669, %v671
    %v673 = vrot.slane %v659, %v672
    %v674 = vcombine.low %v666, %v673
    %v675 = vcombine.low %v614, %v615
    %v677 = vunpack.c.l.s4 1966171168
    %v678 = vunpack.c.0.s8 %v677
    %v679 = vlaneseq
    %v680 = vshrl.u32 %v679, 7
    %v681 = vsub.s32 %v678, %v680
    %v682 = vrot.slane %v675, %v681
    %v684 = vunpack.c.l.s4 1966171168
    %v685 = vunpack.c.0.s8 %v684
    %v686 = vlaneseq
    %v687 = vshrl.u32 %v686, 7
    %v688 = vsub.s32 %v685, %v687
    %v689 = vrot.slane %v682, %v688
    %v692 = vsel %vm533, %v674, 0.0
    %693 = vadd.xlane.f32.xlu0 %v692
    %v694 = vpop.xlane.xlu0 %693
    %v695 = vsel %vm537, %v689, 0.0
    %696 = vadd.xlane.f32.xlu0 %v695
    %v697 = vpop.xlane.xlu0 %696
    %v698 = vmul.f32 %v694, %v541
    %v699 = vmul.f32 %v697, %v541
    %v700 = vadd.f32 %v698, 1e-05
    %v701 = vadd.f32 %v699, 1e-05
    %v702 = vrsqrt.pop %v700
    %v703 = vrsqrt.pop %v701
    %v706 = vlaneseq
    %v707 = vshrl.u32 %v706, 7
    %v708 = vsub.s32 0, %v707
    %v709 = vrot.slane %v702, %v708
    %v710 = vlaneseq
    %v711 = vshrl.u32 %v710, 7
    %v712 = vsub.s32 1, %v711
    %v713 = vrot.slane %v702, %v712
    %v714 = vlaneseq
    %v715 = vshrl.u32 %v714, 7
    %v716 = vsub.s32 2, %v715
    %v717 = vrot.slane %v702, %v716
    %v718 = vlaneseq
    %v719 = vshrl.u32 %v718, 7
    %v720 = vsub.s32 3, %v719
    %v721 = vrot.slane %v702, %v720
    %v722 = vlaneseq
    %v723 = vshrl.u32 %v722, 7
    %v724 = vsub.s32 4, %v723
    %v725 = vrot.slane %v702, %v724
    %v726 = vlaneseq
    %v727 = vshrl.u32 %v726, 7
    %v728 = vsub.s32 5, %v727
    %v729 = vrot.slane %v702, %v728
    %v730 = vlaneseq
    %v731 = vshrl.u32 %v730, 7
    %v732 = vsub.s32 6, %v731
    %v733 = vrot.slane %v702, %v732
    %v734 = vlaneseq
    %v735 = vshrl.u32 %v734, 7
    %v736 = vsub.s32 7, %v735
    %v737 = vrot.slane %v702, %v736
    %v738 = vlaneseq
    %v739 = vshrl.u32 %v738, 7
    %v740 = vsub.s32 0, %v739
    %v741 = vrot.slane %v703, %v740
    %v742 = vlaneseq
    %v743 = vshrl.u32 %v742, 7
    %v744 = vsub.s32 1, %v743
    %v745 = vrot.slane %v703, %v744
    %v756 = vmul.f32 %v596, %v709
    %v757 = vmul.f32 %v597, %v713
    %v758 = vmul.f32 %v598, %v717
    %v759 = vmul.f32 %v599, %v721
    %v760 = vmul.f32 %v600, %v725
    %v761 = vmul.f32 %v601, %v729
    %v762 = vmul.f32 %v602, %v733
    %v763 = vmul.f32 %v603, %v737
    %v764 = vmul.f32 %v604, %v741
    %v765 = vmul.f32 %v605, %v745
    %v767 = vlaneseq
    %v768 = vshrl.u32 %v767, 7
    %v769 = vsub.s32 0, %v768
    %v770 = vrot.slane %v455, %v769
    %v771 = vcombine.high %v770, %v770
    %v773 = vunpack.c.l.s4 1966171168
    %v774 = vunpack.c.0.s8 %v773
    %v775 = vlaneseq
    %v776 = vshrl.u32 %v775, 7
    %v777 = vsub.s32 %v774, %v776
    %v778 = vrot.slane %v770, %v777
    %v780 = vunpack.c.l.s4 1966171168
    %v781 = vunpack.c.0.s8 %v780
    %v782 = vlaneseq
    %v783 = vshrl.u32 %v782, 7
    %v784 = vsub.s32 %v781, %v783
    %v785 = vrot.slane %v771, %v784
    %v786 = vcombine.high %v778, %v778
    %v787 = vcombine.high %v785, %v785
    %v789 = vunpack.c.l.s4 1966171168
    %v790 = vunpack.c.0.s8 %v789
    %v791 = vlaneseq
    %v792 = vshrl.u32 %v791, 7
    %v793 = vsub.s32 %v790, %v792
    %v794 = vrot.slane %v778, %v793
    %v796 = vunpack.c.l.s4 1966171168
    %v797 = vunpack.c.0.s8 %v796
    %v798 = vlaneseq
    %v799 = vshrl.u32 %v798, 7
    %v800 = vsub.s32 %v797, %v799
    %v801 = vrot.slane %v785, %v800
    %v803 = vunpack.c.l.s4 1966171168
    %v804 = vunpack.c.0.s8 %v803
    %v805 = vlaneseq
    %v806 = vshrl.u32 %v805, 7
    %v807 = vsub.s32 %v804, %v806
    %v808 = vrot.slane %v786, %v807
    %v810 = vunpack.c.l.s4 1966171168
    %v811 = vunpack.c.0.s8 %v810
    %v812 = vlaneseq
    %v813 = vshrl.u32 %v812, 7
    %v814 = vsub.s32 %v811, %v813
    %v815 = vrot.slane %v787, %v814
    %v816 = vcombine.high %v794, %v794
    %v817 = vcombine.high %v801, %v801
    %v818 = vcombine.high %v808, %v808
    %v819 = vcombine.high %v815, %v815
    %v828 = vmul.f32 %v756, %v794
    %v829 = vmul.f32 %v757, %v808
    %v830 = vmul.f32 %v758, %v816
    %v831 = vmul.f32 %v759, %v818
    %v832 = vmul.f32 %v760, %v801
    %v833 = vmul.f32 %v761, %v815
    %v834 = vmul.f32 %v762, %v817
    %v835 = vmul.f32 %v763, %v819
    %v836 = vmul.f32 %v764, %v794
    %v837 = vmul.f32 %v765, %v808
    %v839 = vlaneseq
    %v840 = vshrl.u32 %v839, 7
    %v841 = vsub.s32 0, %v840
    %v842 = vrot.slane %v456, %v841
    %v843 = vcombine.high %v842, %v842
    %v845 = vunpack.c.l.s4 1966171168
    %v846 = vunpack.c.0.s8 %v845
    %v847 = vlaneseq
    %v848 = vshrl.u32 %v847, 7
    %v849 = vsub.s32 %v846, %v848
    %v850 = vrot.slane %v842, %v849
    %v852 = vunpack.c.l.s4 1966171168
    %v853 = vunpack.c.0.s8 %v852
    %v854 = vlaneseq
    %v855 = vshrl.u32 %v854, 7
    %v856 = vsub.s32 %v853, %v855
    %v857 = vrot.slane %v843, %v856
    %v858 = vcombine.high %v850, %v850
    %v859 = vcombine.high %v857, %v857
    %v861 = vunpack.c.l.s4 1966171168
    %v862 = vunpack.c.0.s8 %v861
    %v863 = vlaneseq
    %v864 = vshrl.u32 %v863, 7
    %v865 = vsub.s32 %v862, %v864
    %v866 = vrot.slane %v850, %v865
    %v868 = vunpack.c.l.s4 1966171168
    %v869 = vunpack.c.0.s8 %v868
    %v870 = vlaneseq
    %v871 = vshrl.u32 %v870, 7
    %v872 = vsub.s32 %v869, %v871
    %v873 = vrot.slane %v857, %v872
    %v875 = vunpack.c.l.s4 1966171168
    %v876 = vunpack.c.0.s8 %v875
    %v877 = vlaneseq
    %v878 = vshrl.u32 %v877, 7
    %v879 = vsub.s32 %v876, %v878
    %v880 = vrot.slane %v858, %v879
    %v882 = vunpack.c.l.s4 1966171168
    %v883 = vunpack.c.0.s8 %v882
    %v884 = vlaneseq
    %v885 = vshrl.u32 %v884, 7
    %v886 = vsub.s32 %v883, %v885
    %v887 = vrot.slane %v859, %v886
    %v888 = vcombine.high %v866, %v866
    %v889 = vcombine.high %v873, %v873
    %v890 = vcombine.high %v880, %v880
    %v891 = vcombine.high %v887, %v887
    %v900 = vadd.f32 %v828, %v866
    %v901 = vadd.f32 %v829, %v880
    %v902 = vadd.f32 %v830, %v888
    %v903 = vadd.f32 %v831, %v890
    %v904 = vadd.f32 %v832, %v873
    %v905 = vadd.f32 %v833, %v887
    %v906 = vadd.f32 %v834, %v889
    %v907 = vadd.f32 %v835, %v891
    %v908 = vadd.f32 %v836, %v866
    %v909 = vadd.f32 %v837, %v880
    %v910 = vld [vmem:[%s11] sm:$0x1]
    %v911 = vld [vmem:[%s13] sm:$0x1]
    %v912 = vld [vmem:[%s15] sm:$0xf]
    %v913 = vld [vmem:[%s15 + $0x4] sm:$0xf]
    %v914 = vld [vmem:[%s15 + $0x8] sm:$0xf]
    %v915 = vld [vmem:[%s15 + $0xc] sm:$0xf]
    %v916 = vld [vmem:[%s17] sm:$0x1]
    %v917 = vld [vmem:[%s19] sm:$0xf]
    %v918 = vld [vmem:[%s19 + $0x4] sm:$0xf]
    %v919 = vld [vmem:[%s19 + $0x8] sm:$0xf]
    %v920 = vld [vmem:[%s19 + $0xc] sm:$0xf]
    %v921 = vld [vmem:[%s21] sm:$0x1]
    %v922 = vld [vmem:[%s23] sm:$0x1]
    %v923 = vld [vmem:[%s25] sm:$0x1]
    %v924 = vld [vmem:[%s27] sm:$0xf]
    %v925 = vld [vmem:[%s27 + $0x4] sm:$0xf]
    %v926 = vld [vmem:[%s27 + $0x8] sm:$0xf]
    %v927 = vld [vmem:[%s27 + $0xc] sm:$0xf]
    %v928 = vld [vmem:[%s29] sm:$0x1]
    %v929 = vld [vmem:[%s31] sm:$0xf]
    %v930 = vld [vmem:[%s31 + $0x4] sm:$0xf]
    %v931 = vld [vmem:[%s31 + $0x8] sm:$0xf]
    %v932 = vld [vmem:[%s31 + $0xc] sm:$0xf]
    %v933 = vld [vmem:[%s31 + $0x10] sm:$0xf]
    %v934 = vld [vmem:[%s31 + $0x14] sm:$0xf]
    %v935 = vld [vmem:[%s31 + $0x18] sm:$0xf]
    %v936 = vld [vmem:[%s31 + $0x1c] sm:$0xf]
    %v937 = vld [vmem:[%s31 + $0x20] sm:$0xf]
    %v938 = vld [vmem:[%s31 + $0x24] sm:$0xf]
    %v939 = vld [vmem:[%s31 + $0x28] sm:$0xf]
    %v940 = vld [vmem:[%s31 + $0x2c] sm:$0xf]
    %v941 = vld [vmem:[%s31 + $0x30] sm:$0xf]
    %v942 = vld [vmem:[%s31 + $0x34] sm:$0xf]
    %v943 = vld [vmem:[%s31 + $0x38] sm:$0xf]
    %v944 = vld [vmem:[%s31 + $0x3c] sm:$0xf]
    %v945 = vld [vmem:[%s33] sm:$0x1]
    %v956 = vcombine.low %v900, %v901
    %v957 = vcombine.low %v902, %v903
    %v958 = vcombine.low %v904, %v905
    %v959 = vcombine.low %v906, %v907
    %v961 = vunpack.c.l.s4 1966171168
    %v962 = vunpack.c.0.s8 %v961
    %v963 = vlaneseq
    %v964 = vshrl.u32 %v963, 7
    %v965 = vsub.s32 %v962, %v964
    %v966 = vrot.slane %v956, %v965
    %v968 = vunpack.c.l.s4 1966171168
    %v969 = vunpack.c.0.s8 %v968
    %v970 = vlaneseq
    %v971 = vshrl.u32 %v970, 7
    %v972 = vsub.s32 %v969, %v971
    %v973 = vrot.slane %v957, %v972
    %v975 = vunpack.c.l.s4 1966171168
    %v976 = vunpack.c.0.s8 %v975
    %v977 = vlaneseq
    %v978 = vshrl.u32 %v977, 7
    %v979 = vsub.s32 %v976, %v978
    %v980 = vrot.slane %v958, %v979
    %v982 = vunpack.c.l.s4 1966171168
    %v983 = vunpack.c.0.s8 %v982
    %v984 = vlaneseq
    %v985 = vshrl.u32 %v984, 7
    %v986 = vsub.s32 %v983, %v985
    %v987 = vrot.slane %v959, %v986
    %v988 = vcombine.low %v966, %v973
    %v989 = vcombine.low %v980, %v987
    %v991 = vunpack.c.l.s4 1966171168
    %v992 = vunpack.c.0.s8 %v991
    %v993 = vlaneseq
    %v994 = vshrl.u32 %v993, 7
    %v995 = vsub.s32 %v992, %v994
    %v996 = vrot.slane %v988, %v995
    %v998 = vunpack.c.l.s4 1966171168
    %v999 = vunpack.c.0.s8 %v998
    %v1000 = vlaneseq
    %v1001 = vshrl.u32 %v1000, 7
    %v1002 = vsub.s32 %v999, %v1001
    %v1003 = vrot.slane %v989, %v1002
    %v1004 = vcombine.low %v996, %v1003
    %v1005 = vcombine.low %v908, %v909
    %v1007 = vunpack.c.l.s4 1966171168
    %v1008 = vunpack.c.0.s8 %v1007
    %v1009 = vlaneseq
    %v1010 = vshrl.u32 %v1009, 7
    %v1011 = vsub.s32 %v1008, %v1010
    %v1012 = vrot.slane %v1005, %v1011
    %v1014 = vunpack.c.l.s4 1966171168
    %v1015 = vunpack.c.0.s8 %v1014
    %v1016 = vlaneseq
    %v1017 = vshrl.u32 %v1016, 7
    %v1018 = vsub.s32 %v1015, %v1017
    %v1019 = vrot.slane %v1012, %v1018
    %v1022 = vsel %vm533, %v1004, 0.0
    %1023 = vadd.xlane.f32.xlu0 %v1022
    %v1024 = vpop.xlane.xlu0 %1023
    %v1025 = vsel %vm537, %v1019, 0.0
    %1026 = vadd.xlane.f32.xlu0 %v1025
    %v1027 = vpop.xlane.xlu0 %1026
    %v1028 = vmul.f32 %v1024, %v541
    %v1029 = vmul.f32 %v1027, %v541
    %v1032 = vlaneseq
    %v1033 = vshrl.u32 %v1032, 7
    %v1034 = vsub.s32 0, %v1033
    %v1035 = vrot.slane %v1028, %v1034
    %v1036 = vlaneseq
    %v1037 = vshrl.u32 %v1036, 7
    %v1038 = vsub.s32 1, %v1037
    %v1039 = vrot.slane %v1028, %v1038
    %v1040 = vlaneseq
    %v1041 = vshrl.u32 %v1040, 7
    %v1042 = vsub.s32 2, %v1041
    %v1043 = vrot.slane %v1028, %v1042
    %v1044 = vlaneseq
    %v1045 = vshrl.u32 %v1044, 7
    %v1046 = vsub.s32 3, %v1045
    %v1047 = vrot.slane %v1028, %v1046
    %v1048 = vlaneseq
    %v1049 = vshrl.u32 %v1048, 7
    %v1050 = vsub.s32 4, %v1049
    %v1051 = vrot.slane %v1028, %v1050
    %v1052 = vlaneseq
    %v1053 = vshrl.u32 %v1052, 7
    %v1054 = vsub.s32 5, %v1053
    %v1055 = vrot.slane %v1028, %v1054
    %v1056 = vlaneseq
    %v1057 = vshrl.u32 %v1056, 7
    %v1058 = vsub.s32 6, %v1057
    %v1059 = vrot.slane %v1028, %v1058
    %v1060 = vlaneseq
    %v1061 = vshrl.u32 %v1060, 7
    %v1062 = vsub.s32 7, %v1061
    %v1063 = vrot.slane %v1028, %v1062
    %v1064 = vlaneseq
    %v1065 = vshrl.u32 %v1064, 7
    %v1066 = vsub.s32 0, %v1065
    %v1067 = vrot.slane %v1029, %v1066
    %v1068 = vlaneseq
    %v1069 = vshrl.u32 %v1068, 7
    %v1070 = vsub.s32 1, %v1069
    %v1071 = vrot.slane %v1029, %v1070
    %v1082 = vsub.f32 %v900, %v1035
    %v1083 = vsub.f32 %v901, %v1039
    %v1084 = vsub.f32 %v902, %v1043
    %v1085 = vsub.f32 %v903, %v1047
    %v1086 = vsub.f32 %v904, %v1051
    %v1087 = vsub.f32 %v905, %v1055
    %v1088 = vsub.f32 %v906, %v1059
    %v1089 = vsub.f32 %v907, %v1063
    %v1090 = vsub.f32 %v908, %v1067
    %v1091 = vsub.f32 %v909, %v1071
    %v1092 = vmul.f32 %v1082, %v1082
    %v1093 = vmul.f32 %v1083, %v1083
    %v1094 = vmul.f32 %v1084, %v1084
    %v1095 = vmul.f32 %v1085, %v1085
    %v1096 = vmul.f32 %v1086, %v1086
    %v1097 = vmul.f32 %v1087, %v1087
    %v1098 = vmul.f32 %v1088, %v1088
    %v1099 = vmul.f32 %v1089, %v1089
    %v1100 = vmul.f32 %v1090, %v1090
    %v1101 = vmul.f32 %v1091, %v1091
    %v1112 = vcombine.low %v1092, %v1093
    %v1113 = vcombine.low %v1094, %v1095
    %v1114 = vcombine.low %v1096, %v1097
    %v1115 = vcombine.low %v1098, %v1099
    %v1117 = vunpack.c.l.s4 1966171168
    %v1118 = vunpack.c.0.s8 %v1117
    %v1119 = vlaneseq
    %v1120 = vshrl.u32 %v1119, 7
    %v1121 = vsub.s32 %v1118, %v1120
    %v1122 = vrot.slane %v1112, %v1121
    %v1124 = vunpack.c.l.s4 1966171168
    %v1125 = vunpack.c.0.s8 %v1124
    %v1126 = vlaneseq
    %v1127 = vshrl.u32 %v1126, 7
    %v1128 = vsub.s32 %v1125, %v1127
    %v1129 = vrot.slane %v1113, %v1128
    %v1131 = vunpack.c.l.s4 1966171168
    %v1132 = vunpack.c.0.s8 %v1131
    %v1133 = vlaneseq
    %v1134 = vshrl.u32 %v1133, 7
    %v1135 = vsub.s32 %v1132, %v1134
    %v1136 = vrot.slane %v1114, %v1135
    %v1138 = vunpack.c.l.s4 1966171168
    %v1139 = vunpack.c.0.s8 %v1138
    %v1140 = vlaneseq
    %v1141 = vshrl.u32 %v1140, 7
    %v1142 = vsub.s32 %v1139, %v1141
    %v1143 = vrot.slane %v1115, %v1142
    %v1144 = vcombine.low %v1122, %v1129
    %v1145 = vcombine.low %v1136, %v1143
    %v1147 = vunpack.c.l.s4 1966171168
    %v1148 = vunpack.c.0.s8 %v1147
    %v1149 = vlaneseq
    %v1150 = vshrl.u32 %v1149, 7
    %v1151 = vsub.s32 %v1148, %v1150
    %v1152 = vrot.slane %v1144, %v1151
    %v1154 = vunpack.c.l.s4 1966171168
    %v1155 = vunpack.c.0.s8 %v1154
    %v1156 = vlaneseq
    %v1157 = vshrl.u32 %v1156, 7
    %v1158 = vsub.s32 %v1155, %v1157
    %v1159 = vrot.slane %v1145, %v1158
    %v1160 = vcombine.low %v1152, %v1159
    %v1161 = vcombine.low %v1100, %v1101
    %v1163 = vunpack.c.l.s4 1966171168
    %v1164 = vunpack.c.0.s8 %v1163
    %v1165 = vlaneseq
    %v1166 = vshrl.u32 %v1165, 7
    %v1167 = vsub.s32 %v1164, %v1166
    %v1168 = vrot.slane %v1161, %v1167
    %v1170 = vunpack.c.l.s4 1966171168
    %v1171 = vunpack.c.0.s8 %v1170
    %v1172 = vlaneseq
    %v1173 = vshrl.u32 %v1172, 7
    %v1174 = vsub.s32 %v1171, %v1173
    %v1175 = vrot.slane %v1168, %v1174
    %v1178 = vsel %vm533, %v1160, 0.0
    %1179 = vadd.xlane.f32.xlu0 %v1178
    %v1180 = vpop.xlane.xlu0 %1179
    %v1181 = vsel %vm537, %v1175, 0.0
    %1182 = vadd.xlane.f32.xlu0 %v1181
    %v1183 = vpop.xlane.xlu0 %1182
    %v1184 = vmul.f32 %v1180, %v541
    %v1185 = vmul.f32 %v1183, %v541
    %v1186 = vadd.f32 %v1184, 1e-05
    %v1187 = vadd.f32 %v1185, 1e-05
    %v1188 = vrsqrt.pop %v1186
    %v1189 = vrsqrt.pop %v1187
    %v1192 = vlaneseq
    %v1193 = vshrl.u32 %v1192, 7
    %v1194 = vsub.s32 0, %v1193
    %v1195 = vrot.slane %v1188, %v1194
    %v1196 = vlaneseq
    %v1197 = vshrl.u32 %v1196, 7
    %v1198 = vsub.s32 1, %v1197
    %v1199 = vrot.slane %v1188, %v1198
    %v1200 = vlaneseq
    %v1201 = vshrl.u32 %v1200, 7
    %v1202 = vsub.s32 2, %v1201
    %v1203 = vrot.slane %v1188, %v1202
    %v1204 = vlaneseq
    %v1205 = vshrl.u32 %v1204, 7
    %v1206 = vsub.s32 3, %v1205
    %v1207 = vrot.slane %v1188, %v1206
    %v1208 = vlaneseq
    %v1209 = vshrl.u32 %v1208, 7
    %v1210 = vsub.s32 4, %v1209
    %v1211 = vrot.slane %v1188, %v1210
    %v1212 = vlaneseq
    %v1213 = vshrl.u32 %v1212, 7
    %v1214 = vsub.s32 5, %v1213
    %v1215 = vrot.slane %v1188, %v1214
    %v1216 = vlaneseq
    %v1217 = vshrl.u32 %v1216, 7
    %v1218 = vsub.s32 6, %v1217
    %v1219 = vrot.slane %v1188, %v1218
    %v1220 = vlaneseq
    %v1221 = vshrl.u32 %v1220, 7
    %v1222 = vsub.s32 7, %v1221
    %v1223 = vrot.slane %v1188, %v1222
    %v1224 = vlaneseq
    %v1225 = vshrl.u32 %v1224, 7
    %v1226 = vsub.s32 0, %v1225
    %v1227 = vrot.slane %v1189, %v1226
    %v1228 = vlaneseq
    %v1229 = vshrl.u32 %v1228, 7
    %v1230 = vsub.s32 1, %v1229
    %v1231 = vrot.slane %v1189, %v1230
    %v1242 = vmul.f32 %v1082, %v1195
    %v1243 = vmul.f32 %v1083, %v1199
    %v1244 = vmul.f32 %v1084, %v1203
    %v1245 = vmul.f32 %v1085, %v1207
    %v1246 = vmul.f32 %v1086, %v1211
    %v1247 = vmul.f32 %v1087, %v1215
    %v1248 = vmul.f32 %v1088, %v1219
    %v1249 = vmul.f32 %v1089, %v1223
    %v1250 = vmul.f32 %v1090, %v1227
    %v1251 = vmul.f32 %v1091, %v1231
    %v1253 = vlaneseq
    %v1254 = vshrl.u32 %v1253, 7
    %v1255 = vsub.s32 0, %v1254
    %v1256 = vrot.slane %v910, %v1255
    %v1257 = vcombine.high %v1256, %v1256
    %v1259 = vunpack.c.l.s4 1966171168
    %v1260 = vunpack.c.0.s8 %v1259
    %v1261 = vlaneseq
    %v1262 = vshrl.u32 %v1261, 7
    %v1263 = vsub.s32 %v1260, %v1262
    %v1264 = vrot.slane %v1256, %v1263
    %v1266 = vunpack.c.l.s4 1966171168
    %v1267 = vunpack.c.0.s8 %v1266
    %v1268 = vlaneseq
    %v1269 = vshrl.u32 %v1268, 7
    %v1270 = vsub.s32 %v1267, %v1269
    %v1271 = vrot.slane %v1257, %v1270
    %v1272 = vcombine.high %v1264, %v1264
    %v1273 = vcombine.high %v1271, %v1271
    %v1275 = vunpack.c.l.s4 1966171168
    %v1276 = vunpack.c.0.s8 %v1275
    %v1277 = vlaneseq
    %v1278 = vshrl.u32 %v1277, 7
    %v1279 = vsub.s32 %v1276, %v1278
    %v1280 = vrot.slane %v1264, %v1279
    %v1282 = vunpack.c.l.s4 1966171168
    %v1283 = vunpack.c.0.s8 %v1282
    %v1284 = vlaneseq
    %v1285 = vshrl.u32 %v1284, 7
    %v1286 = vsub.s32 %v1283, %v1285
    %v1287 = vrot.slane %v1271, %v1286
    %v1289 = vunpack.c.l.s4 1966171168
    %v1290 = vunpack.c.0.s8 %v1289
    %v1291 = vlaneseq
    %v1292 = vshrl.u32 %v1291, 7
    %v1293 = vsub.s32 %v1290, %v1292
    %v1294 = vrot.slane %v1272, %v1293
    %v1296 = vunpack.c.l.s4 1966171168
    %v1297 = vunpack.c.0.s8 %v1296
    %v1298 = vlaneseq
    %v1299 = vshrl.u32 %v1298, 7
    %v1300 = vsub.s32 %v1297, %v1299
    %v1301 = vrot.slane %v1273, %v1300
    %v1302 = vcombine.high %v1280, %v1280
    %v1303 = vcombine.high %v1287, %v1287
    %v1304 = vcombine.high %v1294, %v1294
    %v1305 = vcombine.high %v1301, %v1301
    %v1314 = vmul.f32 %v1242, %v1280
    %v1315 = vmul.f32 %v1243, %v1294
    %v1316 = vmul.f32 %v1244, %v1302
    %v1317 = vmul.f32 %v1245, %v1304
    %v1318 = vmul.f32 %v1246, %v1287
    %v1319 = vmul.f32 %v1247, %v1301
    %v1320 = vmul.f32 %v1248, %v1303
    %v1321 = vmul.f32 %v1249, %v1305
    %v1322 = vmul.f32 %v1250, %v1280
    %v1323 = vmul.f32 %v1251, %v1294
    %v1325 = vlaneseq
    %v1326 = vshrl.u32 %v1325, 7
    %v1327 = vsub.s32 0, %v1326
    %v1328 = vrot.slane %v911, %v1327
    %v1329 = vcombine.high %v1328, %v1328
    %v1331 = vunpack.c.l.s4 1966171168
    %v1332 = vunpack.c.0.s8 %v1331
    %v1333 = vlaneseq
    %v1334 = vshrl.u32 %v1333, 7
    %v1335 = vsub.s32 %v1332, %v1334
    %v1336 = vrot.slane %v1328, %v1335
    %v1338 = vunpack.c.l.s4 1966171168
    %v1339 = vunpack.c.0.s8 %v1338
    %v1340 = vlaneseq
    %v1341 = vshrl.u32 %v1340, 7
    %v1342 = vsub.s32 %v1339, %v1341
    %v1343 = vrot.slane %v1329, %v1342
    %v1344 = vcombine.high %v1336, %v1336
    %v1345 = vcombine.high %v1343, %v1343
    %v1347 = vunpack.c.l.s4 1966171168
    %v1348 = vunpack.c.0.s8 %v1347
    %v1349 = vlaneseq
    %v1350 = vshrl.u32 %v1349, 7
    %v1351 = vsub.s32 %v1348, %v1350
    %v1352 = vrot.slane %v1336, %v1351
    %v1354 = vunpack.c.l.s4 1966171168
    %v1355 = vunpack.c.0.s8 %v1354
    %v1356 = vlaneseq
    %v1357 = vshrl.u32 %v1356, 7
    %v1358 = vsub.s32 %v1355, %v1357
    %v1359 = vrot.slane %v1343, %v1358
    %v1361 = vunpack.c.l.s4 1966171168
    %v1362 = vunpack.c.0.s8 %v1361
    %v1363 = vlaneseq
    %v1364 = vshrl.u32 %v1363, 7
    %v1365 = vsub.s32 %v1362, %v1364
    %v1366 = vrot.slane %v1344, %v1365
    %v1368 = vunpack.c.l.s4 1966171168
    %v1369 = vunpack.c.0.s8 %v1368
    %v1370 = vlaneseq
    %v1371 = vshrl.u32 %v1370, 7
    %v1372 = vsub.s32 %v1369, %v1371
    %v1373 = vrot.slane %v1345, %v1372
    %v1374 = vcombine.high %v1352, %v1352
    %v1375 = vcombine.high %v1359, %v1359
    %v1376 = vcombine.high %v1366, %v1366
    %v1377 = vcombine.high %v1373, %v1373
    %v1386 = vadd.f32 %v1314, %v1352
    %v1387 = vadd.f32 %v1315, %v1366
    %v1388 = vadd.f32 %v1316, %v1374
    %v1389 = vadd.f32 %v1317, %v1376
    %v1390 = vadd.f32 %v1318, %v1359
    %v1391 = vadd.f32 %v1319, %v1373
    %v1392 = vadd.f32 %v1320, %v1375
    %v1393 = vadd.f32 %v1321, %v1377
    %v1394 = vadd.f32 %v1322, %v1352
    %v1395 = vadd.f32 %v1323, %v1366
    %v1406 = vcombine.low %v1386, %v1387
    %v1407 = vcombine.low %v1388, %v1389
    %v1408 = vcombine.low %v1390, %v1391
    %v1409 = vcombine.low %v1392, %v1393
    %v1411 = vunpack.c.l.s4 1966171168
    %v1412 = vunpack.c.0.s8 %v1411
    %v1413 = vlaneseq
    %v1414 = vshrl.u32 %v1413, 7
    %v1415 = vsub.s32 %v1412, %v1414
    %v1416 = vrot.slane %v1406, %v1415
    %v1418 = vunpack.c.l.s4 1966171168
    %v1419 = vunpack.c.0.s8 %v1418
    %v1420 = vlaneseq
    %v1421 = vshrl.u32 %v1420, 7
    %v1422 = vsub.s32 %v1419, %v1421
    %v1423 = vrot.slane %v1407, %v1422
    %v1425 = vunpack.c.l.s4 1966171168
    %v1426 = vunpack.c.0.s8 %v1425
    %v1427 = vlaneseq
    %v1428 = vshrl.u32 %v1427, 7
    %v1429 = vsub.s32 %v1426, %v1428
    %v1430 = vrot.slane %v1408, %v1429
    %v1432 = vunpack.c.l.s4 1966171168
    %v1433 = vunpack.c.0.s8 %v1432
    %v1434 = vlaneseq
    %v1435 = vshrl.u32 %v1434, 7
    %v1436 = vsub.s32 %v1433, %v1435
    %v1437 = vrot.slane %v1409, %v1436
    %v1438 = vcombine.low %v1416, %v1423
    %v1439 = vcombine.low %v1430, %v1437
    %v1441 = vunpack.c.l.s4 1966171168
    %v1442 = vunpack.c.0.s8 %v1441
    %v1443 = vlaneseq
    %v1444 = vshrl.u32 %v1443, 7
    %v1445 = vsub.s32 %v1442, %v1444
    %v1446 = vrot.slane %v1438, %v1445
    %v1448 = vunpack.c.l.s4 1966171168
    %v1449 = vunpack.c.0.s8 %v1448
    %v1450 = vlaneseq
    %v1451 = vshrl.u32 %v1450, 7
    %v1452 = vsub.s32 %v1449, %v1451
    %v1453 = vrot.slane %v1439, %v1452
    %v1454 = vcombine.low %v1446, %v1453
    %v1455 = vcombine.low %v1394, %v1395
    %v1457 = vunpack.c.l.s4 1966171168
    %v1458 = vunpack.c.0.s8 %v1457
    %v1459 = vlaneseq
    %v1460 = vshrl.u32 %v1459, 7
    %v1461 = vsub.s32 %v1458, %v1460
    %v1462 = vrot.slane %v1455, %v1461
    %v1464 = vunpack.c.l.s4 1966171168
    %v1465 = vunpack.c.0.s8 %v1464
    %v1466 = vlaneseq
    %v1467 = vshrl.u32 %v1466, 7
    %v1468 = vsub.s32 %v1465, %v1467
    %v1469 = vrot.slane %v1462, %v1468
    %v1472 = vpack.c.bf16 %v1469, %v1454
    %v1474 = vlaneseq
    %v1475 = vshrl.u32 %v1474, 7
    %v1476 = vsub.s32 0, %v1475
    %v1477 = vrot.slane %v916, %v1476
    %v1483 = vunpack.c.l.b16 %v912
    %v1484 = vunpack.c.l.b16 %v913
    %v1485 = vunpack.c.l.b16 %v914
    %v1486 = vunpack.c.l.b16 %v915
    %v1487 = vpack.c.b16 %v1484, %v1483
    %v1488 = vpack.c.b16 %v1486, %v1485
    %v1492 = vsel %vm533, %v1472, 0
    %1494 = vmatprep.subr.bf16.mxu0 0
    %1495 = vmatpush1.bf16.msra.mxu0 0
    %1496 = vmatprep.subr.bf16.mxu0 0
    %1497 = vmatpush1.bf16.msra.mxu0 0
    %1498 = vmatprep.subr.bf16.mxu0 0
    %1499 = vmatpush1.bf16.msra.mxu0 0
    %1500 = vmatprep.subr.bf16.mxu0 0
    %1501 = vmatpush1.bf16.msra.mxu0 0
    %1502 = vmatprep.subr.bf16.mxu0 0
    %1503 = vmatpush1.bf16.msra.mxu0 0
    %1504 = vmatprep.subr.bf16.mxu0 0
    %1505 = vmatpush1.bf16.msra.mxu0 0
    %1506 = vmatprep.subr.bf16.mxu0 0
    %1507 = vmatpush1.bf16.msra.mxu0 %v1488
    %1508 = vmatprep.subr.bf16.mxu0 0
    %1509 = vmatpush1.bf16.msra.mxu0 %v1487
    %1510 = vmatprep.subr.bf16.mxu0 0
    %1511 = vmatpush2.bf16.msra.mxu0 0
    %1512 = vmatprep.subr.bf16.mxu0 0
    %1513 = vmatpush2.bf16.msra.mxu0 0
    %1514 = vmatprep.subr.bf16.mxu0 0
    %1515 = vmatpush2.bf16.msra.mxu0 0
    %1516 = vmatprep.subr.bf16.mxu0 0
    %1517 = vmatpush2.bf16.msra.mxu0 0
    %1518 = vmatprep.subr.bf16.mxu0 0
    %1519 = vmatpush2.bf16.msra.mxu0 0
    %1520 = vmatprep.subr.bf16.mxu0 0
    %1521 = vmatpush2.bf16.msra.mxu0 0
    %1522 = vmatprep.subr.bf16.mxu0 0
    %1523 = vmatpush2.bf16.msra.mxu0 0
    %1524 = vmatprep.subr.bf16.mxu0 0
    %1525 = vmatpush2.bf16.msra.mxu0 0
    %1526 = vmatprep.mubr.bf16.mxu0 0
    %1527 = vmatmul.mubr.bf16.gmra.mxu0 %v1492
    %v1528 = vpop.f32.mrf.mxu0
    %v1529 = vadd.f32 %v1477, %v1528
    %v1530 = vpop.f32.mrf.mxu0
    %v1531 = vpop.f32.mrf.mxu0
    %v1532 = vadd.f32 %v1477, %v1531
    %v1533 = vpop.f32.mrf.mxu0
    %1534 = vdwg.mxu0
    %v1537 = vcombine.high %v1529, %v1529
    %v1539 = vunpack.c.l.s4 1966171168
    %v1540 = vunpack.c.0.s8 %v1539
    %v1541 = vlaneseq
    %v1542 = vshrl.u32 %v1541, 7
    %v1543 = vsub.s32 %v1540, %v1542
    %v1544 = vrot.slane %v1529, %v1543
    %v1546 = vunpack.c.l.s4 1966171168
    %v1547 = vunpack.c.0.s8 %v1546
    %v1548 = vlaneseq
    %v1549 = vshrl.u32 %v1548, 7
    %v1550 = vsub.s32 %v1547, %v1549
    %v1551 = vrot.slane %v1537, %v1550
    %v1552 = vcombine.high %v1544, %v1544
    %v1553 = vcombine.high %v1551, %v1551
    %v1555 = vunpack.c.l.s4 1966171168
    %v1556 = vunpack.c.0.s8 %v1555
    %v1557 = vlaneseq
    %v1558 = vshrl.u32 %v1557, 7
    %v1559 = vsub.s32 %v1556, %v1558
    %v1560 = vrot.slane %v1544, %v1559
    %v1562 = vunpack.c.l.s4 1966171168
    %v1563 = vunpack.c.0.s8 %v1562
    %v1564 = vlaneseq
    %v1565 = vshrl.u32 %v1564, 7
    %v1566 = vsub.s32 %v1563, %v1565
    %v1567 = vrot.slane %v1551, %v1566
    %v1569 = vunpack.c.l.s4 1966171168
    %v1570 = vunpack.c.0.s8 %v1569
    %v1571 = vlaneseq
    %v1572 = vshrl.u32 %v1571, 7
    %v1573 = vsub.s32 %v1570, %v1572
    %v1574 = vrot.slane %v1552, %v1573
    %v1576 = vunpack.c.l.s4 1966171168
    %v1577 = vunpack.c.0.s8 %v1576
    %v1578 = vlaneseq
    %v1579 = vshrl.u32 %v1578, 7
    %v1580 = vsub.s32 %v1577, %v1579
    %v1581 = vrot.slane %v1553, %v1580
    %v1582 = vcombine.high %v1560, %v1560
    %v1583 = vcombine.high %v1567, %v1567
    %v1584 = vcombine.high %v1574, %v1574
    %v1585 = vcombine.high %v1581, %v1581
    %v1587 = vunpack.c.l.s4 1966171168
    %v1588 = vunpack.c.0.s8 %v1587
    %v1589 = vlaneseq
    %v1590 = vshrl.u32 %v1589, 7
    %v1591 = vsub.s32 %v1588, %v1590
    %v1592 = vrot.slane %v1532, %v1591
    %v1593 = vcombine.high %v1592, %v1592
    %v1595 = vunpack.c.l.s4 1966171168
    %v1596 = vunpack.c.0.s8 %v1595
    %v1597 = vlaneseq
    %v1598 = vshrl.u32 %v1597, 7
    %v1599 = vsub.s32 %v1596, %v1598
    %v1600 = vrot.slane %v1592, %v1599
    %v1602 = vunpack.c.l.s4 1966171168
    %v1603 = vunpack.c.0.s8 %v1602
    %v1604 = vlaneseq
    %v1605 = vshrl.u32 %v1604, 7
    %v1606 = vsub.s32 %v1603, %v1605
    %v1607 = vrot.slane %v1593, %v1606
    %v1608 = vcombine.low %v1560, %v1574
    %v1609 = vcombine.low %v1582, %v1584
    %v1611 = vunpack.c.l.s4 1966171168
    %v1612 = vunpack.c.0.s8 %v1611
    %v1613 = vlaneseq
    %v1614 = vshrl.u32 %v1613, 7
    %v1615 = vsub.s32 %v1612, %v1614
    %v1616 = vrot.slane %v1608, %v1615
    %v1618 = vunpack.c.l.s4 1966171168
    %v1619 = vunpack.c.0.s8 %v1618
    %v1620 = vlaneseq
    %v1621 = vshrl.u32 %v1620, 7
    %v1622 = vsub.s32 %v1619, %v1621
    %v1623 = vrot.slane %v1609, %v1622
    %v1625 = vunpack.c.l.s4 1966171168
    %v1626 = vunpack.c.0.s8 %v1625
    %v1627 = vlaneseq
    %v1628 = vshrl.u32 %v1627, 7
    %v1629 = vsub.s32 %v1626, %v1628
    %v1630 = vrot.slane %v1567, %v1629
    %v1631 = vcombine.low %v1616, %v1623
    %v1633 = vunpack.c.l.s4 1966171168
    %v1634 = vunpack.c.0.s8 %v1633
    %v1635 = vlaneseq
    %v1636 = vshrl.u32 %v1635, 7
    %v1637 = vsub.s32 %v1634, %v1636
    %v1638 = vrot.slane %v1631, %v1637
    %v1640 = vunpack.c.l.s4 1966171168
    %v1641 = vunpack.c.0.s8 %v1640
    %v1642 = vlaneseq
    %v1643 = vshrl.u32 %v1642, 7
    %v1644 = vsub.s32 %v1641, %v1643
    %v1645 = vrot.slane %v1630, %v1644
    %v1646 = vcombine.low %v1638, %v1645
    %v1647 = vcombine.low %v1581, %v1583
    %v1648 = vcombine.low %v1585, %v1600
    %v1650 = vunpack.c.l.s4 1966171168
    %v1651 = vunpack.c.0.s8 %v1650
    %v1652 = vlaneseq
    %v1653 = vshrl.u32 %v1652, 7
    %v1654 = vsub.s32 %v1651, %v1653
    %v1655 = vrot.slane %v1647, %v1654
    %v1657 = vunpack.c.l.s4 1966171168
    %v1658 = vunpack.c.0.s8 %v1657
    %v1659 = vlaneseq
    %v1660 = vshrl.u32 %v1659, 7
    %v1661 = vsub.s32 %v1658, %v1660
    %v1662 = vrot.slane %v1648, %v1661
    %v1664 = vunpack.c.l.s4 1966171168
    %v1665 = vunpack.c.0.s8 %v1664
    %v1666 = vlaneseq
    %v1667 = vshrl.u32 %v1666, 7
    %v1668 = vsub.s32 %v1665, %v1667
    %v1669 = vrot.slane %v1607, %v1668
    %v1670 = vcombine.low %v1655, %v1662
    %v1672 = vunpack.c.l.s4 1966171168
    %v1673 = vunpack.c.0.s8 %v1672
    %v1674 = vlaneseq
    %v1675 = vshrl.u32 %v1674, 7
    %v1676 = vsub.s32 %v1673, %v1675
    %v1677 = vrot.slane %v1670, %v1676
    %v1679 = vunpack.c.l.s4 1966171168
    %v1680 = vunpack.c.0.s8 %v1679
    %v1681 = vlaneseq
    %v1682 = vshrl.u32 %v1681, 7
    %v1683 = vsub.s32 %v1680, %v1682
    %v1684 = vrot.slane %v1669, %v1683
    %v1685 = vcombine.low %v1677, %v1684
    %v1688 = vpack.c.bf16 %v1646, %v1646
    %v1689 = vpack.c.bf16 %v1685, %v1685
    %1691 = vrot.lane.b32.xlu0 %v1688, 96
    %v1692 = vpop.permute.xlu0 %1691
    %vm1693 = vcmask 130048
    %v1695 = vsel %vm1693, %v1688, 0
    %v1698 = vsel %vm1693, %v1692, 0
    %1700 = vmatprep.subr.bf16.mxu0 0
    %1701 = vmatpush1.bf16.xpose.msra.mxu0 0
    %1702 = vmatprep.subr.bf16.mxu0 0
    %1703 = vmatpush1.bf16.xpose.msra.mxu0 0
    %1704 = vmatprep.subr.bf16.mxu0 0
    %1705 = vmatpush1.bf16.xpose.msra.mxu0 0
    %1706 = vmatprep.subr.bf16.mxu0 0
    %1707 = vmatpush1.bf16.xpose.msra.mxu0 0
    %1708 = vmatprep.subr.bf16.mxu0 0
    %1709 = vmatpush1.bf16.xpose.msra.mxu0 0
    %1710 = vmatprep.subr.bf16.mxu0 0
    %1711 = vmatpush1.bf16.xpose.msra.mxu0 0
    %1712 = vmatprep.subr.bf16.mxu0 0
    %1713 = vmatpush1.bf16.xpose.msra.mxu0 0
    %1714 = vmatprep.subr.bf16.mxu0 0
    %1715 = vmatpush1.bf16.xpose.msra.mxu0 %v1698
    %1716 = vmatprep.subr.bf16.mxu0 0
    %1717 = vmatpush2.bf16.xpose.msra.mxu0 0
    %1718 = vmatprep.subr.bf16.mxu0 0
    %1719 = vmatpush2.bf16.xpose.msra.mxu0 0
    %1720 = vmatprep.subr.bf16.mxu0 0
    %1721 = vmatpush2.bf16.xpose.msra.mxu0 0
    %1722 = vmatprep.subr.bf16.mxu0 0
    %1723 = vmatpush2.bf16.xpose.msra.mxu0 0
    %1724 = vmatprep.subr.bf16.mxu0 0
    %1725 = vmatpush2.bf16.xpose.msra.mxu0 0
    %1726 = vmatprep.subr.bf16.mxu0 0
    %1727 = vmatpush2.bf16.xpose.msra.mxu0 0
    %1728 = vmatprep.subr.bf16.mxu0 0
    %1729 = vmatpush2.bf16.xpose.msra.mxu0 0
    %1730 = vmatprep.subr.bf16.mxu0 0
    %1731 = vmatpush2.bf16.xpose.msra.mxu0 0
    %1732 = vmatprep.mubr.bf16.mxu0 0
    %1733 = vmatmul.mubr.bf16.gmra.mxu0 %v1695
    %v1734 = vpop.f32.mrf.mxu0
    %v1735 = vadd.f32 0.0, %v1734
    %v1736 = vpop.f32.mrf.mxu0
    %v1737 = vpop.f32.mrf.mxu0
    %v1738 = vpop.f32.mrf.mxu0
    %1739 = vdwg.mxu0
    %1741 = vrot.lane.b32.xlu0 %v1689, 96
    %v1742 = vpop.permute.xlu0 %1741
    %v1744 = vsel %vm1693, %v1689, 0
    %v1747 = vsel %vm1693, %v1742, 0
    %1749 = vmatprep.subr.bf16.mxu0 0
    %1750 = vmatpush1.bf16.xpose.msra.mxu0 0
    %1751 = vmatprep.subr.bf16.mxu0 0
    %1752 = vmatpush1.bf16.xpose.msra.mxu0 0
    %1753 = vmatprep.subr.bf16.mxu0 0
    %1754 = vmatpush1.bf16.xpose.msra.mxu0 0
    %1755 = vmatprep.subr.bf16.mxu0 0
    %1756 = vmatpush1.bf16.xpose.msra.mxu0 0
    %1757 = vmatprep.subr.bf16.mxu0 0
    %1758 = vmatpush1.bf16.xpose.msra.mxu0 0
    %1759 = vmatprep.subr.bf16.mxu0 0
    %1760 = vmatpush1.bf16.xpose.msra.mxu0 0
    %1761 = vmatprep.subr.bf16.mxu0 0
    %1762 = vmatpush1.bf16.xpose.msra.mxu0 0
    %1763 = vmatprep.subr.bf16.mxu0 0
    %1764 = vmatpush1.bf16.xpose.msra.mxu0 %v1747
    %1765 = vmatprep.subr.bf16.mxu0 0
    %1766 = vmatpush2.bf16.xpose.msra.mxu0 0
    %1767 = vmatprep.subr.bf16.mxu0 0
    %1768 = vmatpush2.bf16.xpose.msra.mxu0 0
    %1769 = vmatprep.subr.bf16.mxu0 0
    %1770 = vmatpush2.bf16.xpose.msra.mxu0 0
    %1771 = vmatprep.subr.bf16.mxu0 0
    %1772 = vmatpush2.bf16.xpose.msra.mxu0 0
    %1773 = vmatprep.subr.bf16.mxu0 0
    %1774 = vmatpush2.bf16.xpose.msra.mxu0 0
    %1775 = vmatprep.subr.bf16.mxu0 0
    %1776 = vmatpush2.bf16.xpose.msra.mxu0 0
    %1777 = vmatprep.subr.bf16.mxu0 0
    %1778 = vmatpush2.bf16.xpose.msra.mxu0 0
    %1779 = vmatprep.subr.bf16.mxu0 0
    %1780 = vmatpush2.bf16.xpose.msra.mxu0 0
    %1781 = vmatprep.mubr.bf16.mxu0 0
    %1782 = vmatmul.mubr.bf16.gmra.mxu0 %v1744
    %v1783 = vpop.f32.mrf.mxu0
    %v1784 = vadd.f32 0.0, %v1783
    %v1785 = vpop.f32.mrf.mxu0
    %v1786 = vpop.f32.mrf.mxu0
    %v1787 = vpop.f32.mrf.mxu0
    %1788 = vdwg.mxu0
    %v1789 = vmul.f32 %v1735, 0.25
    %v1790 = vmul.f32 %v1784, 0.25
    %vm1791 = vcmask 36864
    %v1792 = vsel %vm1791, %v1789, -inf
    %1793 = vmax.xlane.f32.xlu0 %v1792
    %v1794 = vpop.xlane.xlu0 %1793
    %v1795 = vsel %vm1791, %v1790, -inf
    %1796 = vmax.xlane.f32.xlu0 %v1795
    %v1797 = vpop.xlane.xlu0 %1796
    %v1798 = vsub.f32 %v1789, %v1794
    %v1799 = vsub.f32 %v1790, %v1797
    %v1800 = vmul.f32 %v1798, 1.442695
    %v1801 = vpow.pop %v1800
    %v1802 = vmul.f32 %v1799, 1.442695
    %v1803 = vpow.pop %v1802
    %v1804 = vsel %vm1791, %v1801, 0.0
    %1805 = vadd.xlane.f32.xlu0 %v1804
    %v1806 = vpop.xlane.xlu0 %1805
    %v1807 = vsel %vm1791, %v1803, 0.0
    %1808 = vadd.xlane.f32.xlu0 %v1807
    %v1809 = vpop.xlane.xlu0 %1808
    %v1810 = vrcp.pop %v1806
    %v1811 = vrcp.pop %v1809
    %v1812 = vmul.f32 %v1801, %v1810
    %v1813 = vmul.f32 %v1803, %v1811
    %v1814 = vpack.c.bf16 %v1812, %v1812
    %v1815 = vpack.c.bf16 %v1813, %v1813
    %1816 = vrot.lane.b32.xlu0 %v1688, 64
    %v1817 = vpop.permute.xlu0 %1816
    %vm1818 = vcmask 39936
    %v1820 = vsel %vm1818, %v1814, 0
    %vm1822 = vcmask 1041408
    %vm1823 = vcmask 1042432
    %v1824 = vsel %vm1822, 4294967295, 65535
    %v1825 = vsel %vm1823, %v1824, 0
    %v1827 = vand.u32 %v1817, %v1825
    %1829 = vmatprep.subr.bf16.mxu0 0
    %1830 = vmatpush1.bf16.msra.mxu0 0
    %1831 = vmatprep.subr.bf16.mxu0 0
    %1832 = vmatpush1.bf16.msra.mxu0 0
    %1833 = vmatprep.subr.bf16.mxu0 0
    %1834 = vmatpush1.bf16.msra.mxu0 0
    %1835 = vmatprep.subr.bf16.mxu0 0
    %1836 = vmatpush1.bf16.msra.mxu0 0
    %1837 = vmatprep.subr.bf16.mxu0 0
    %1838 = vmatpush1.bf16.msra.mxu0 0
    %1839 = vmatprep.subr.bf16.mxu0 0
    %1840 = vmatpush1.bf16.msra.mxu0 0
    %1841 = vmatprep.subr.bf16.mxu0 0
    %1842 = vmatpush1.bf16.msra.mxu0 0
    %1843 = vmatprep.subr.bf16.mxu0 0
    %1844 = vmatpush1.bf16.msra.mxu0 %v1827
    %1845 = vmatprep.subr.bf16.mxu0 0
    %1846 = vmatpush2.bf16.msra.mxu0 0
    %1847 = vmatprep.subr.bf16.mxu0 0
    %1848 = vmatpush2.bf16.msra.mxu0 0
    %1849 = vmatprep.subr.bf16.mxu0 0
    %1850 = vmatpush2.bf16.msra.mxu0 0
    %1851 = vmatprep.subr.bf16.mxu0 0
    %1852 = vmatpush2.bf16.msra.mxu0 0
    %1853 = vmatprep.subr.bf16.mxu0 0
    %1854 = vmatpush2.bf16.msra.mxu0 0
    %1855 = vmatprep.subr.bf16.mxu0 0
    %1856 = vmatpush2.bf16.msra.mxu0 0
    %1857 = vmatprep.subr.bf16.mxu0 0
    %1858 = vmatpush2.bf16.msra.mxu0 0
    %1859 = vmatprep.subr.bf16.mxu0 0
    %1860 = vmatpush2.bf16.msra.mxu0 0
    %1861 = vmatprep.mubr.bf16.mxu0 0
    %1862 = vmatmul.mubr.bf16.gmra.mxu0 %v1820
    %v1863 = vpop.f32.mrf.mxu0
    %v1864 = vadd.f32 0.0, %v1863
    %v1865 = vpop.f32.mrf.mxu0
    %v1866 = vpop.f32.mrf.mxu0
    %v1867 = vpop.f32.mrf.mxu0
    %1868 = vdwg.mxu0
    %1869 = vrot.lane.b32.xlu0 %v1689, 64
    %v1870 = vpop.permute.xlu0 %1869
    %v1872 = vsel %vm1818, %v1815, 0
    %v1875 = vand.u32 %v1870, %v1825
    %1877 = vmatprep.subr.bf16.mxu0 0
    %1878 = vmatpush1.bf16.msra.mxu0 0
    %1879 = vmatprep.subr.bf16.mxu0 0
    %1880 = vmatpush1.bf16.msra.mxu0 0
    %1881 = vmatprep.subr.bf16.mxu0 0
    %1882 = vmatpush1.bf16.msra.mxu0 0
    %1883 = vmatprep.subr.bf16.mxu0 0
    %1884 = vmatpush1.bf16.msra.mxu0 0
    %1885 = vmatprep.subr.bf16.mxu0 0
    %1886 = vmatpush1.bf16.msra.mxu0 0
    %1887 = vmatprep.subr.bf16.mxu0 0
    %1888 = vmatpush1.bf16.msra.mxu0 0
    %1889 = vmatprep.subr.bf16.mxu0 0
    %1890 = vmatpush1.bf16.msra.mxu0 0
    %1891 = vmatprep.subr.bf16.mxu0 0
    %1892 = vmatpush1.bf16.msra.mxu0 %v1875
    %1893 = vmatprep.subr.bf16.mxu0 0
    %1894 = vmatpush2.bf16.msra.mxu0 0
    %1895 = vmatprep.subr.bf16.mxu0 0
    %1896 = vmatpush2.bf16.msra.mxu0 0
    %1897 = vmatprep.subr.bf16.mxu0 0
    %1898 = vmatpush2.bf16.msra.mxu0 0
    %1899 = vmatprep.subr.bf16.mxu0 0
    %1900 = vmatpush2.bf16.msra.mxu0 0
    %1901 = vmatprep.subr.bf16.mxu0 0
    %1902 = vmatpush2.bf16.msra.mxu0 0
    %1903 = vmatprep.subr.bf16.mxu0 0
    %1904 = vmatpush2.bf16.msra.mxu0 0
    %1905 = vmatprep.subr.bf16.mxu0 0
    %1906 = vmatpush2.bf16.msra.mxu0 0
    %1907 = vmatprep.subr.bf16.mxu0 0
    %1908 = vmatpush2.bf16.msra.mxu0 0
    %1909 = vmatprep.mubr.bf16.mxu0 0
    %1910 = vmatmul.mubr.bf16.gmra.mxu0 %v1872
    %v1911 = vpop.f32.mrf.mxu0
    %v1912 = vadd.f32 0.0, %v1911
    %v1913 = vpop.f32.mrf.mxu0
    %v1914 = vpop.f32.mrf.mxu0
    %v1915 = vpop.f32.mrf.mxu0
    %1916 = vdwg.mxu0
    %v1919 = vcombine.high %v1864, %v1864
    %v1921 = vunpack.c.l.s4 1966171168
    %v1922 = vunpack.c.0.s8 %v1921
    %v1923 = vlaneseq
    %v1924 = vshrl.u32 %v1923, 7
    %v1925 = vsub.s32 %v1922, %v1924
    %v1926 = vrot.slane %v1864, %v1925
    %v1928 = vunpack.c.l.s4 1966171168
    %v1929 = vunpack.c.0.s8 %v1928
    %v1930 = vlaneseq
    %v1931 = vshrl.u32 %v1930, 7
    %v1932 = vsub.s32 %v1929, %v1931
    %v1933 = vrot.slane %v1919, %v1932
    %v1934 = vcombine.high %v1926, %v1926
    %v1936 = vunpack.c.l.s4 1966171168
    %v1937 = vunpack.c.0.s8 %v1936
    %v1938 = vlaneseq
    %v1939 = vshrl.u32 %v1938, 7
    %v1940 = vsub.s32 %v1937, %v1939
    %v1941 = vrot.slane %v1926, %v1940
    %v1943 = vunpack.c.l.s4 1966171168
    %v1944 = vunpack.c.0.s8 %v1943
    %v1945 = vlaneseq
    %v1946 = vshrl.u32 %v1945, 7
    %v1947 = vsub.s32 %v1944, %v1946
    %v1948 = vrot.slane %v1933, %v1947
    %v1950 = vunpack.c.l.s4 1966171168
    %v1951 = vunpack.c.0.s8 %v1950
    %v1952 = vlaneseq
    %v1953 = vshrl.u32 %v1952, 7
    %v1954 = vsub.s32 %v1951, %v1953
    %v1955 = vrot.slane %v1934, %v1954
    %v1956 = vcombine.high %v1941, %v1941
    %v1957 = vcombine.high %v1955, %v1955
    %v1958 = vcombine.high %v1912, %v1912
    %v1960 = vunpack.c.l.s4 1966171168
    %v1961 = vunpack.c.0.s8 %v1960
    %v1962 = vlaneseq
    %v1963 = vshrl.u32 %v1962, 7
    %v1964 = vsub.s32 %v1961, %v1963
    %v1965 = vrot.slane %v1912, %v1964
    %v1967 = vunpack.c.l.s4 1966171168
    %v1968 = vunpack.c.0.s8 %v1967
    %v1969 = vlaneseq
    %v1970 = vshrl.u32 %v1969, 7
    %v1971 = vsub.s32 %v1968, %v1970
    %v1972 = vrot.slane %v1958, %v1971
    %v1973 = vcombine.high %v1965, %v1965
    %v1975 = vunpack.c.l.s4 1966171168
    %v1976 = vunpack.c.0.s8 %v1975
    %v1977 = vlaneseq
    %v1978 = vshrl.u32 %v1977, 7
    %v1979 = vsub.s32 %v1976, %v1978
    %v1980 = vrot.slane %v1965, %v1979
    %v1982 = vunpack.c.l.s4 1966171168
    %v1983 = vunpack.c.0.s8 %v1982
    %v1984 = vlaneseq
    %v1985 = vshrl.u32 %v1984, 7
    %v1986 = vsub.s32 %v1983, %v1985
    %v1987 = vrot.slane %v1972, %v1986
    %v1989 = vunpack.c.l.s4 1966171168
    %v1990 = vunpack.c.0.s8 %v1989
    %v1991 = vlaneseq
    %v1992 = vshrl.u32 %v1991, 7
    %v1993 = vsub.s32 %v1990, %v1992
    %v1994 = vrot.slane %v1973, %v1993
    %v1995 = vcombine.high %v1980, %v1980
    %v1996 = vcombine.high %v1994, %v1994
    %v1997 = vcombine.low %v1941, %v1955
    %v1998 = vcombine.low %v1956, %v1957
    %v1999 = vcombine.low %v1948, %v1980
    %v2000 = vcombine.low %v1994, %v1995
    %v2002 = vunpack.c.l.s4 1966171168
    %v2003 = vunpack.c.0.s8 %v2002
    %v2004 = vlaneseq
    %v2005 = vshrl.u32 %v2004, 7
    %v2006 = vsub.s32 %v2003, %v2005
    %v2007 = vrot.slane %v1997, %v2006
    %v2009 = vunpack.c.l.s4 1966171168
    %v2010 = vunpack.c.0.s8 %v2009
    %v2011 = vlaneseq
    %v2012 = vshrl.u32 %v2011, 7
    %v2013 = vsub.s32 %v2010, %v2012
    %v2014 = vrot.slane %v1998, %v2013
    %v2016 = vunpack.c.l.s4 1966171168
    %v2017 = vunpack.c.0.s8 %v2016
    %v2018 = vlaneseq
    %v2019 = vshrl.u32 %v2018, 7
    %v2020 = vsub.s32 %v2017, %v2019
    %v2021 = vrot.slane %v1999, %v2020
    %v2023 = vunpack.c.l.s4 1966171168
    %v2024 = vunpack.c.0.s8 %v2023
    %v2025 = vlaneseq
    %v2026 = vshrl.u32 %v2025, 7
    %v2027 = vsub.s32 %v2024, %v2026
    %v2028 = vrot.slane %v2000, %v2027
    %v2029 = vcombine.low %v2007, %v2014
    %v2030 = vcombine.low %v2021, %v2028
    %v2032 = vunpack.c.l.s4 1966171168
    %v2033 = vunpack.c.0.s8 %v2032
    %v2034 = vlaneseq
    %v2035 = vshrl.u32 %v2034, 7
    %v2036 = vsub.s32 %v2033, %v2035
    %v2037 = vrot.slane %v2029, %v2036
    %v2039 = vunpack.c.l.s4 1966171168
    %v2040 = vunpack.c.0.s8 %v2039
    %v2041 = vlaneseq
    %v2042 = vshrl.u32 %v2041, 7
    %v2043 = vsub.s32 %v2040, %v2042
    %v2044 = vrot.slane %v2030, %v2043
    %v2045 = vcombine.low %v2037, %v2044
    %v2046 = vcombine.low %v1996, %v1987
    %v2048 = vunpack.c.l.s4 1966171168
    %v2049 = vunpack.c.0.s8 %v2048
    %v2050 = vlaneseq
    %v2051 = vshrl.u32 %v2050, 7
    %v2052 = vsub.s32 %v2049, %v2051
    %v2053 = vrot.slane %v2046, %v2052
    %v2055 = vunpack.c.l.s4 1966171168
    %v2056 = vunpack.c.0.s8 %v2055
    %v2057 = vlaneseq
    %v2058 = vshrl.u32 %v2057, 7
    %v2059 = vsub.s32 %v2056, %v2058
    %v2060 = vrot.slane %v2053, %v2059
    %v2063 = vpack.c.bf16 %v2060, %v2045
    %2064 = vrot.lane.b32.xlu0 %v1688, 112
    %v2065 = vpop.permute.xlu0 %2064
    %2066 = vrot.lane.b32.xlu0 %v1688, 80
    %v2067 = vpop.permute.xlu0 %2066
    %v2069 = vsel %vm1693, %v2065, 0
    %v2072 = vsel %vm1693, %v2067, 0
    %2074 = vmatprep.subr.bf16.mxu0 0
    %2075 = vmatpush1.bf16.xpose.msra.mxu0 0
    %2076 = vmatprep.subr.bf16.mxu0 0
    %2077 = vmatpush1.bf16.xpose.msra.mxu0 0
    %2078 = vmatprep.subr.bf16.mxu0 0
    %2079 = vmatpush1.bf16.xpose.msra.mxu0 0
    %2080 = vmatprep.subr.bf16.mxu0 0
    %2081 = vmatpush1.bf16.xpose.msra.mxu0 0
    %2082 = vmatprep.subr.bf16.mxu0 0
    %2083 = vmatpush1.bf16.xpose.msra.mxu0 0
    %2084 = vmatprep.subr.bf16.mxu0 0
    %2085 = vmatpush1.bf16.xpose.msra.mxu0 0
    %2086 = vmatprep.subr.bf16.mxu0 0
    %2087 = vmatpush1.bf16.xpose.msra.mxu0 0
    %2088 = vmatprep.subr.bf16.mxu0 0
    %2089 = vmatpush1.bf16.xpose.msra.mxu0 %v2072
    %2090 = vmatprep.subr.bf16.mxu0 0
    %2091 = vmatpush2.bf16.xpose.msra.mxu0 0
    %2092 = vmatprep.subr.bf16.mxu0 0
    %2093 = vmatpush2.bf16.xpose.msra.mxu0 0
    %2094 = vmatprep.subr.bf16.mxu0 0
    %2095 = vmatpush2.bf16.xpose.msra.mxu0 0
    %2096 = vmatprep.subr.bf16.mxu0 0
    %2097 = vmatpush2.bf16.xpose.msra.mxu0 0
    %2098 = vmatprep.subr.bf16.mxu0 0
    %2099 = vmatpush2.bf16.xpose.msra.mxu0 0
    %2100 = vmatprep.subr.bf16.mxu0 0
    %2101 = vmatpush2.bf16.xpose.msra.mxu0 0
    %2102 = vmatprep.subr.bf16.mxu0 0
    %2103 = vmatpush2.bf16.xpose.msra.mxu0 0
    %2104 = vmatprep.subr.bf16.mxu0 0
    %2105 = vmatpush2.bf16.xpose.msra.mxu0 0
    %2106 = vmatprep.mubr.bf16.mxu0 0
    %2107 = vmatmul.mubr.bf16.gmra.mxu0 %v2069
    %v2108 = vpop.f32.mrf.mxu0
    %v2109 = vadd.f32 0.0, %v2108
    %v2110 = vpop.f32.mrf.mxu0
    %v2111 = vpop.f32.mrf.mxu0
    %v2112 = vpop.f32.mrf.mxu0
    %2113 = vdwg.mxu0
    %2114 = vrot.lane.b32.xlu0 %v1689, 112
    %v2115 = vpop.permute.xlu0 %2114
    %2116 = vrot.lane.b32.xlu0 %v1689, 80
    %v2117 = vpop.permute.xlu0 %2116
    %v2119 = vsel %vm1693, %v2115, 0
    %v2122 = vsel %vm1693, %v2117, 0
    %2124 = vmatprep.subr.bf16.mxu0 0
    %2125 = vmatpush1.bf16.xpose.msra.mxu0 0
    %2126 = vmatprep.subr.bf16.mxu0 0
    %2127 = vmatpush1.bf16.xpose.msra.mxu0 0
    %2128 = vmatprep.subr.bf16.mxu0 0
    %2129 = vmatpush1.bf16.xpose.msra.mxu0 0
    %2130 = vmatprep.subr.bf16.mxu0 0
    %2131 = vmatpush1.bf16.xpose.msra.mxu0 0
    %2132 = vmatprep.subr.bf16.mxu0 0
    %2133 = vmatpush1.bf16.xpose.msra.mxu0 0
    %2134 = vmatprep.subr.bf16.mxu0 0
    %2135 = vmatpush1.bf16.xpose.msra.mxu0 0
    %2136 = vmatprep.subr.bf16.mxu0 0
    %2137 = vmatpush1.bf16.xpose.msra.mxu0 0
    %2138 = vmatprep.subr.bf16.mxu0 0
    %2139 = vmatpush1.bf16.xpose.msra.mxu0 %v2122
    %2140 = vmatprep.subr.bf16.mxu0 0
    %2141 = vmatpush2.bf16.xpose.msra.mxu0 0
    %2142 = vmatprep.subr.bf16.mxu0 0
    %2143 = vmatpush2.bf16.xpose.msra.mxu0 0
    %2144 = vmatprep.subr.bf16.mxu0 0
    %2145 = vmatpush2.bf16.xpose.msra.mxu0 0
    %2146 = vmatprep.subr.bf16.mxu0 0
    %2147 = vmatpush2.bf16.xpose.msra.mxu0 0
    %2148 = vmatprep.subr.bf16.mxu0 0
    %2149 = vmatpush2.bf16.xpose.msra.mxu0 0
    %2150 = vmatprep.subr.bf16.mxu0 0
    %2151 = vmatpush2.bf16.xpose.msra.mxu0 0
    %2152 = vmatprep.subr.bf16.mxu0 0
    %2153 = vmatpush2.bf16.xpose.msra.mxu0 0
    %2154 = vmatprep.subr.bf16.mxu0 0
    %2155 = vmatpush2.bf16.xpose.msra.mxu0 0
    %2156 = vmatprep.mubr.bf16.mxu0 0
    %2157 = vmatmul.mubr.bf16.gmra.mxu0 %v2119
    %v2158 = vpop.f32.mrf.mxu0
    %v2159 = vadd.f32 0.0, %v2158
    %v2160 = vpop.f32.mrf.mxu0
    %v2161 = vpop.f32.mrf.mxu0
    %v2162 = vpop.f32.mrf.mxu0
    %2163 = vdwg.mxu0
    %v2164 = vmul.f32 %v2109, 0.25
    %v2165 = vmul.f32 %v2159, 0.25
    %v2166 = vsel %vm1791, %v2164, -inf
    %2167 = vmax.xlane.f32.xlu0 %v2166
    %v2168 = vpop.xlane.xlu0 %2167
    %v2169 = vsel %vm1791, %v2165, -inf
    %2170 = vmax.xlane.f32.xlu0 %v2169
    %v2171 = vpop.xlane.xlu0 %2170
    %v2172 = vsub.f32 %v2164, %v2168
    %v2173 = vsub.f32 %v2165, %v2171
    %v2174 = vmul.f32 %v2172, 1.442695
    %v2175 = vpow.pop %v2174
    %v2176 = vmul.f32 %v2173, 1.442695
    %v2177 = vpow.pop %v2176
    %v2178 = vsel %vm1791, %v2175, 0.0
    %2179 = vadd.xlane.f32.xlu0 %v2178
    %v2180 = vpop.xlane.xlu0 %2179
    %v2181 = vsel %vm1791, %v2177, 0.0
    %2182 = vadd.xlane.f32.xlu0 %v2181
    %v2183 = vpop.xlane.xlu0 %2182
    %v2184 = vrcp.pop %v2180
    %v2185 = vrcp.pop %v2183
    %v2186 = vmul.f32 %v2175, %v2184
    %v2187 = vmul.f32 %v2177, %v2185
    %v2188 = vpack.c.bf16 %v2186, %v2186
    %v2189 = vpack.c.bf16 %v2187, %v2187
    %2190 = vrot.lane.b32.xlu0 %v1688, 48
    %v2191 = vpop.permute.xlu0 %2190
    %v2193 = vsel %vm1818, %v2188, 0
    %v2196 = vand.u32 %v2191, %v1825
    %2198 = vmatprep.subr.bf16.mxu0 0
    %2199 = vmatpush1.bf16.msra.mxu0 0
    %2200 = vmatprep.subr.bf16.mxu0 0
    %2201 = vmatpush1.bf16.msra.mxu0 0
    %2202 = vmatprep.subr.bf16.mxu0 0
    %2203 = vmatpush1.bf16.msra.mxu0 0
    %2204 = vmatprep.subr.bf16.mxu0 0
    %2205 = vmatpush1.bf16.msra.mxu0 0
    %2206 = vmatprep.subr.bf16.mxu0 0
    %2207 = vmatpush1.bf16.msra.mxu0 0
    %2208 = vmatprep.subr.bf16.mxu0 0
    %2209 = vmatpush1.bf16.msra.mxu0 0
    %2210 = vmatprep.subr.bf16.mxu0 0
    %2211 = vmatpush1.bf16.msra.mxu0 0
    %2212 = vmatprep.subr.bf16.mxu0 0
    %2213 = vmatpush1.bf16.msra.mxu0 %v2196
    %2214 = vmatprep.subr.bf16.mxu0 0
    %2215 = vmatpush2.bf16.msra.mxu0 0
    %2216 = vmatprep.subr.bf16.mxu0 0
    %2217 = vmatpush2.bf16.msra.mxu0 0
    %2218 = vmatprep.subr.bf16.mxu0 0
    %2219 = vmatpush2.bf16.msra.mxu0 0
    %2220 = vmatprep.subr.bf16.mxu0 0
    %2221 = vmatpush2.bf16.msra.mxu0 0
    %2222 = vmatprep.subr.bf16.mxu0 0
    %2223 = vmatpush2.bf16.msra.mxu0 0
    %2224 = vmatprep.subr.bf16.mxu0 0
    %2225 = vmatpush2.bf16.msra.mxu0 0
    %2226 = vmatprep.subr.bf16.mxu0 0
    %2227 = vmatpush2.bf16.msra.mxu0 0
    %2228 = vmatprep.subr.bf16.mxu0 0
    %2229 = vmatpush2.bf16.msra.mxu0 0
    %2230 = vmatprep.mubr.bf16.mxu0 0
    %2231 = vmatmul.mubr.bf16.gmra.mxu0 %v2193
    %v2232 = vpop.f32.mrf.mxu0
    %v2233 = vadd.f32 0.0, %v2232
    %v2234 = vpop.f32.mrf.mxu0
    %v2235 = vpop.f32.mrf.mxu0
    %v2236 = vpop.f32.mrf.mxu0
    %2237 = vdwg.mxu0
    %2238 = vrot.lane.b32.xlu0 %v1689, 48
    %v2239 = vpop.permute.xlu0 %2238
    %v2241 = vsel %vm1818, %v2189, 0
    %v2244 = vand.u32 %v2239, %v1825
    %2246 = vmatprep.subr.bf16.mxu0 0
    %2247 = vmatpush1.bf16.msra.mxu0 0
    %2248 = vmatprep.subr.bf16.mxu0 0
    %2249 = vmatpush1.bf16.msra.mxu0 0
    %2250 = vmatprep.subr.bf16.mxu0 0
    %2251 = vmatpush1.bf16.msra.mxu0 0
    %2252 = vmatprep.subr.bf16.mxu0 0
    %2253 = vmatpush1.bf16.msra.mxu0 0
    %2254 = vmatprep.subr.bf16.mxu0 0
    %2255 = vmatpush1.bf16.msra.mxu0 0
    %2256 = vmatprep.subr.bf16.mxu0 0
    %2257 = vmatpush1.bf16.msra.mxu0 0
    %2258 = vmatprep.subr.bf16.mxu0 0
    %2259 = vmatpush1.bf16.msra.mxu0 0
    %2260 = vmatprep.subr.bf16.mxu0 0
    %2261 = vmatpush1.bf16.msra.mxu0 %v2244
    %2262 = vmatprep.subr.bf16.mxu0 0
    %2263 = vmatpush2.bf16.msra.mxu0 0
    %2264 = vmatprep.subr.bf16.mxu0 0
    %2265 = vmatpush2.bf16.msra.mxu0 0
    %2266 = vmatprep.subr.bf16.mxu0 0
    %2267 = vmatpush2.bf16.msra.mxu0 0
    %2268 = vmatprep.subr.bf16.mxu0 0
    %2269 = vmatpush2.bf16.msra.mxu0 0
    %2270 = vmatprep.subr.bf16.mxu0 0
    %2271 = vmatpush2.bf16.msra.mxu0 0
    %2272 = vmatprep.subr.bf16.mxu0 0
    %2273 = vmatpush2.bf16.msra.mxu0 0
    %2274 = vmatprep.subr.bf16.mxu0 0
    %2275 = vmatpush2.bf16.msra.mxu0 0
    %2276 = vmatprep.subr.bf16.mxu0 0
    %2277 = vmatpush2.bf16.msra.mxu0 0
    %2278 = vmatprep.mubr.bf16.mxu0 0
    %2279 = vmatmul.mubr.bf16.gmra.mxu0 %v2241
    %v2280 = vpop.f32.mrf.mxu0
    %v2281 = vadd.f32 0.0, %v2280
    %v2282 = vpop.f32.mrf.mxu0
    %v2283 = vpop.f32.mrf.mxu0
    %v2284 = vpop.f32.mrf.mxu0
    %2285 = vdwg.mxu0
    %v2288 = vcombine.high %v2233, %v2233
    %v2290 = vunpack.c.l.s4 1966171168
    %v2291 = vunpack.c.0.s8 %v2290
    %v2292 = vlaneseq
    %v2293 = vshrl.u32 %v2292, 7
    %v2294 = vsub.s32 %v2291, %v2293
    %v2295 = vrot.slane %v2233, %v2294
    %v2297 = vunpack.c.l.s4 1966171168
    %v2298 = vunpack.c.0.s8 %v2297
    %v2299 = vlaneseq
    %v2300 = vshrl.u32 %v2299, 7
    %v2301 = vsub.s32 %v2298, %v2300
    %v2302 = vrot.slane %v2288, %v2301
    %v2303 = vcombine.high %v2295, %v2295
    %v2305 = vunpack.c.l.s4 1966171168
    %v2306 = vunpack.c.0.s8 %v2305
    %v2307 = vlaneseq
    %v2308 = vshrl.u32 %v2307, 7
    %v2309 = vsub.s32 %v2306, %v2308
    %v2310 = vrot.slane %v2295, %v2309
    %v2312 = vunpack.c.l.s4 1966171168
    %v2313 = vunpack.c.0.s8 %v2312
    %v2314 = vlaneseq
    %v2315 = vshrl.u32 %v2314, 7
    %v2316 = vsub.s32 %v2313, %v2315
    %v2317 = vrot.slane %v2302, %v2316
    %v2319 = vunpack.c.l.s4 1966171168
    %v2320 = vunpack.c.0.s8 %v2319
    %v2321 = vlaneseq
    %v2322 = vshrl.u32 %v2321, 7
    %v2323 = vsub.s32 %v2320, %v2322
    %v2324 = vrot.slane %v2303, %v2323
    %v2325 = vcombine.high %v2310, %v2310
    %v2326 = vcombine.high %v2324, %v2324
    %v2327 = vcombine.high %v2281, %v2281
    %v2329 = vunpack.c.l.s4 1966171168
    %v2330 = vunpack.c.0.s8 %v2329
    %v2331 = vlaneseq
    %v2332 = vshrl.u32 %v2331, 7
    %v2333 = vsub.s32 %v2330, %v2332
    %v2334 = vrot.slane %v2281, %v2333
    %v2336 = vunpack.c.l.s4 1966171168
    %v2337 = vunpack.c.0.s8 %v2336
    %v2338 = vlaneseq
    %v2339 = vshrl.u32 %v2338, 7
    %v2340 = vsub.s32 %v2337, %v2339
    %v2341 = vrot.slane %v2327, %v2340
    %v2342 = vcombine.high %v2334, %v2334
    %v2344 = vunpack.c.l.s4 1966171168
    %v2345 = vunpack.c.0.s8 %v2344
    %v2346 = vlaneseq
    %v2347 = vshrl.u32 %v2346, 7
    %v2348 = vsub.s32 %v2345, %v2347
    %v2349 = vrot.slane %v2334, %v2348
    %v2351 = vunpack.c.l.s4 1966171168
    %v2352 = vunpack.c.0.s8 %v2351
    %v2353 = vlaneseq
    %v2354 = vshrl.u32 %v2353, 7
    %v2355 = vsub.s32 %v2352, %v2354
    %v2356 = vrot.slane %v2341, %v2355
    %v2358 = vunpack.c.l.s4 1966171168
    %v2359 = vunpack.c.0.s8 %v2358
    %v2360 = vlaneseq
    %v2361 = vshrl.u32 %v2360, 7
    %v2362 = vsub.s32 %v2359, %v2361
    %v2363 = vrot.slane %v2342, %v2362
    %v2364 = vcombine.high %v2349, %v2349
    %v2365 = vcombine.high %v2363, %v2363
    %v2366 = vcombine.low %v2310, %v2324
    %v2367 = vcombine.low %v2325, %v2326
    %v2368 = vcombine.low %v2317, %v2349
    %v2369 = vcombine.low %v2363, %v2364
    %v2371 = vunpack.c.l.s4 1966171168
    %v2372 = vunpack.c.0.s8 %v2371
    %v2373 = vlaneseq
    %v2374 = vshrl.u32 %v2373, 7
    %v2375 = vsub.s32 %v2372, %v2374
    %v2376 = vrot.slane %v2366, %v2375
    %v2378 = vunpack.c.l.s4 1966171168
    %v2379 = vunpack.c.0.s8 %v2378
    %v2380 = vlaneseq
    %v2381 = vshrl.u32 %v2380, 7
    %v2382 = vsub.s32 %v2379, %v2381
    %v2383 = vrot.slane %v2367, %v2382
    %v2385 = vunpack.c.l.s4 1966171168
    %v2386 = vunpack.c.0.s8 %v2385
    %v2387 = vlaneseq
    %v2388 = vshrl.u32 %v2387, 7
    %v2389 = vsub.s32 %v2386, %v2388
    %v2390 = vrot.slane %v2368, %v2389
    %v2392 = vunpack.c.l.s4 1966171168
    %v2393 = vunpack.c.0.s8 %v2392
    %v2394 = vlaneseq
    %v2395 = vshrl.u32 %v2394, 7
    %v2396 = vsub.s32 %v2393, %v2395
    %v2397 = vrot.slane %v2369, %v2396
    %v2398 = vcombine.low %v2376, %v2383
    %v2399 = vcombine.low %v2390, %v2397
    %v2401 = vunpack.c.l.s4 1966171168
    %v2402 = vunpack.c.0.s8 %v2401
    %v2403 = vlaneseq
    %v2404 = vshrl.u32 %v2403, 7
    %v2405 = vsub.s32 %v2402, %v2404
    %v2406 = vrot.slane %v2398, %v2405
    %v2408 = vunpack.c.l.s4 1966171168
    %v2409 = vunpack.c.0.s8 %v2408
    %v2410 = vlaneseq
    %v2411 = vshrl.u32 %v2410, 7
    %v2412 = vsub.s32 %v2409, %v2411
    %v2413 = vrot.slane %v2399, %v2412
    %v2414 = vcombine.low %v2406, %v2413
    %v2415 = vcombine.low %v2365, %v2356
    %v2417 = vunpack.c.l.s4 1966171168
    %v2418 = vunpack.c.0.s8 %v2417
    %v2419 = vlaneseq
    %v2420 = vshrl.u32 %v2419, 7
    %v2421 = vsub.s32 %v2418, %v2420
    %v2422 = vrot.slane %v2415, %v2421
    %v2424 = vunpack.c.l.s4 1966171168
    %v2425 = vunpack.c.0.s8 %v2424
    %v2426 = vlaneseq
    %v2427 = vshrl.u32 %v2426, 7
    %v2428 = vsub.s32 %v2425, %v2427
    %v2429 = vrot.slane %v2422, %v2428
    %v2432 = vpack.c.bf16 %v2429, %v2414
    %v2435 = vunpack.c.l.b16 %v919
    %v2436 = vunpack.c.l.b16 %v920
    %v2437 = vpack.c.b16 %v2436, %v2435
    %v2440 = vsel %vm1693, %v2432, 0
    %2442 = vmatprep.subr.bf16.mxu0 0
    %2443 = vmatpush1.bf16.msra.mxu0 0
    %2444 = vmatprep.subr.bf16.mxu0 0
    %2445 = vmatpush1.bf16.msra.mxu0 0
    %2446 = vmatprep.subr.bf16.mxu0 0
    %2447 = vmatpush1.bf16.msra.mxu0 0
    %2448 = vmatprep.subr.bf16.mxu0 0
    %2449 = vmatpush1.bf16.msra.mxu0 0
    %2450 = vmatprep.subr.bf16.mxu0 0
    %2451 = vmatpush1.bf16.msra.mxu0 0
    %2452 = vmatprep.subr.bf16.mxu0 0
    %2453 = vmatpush1.bf16.msra.mxu0 0
    %2454 = vmatprep.subr.bf16.mxu0 0
    %2455 = vmatpush1.bf16.msra.mxu0 0
    %2456 = vmatprep.subr.bf16.mxu0 0
    %2457 = vmatpush1.bf16.msra.mxu0 %v2437
    %2458 = vmatprep.subr.bf16.mxu0 0
    %2459 = vmatpush2.bf16.msra.mxu0 0
    %2460 = vmatprep.subr.bf16.mxu0 0
    %2461 = vmatpush2.bf16.msra.mxu0 0
    %2462 = vmatprep.subr.bf16.mxu0 0
    %2463 = vmatpush2.bf16.msra.mxu0 0
    %2464 = vmatprep.subr.bf16.mxu0 0
    %2465 = vmatpush2.bf16.msra.mxu0 0
    %2466 = vmatprep.subr.bf16.mxu0 0
    %2467 = vmatpush2.bf16.msra.mxu0 0
    %2468 = vmatprep.subr.bf16.mxu0 0
    %2469 = vmatpush2.bf16.msra.mxu0 0
    %2470 = vmatprep.subr.bf16.mxu0 0
    %2471 = vmatpush2.bf16.msra.mxu0 0
    %2472 = vmatprep.subr.bf16.mxu0 0
    %2473 = vmatpush2.bf16.msra.mxu0 0
    %2474 = vmatprep.mubr.bf16.mxu0 0
    %2475 = vmatmul.mubr.bf16.gmra.mxu0 %v2440
    %v2476 = vpop.f32.mrf.mxu0
    %v2477 = vadd.f32 0.0, %v2476
    %v2478 = vpop.f32.mrf.mxu0
    %v2479 = vpop.f32.mrf.mxu0
    %v2480 = vadd.f32 0.0, %v2479
    %v2481 = vpop.f32.mrf.mxu0
    %2482 = vdwg.mxu0
    %v2485 = vunpack.c.l.b16 %v917
    %v2486 = vunpack.c.l.b16 %v918
    %v2487 = vpack.c.b16 %v2486, %v2485
    %v2490 = vsel %vm1693, %v2063, 0
    %2492 = vmatprep.subr.bf16.mxu0 0
    %2493 = vmatpush1.bf16.msra.mxu0 0
    %2494 = vmatprep.subr.bf16.mxu0 0
    %2495 = vmatpush1.bf16.msra.mxu0 0
    %2496 = vmatprep.subr.bf16.mxu0 0
    %2497 = vmatpush1.bf16.msra.mxu0 0
    %2498 = vmatprep.subr.bf16.mxu0 0
    %2499 = vmatpush1.bf16.msra.mxu0 0
    %2500 = vmatprep.subr.bf16.mxu0 0
    %2501 = vmatpush1.bf16.msra.mxu0 0
    %2502 = vmatprep.subr.bf16.mxu0 0
    %2503 = vmatpush1.bf16.msra.mxu0 0
    %2504 = vmatprep.subr.bf16.mxu0 0
    %2505 = vmatpush1.bf16.msra.mxu0 0
    %2506 = vmatprep.subr.bf16.mxu0 0
    %2507 = vmatpush1.bf16.msra.mxu0 %v2487
    %2508 = vmatprep.subr.bf16.mxu0 0
    %2509 = vmatpush2.bf16.msra.mxu0 0
    %2510 = vmatprep.subr.bf16.mxu0 0
    %2511 = vmatpush2.bf16.msra.mxu0 0
    %2512 = vmatprep.subr.bf16.mxu0 0
    %2513 = vmatpush2.bf16.msra.mxu0 0
    %2514 = vmatprep.subr.bf16.mxu0 0
    %2515 = vmatpush2.bf16.msra.mxu0 0
    %2516 = vmatprep.subr.bf16.mxu0 0
    %2517 = vmatpush2.bf16.msra.mxu0 0
    %2518 = vmatprep.subr.bf16.mxu0 0
    %2519 = vmatpush2.bf16.msra.mxu0 0
    %2520 = vmatprep.subr.bf16.mxu0 0
    %2521 = vmatpush2.bf16.msra.mxu0 0
    %2522 = vmatprep.subr.bf16.mxu0 0
    %2523 = vmatpush2.bf16.msra.mxu0 0
    %2524 = vmatprep.mubr.bf16.mxu0 0
    %2525 = vmatmul.mubr.bf16.gmra.mxu0 %v2490
    %v2526 = vpop.f32.mrf.mxu0
    %v2527 = vadd.f32 %v2477, %v2526
    %v2528 = vpop.f32.mrf.mxu0
    %v2529 = vpop.f32.mrf.mxu0
    %v2530 = vadd.f32 %v2480, %v2529
    %v2531 = vpop.f32.mrf.mxu0
    %2532 = vdwg.mxu0
    %v2535 = vcombine.high %v2527, %v2527
    %v2537 = vunpack.c.l.s4 1966171168
    %v2538 = vunpack.c.0.s8 %v2537
    %v2539 = vlaneseq
    %v2540 = vshrl.u32 %v2539, 7
    %v2541 = vsub.s32 %v2538, %v2540
    %v2542 = vrot.slane %v2527, %v2541
    %v2544 = vunpack.c.l.s4 1966171168
    %v2545 = vunpack.c.0.s8 %v2544
    %v2546 = vlaneseq
    %v2547 = vshrl.u32 %v2546, 7
    %v2548 = vsub.s32 %v2545, %v2547
    %v2549 = vrot.slane %v2535, %v2548
    %v2550 = vcombine.high %v2542, %v2542
    %v2551 = vcombine.high %v2549, %v2549
    %v2553 = vunpack.c.l.s4 1966171168
    %v2554 = vunpack.c.0.s8 %v2553
    %v2555 = vlaneseq
    %v2556 = vshrl.u32 %v2555, 7
    %v2557 = vsub.s32 %v2554, %v2556
    %v2558 = vrot.slane %v2542, %v2557
    %v2560 = vunpack.c.l.s4 1966171168
    %v2561 = vunpack.c.0.s8 %v2560
    %v2562 = vlaneseq
    %v2563 = vshrl.u32 %v2562, 7
    %v2564 = vsub.s32 %v2561, %v2563
    %v2565 = vrot.slane %v2549, %v2564
    %v2567 = vunpack.c.l.s4 1966171168
    %v2568 = vunpack.c.0.s8 %v2567
    %v2569 = vlaneseq
    %v2570 = vshrl.u32 %v2569, 7
    %v2571 = vsub.s32 %v2568, %v2570
    %v2572 = vrot.slane %v2550, %v2571
    %v2574 = vunpack.c.l.s4 1966171168
    %v2575 = vunpack.c.0.s8 %v2574
    %v2576 = vlaneseq
    %v2577 = vshrl.u32 %v2576, 7
    %v2578 = vsub.s32 %v2575, %v2577
    %v2579 = vrot.slane %v2551, %v2578
    %v2580 = vcombine.high %v2558, %v2558
    %v2581 = vcombine.high %v2565, %v2565
    %v2582 = vcombine.high %v2572, %v2572
    %v2583 = vcombine.high %v2579, %v2579
    %v2585 = vunpack.c.l.s4 1966171168
    %v2586 = vunpack.c.0.s8 %v2585
    %v2587 = vlaneseq
    %v2588 = vshrl.u32 %v2587, 7
    %v2589 = vsub.s32 %v2586, %v2588
    %v2590 = vrot.slane %v2530, %v2589
    %v2591 = vcombine.high %v2590, %v2590
    %v2593 = vunpack.c.l.s4 1966171168
    %v2594 = vunpack.c.0.s8 %v2593
    %v2595 = vlaneseq
    %v2596 = vshrl.u32 %v2595, 7
    %v2597 = vsub.s32 %v2594, %v2596
    %v2598 = vrot.slane %v2590, %v2597
    %v2600 = vunpack.c.l.s4 1966171168
    %v2601 = vunpack.c.0.s8 %v2600
    %v2602 = vlaneseq
    %v2603 = vshrl.u32 %v2602, 7
    %v2604 = vsub.s32 %v2601, %v2603
    %v2605 = vrot.slane %v2591, %v2604
    %v2616 = vadd.f32 %v900, %v2558
    %v2617 = vadd.f32 %v901, %v2572
    %v2618 = vadd.f32 %v902, %v2580
    %v2619 = vadd.f32 %v903, %v2582
    %v2620 = vadd.f32 %v904, %v2565
    %v2621 = vadd.f32 %v905, %v2579
    %v2622 = vadd.f32 %v906, %v2581
    %v2623 = vadd.f32 %v907, %v2583
    %v2624 = vadd.f32 %v908, %v2598
    %v2625 = vadd.f32 %v909, %v2605
    %v2627 = vlaneseq
    %v2628 = vshrl.u32 %v2627, 7
    %v2629 = vsub.s32 0, %v2628
    %v2630 = vrot.slane %v921, %v2629
    %v2631 = vcombine.high %v2630, %v2630
    %v2633 = vunpack.c.l.s4 1966171168
    %v2634 = vunpack.c.0.s8 %v2633
    %v2635 = vlaneseq
    %v2636 = vshrl.u32 %v2635, 7
    %v2637 = vsub.s32 %v2634, %v2636
    %v2638 = vrot.slane %v2630, %v2637
    %v2640 = vunpack.c.l.s4 1966171168
    %v2641 = vunpack.c.0.s8 %v2640
    %v2642 = vlaneseq
    %v2643 = vshrl.u32 %v2642, 7
    %v2644 = vsub.s32 %v2641, %v2643
    %v2645 = vrot.slane %v2631, %v2644
    %v2646 = vcombine.high %v2638, %v2638
    %v2647 = vcombine.high %v2645, %v2645
    %v2649 = vunpack.c.l.s4 1966171168
    %v2650 = vunpack.c.0.s8 %v2649
    %v2651 = vlaneseq
    %v2652 = vshrl.u32 %v2651, 7
    %v2653 = vsub.s32 %v2650, %v2652
    %v2654 = vrot.slane %v2638, %v2653
    %v2656 = vunpack.c.l.s4 1966171168
    %v2657 = vunpack.c.0.s8 %v2656
    %v2658 = vlaneseq
    %v2659 = vshrl.u32 %v2658, 7
    %v2660 = vsub.s32 %v2657, %v2659
    %v2661 = vrot.slane %v2645, %v2660
    %v2663 = vunpack.c.l.s4 1966171168
    %v2664 = vunpack.c.0.s8 %v2663
    %v2665 = vlaneseq
    %v2666 = vshrl.u32 %v2665, 7
    %v2667 = vsub.s32 %v2664, %v2666
    %v2668 = vrot.slane %v2646, %v2667
    %v2670 = vunpack.c.l.s4 1966171168
    %v2671 = vunpack.c.0.s8 %v2670
    %v2672 = vlaneseq
    %v2673 = vshrl.u32 %v2672, 7
    %v2674 = vsub.s32 %v2671, %v2673
    %v2675 = vrot.slane %v2647, %v2674
    %v2676 = vcombine.high %v2654, %v2654
    %v2677 = vcombine.high %v2661, %v2661
    %v2678 = vcombine.high %v2668, %v2668
    %v2679 = vcombine.high %v2675, %v2675
    %v2688 = vadd.f32 %v2616, %v2654
    %v2689 = vadd.f32 %v2617, %v2668
    %v2690 = vadd.f32 %v2618, %v2676
    %v2691 = vadd.f32 %v2619, %v2678
    %v2692 = vadd.f32 %v2620, %v2661
    %v2693 = vadd.f32 %v2621, %v2675
    %v2694 = vadd.f32 %v2622, %v2677
    %v2695 = vadd.f32 %v2623, %v2679
    %v2696 = vadd.f32 %v2624, %v2654
    %v2697 = vadd.f32 %v2625, %v2668
    %v2708 = vcombine.low %v2688, %v2689
    %v2709 = vcombine.low %v2690, %v2691
    %v2710 = vcombine.low %v2692, %v2693
    %v2711 = vcombine.low %v2694, %v2695
    %v2713 = vunpack.c.l.s4 1966171168
    %v2714 = vunpack.c.0.s8 %v2713
    %v2715 = vlaneseq
    %v2716 = vshrl.u32 %v2715, 7
    %v2717 = vsub.s32 %v2714, %v2716
    %v2718 = vrot.slane %v2708, %v2717
    %v2720 = vunpack.c.l.s4 1966171168
    %v2721 = vunpack.c.0.s8 %v2720
    %v2722 = vlaneseq
    %v2723 = vshrl.u32 %v2722, 7
    %v2724 = vsub.s32 %v2721, %v2723
    %v2725 = vrot.slane %v2709, %v2724
    %v2727 = vunpack.c.l.s4 1966171168
    %v2728 = vunpack.c.0.s8 %v2727
    %v2729 = vlaneseq
    %v2730 = vshrl.u32 %v2729, 7
    %v2731 = vsub.s32 %v2728, %v2730
    %v2732 = vrot.slane %v2710, %v2731
    %v2734 = vunpack.c.l.s4 1966171168
    %v2735 = vunpack.c.0.s8 %v2734
    %v2736 = vlaneseq
    %v2737 = vshrl.u32 %v2736, 7
    %v2738 = vsub.s32 %v2735, %v2737
    %v2739 = vrot.slane %v2711, %v2738
    %v2740 = vcombine.low %v2718, %v2725
    %v2741 = vcombine.low %v2732, %v2739
    %v2743 = vunpack.c.l.s4 1966171168
    %v2744 = vunpack.c.0.s8 %v2743
    %v2745 = vlaneseq
    %v2746 = vshrl.u32 %v2745, 7
    %v2747 = vsub.s32 %v2744, %v2746
    %v2748 = vrot.slane %v2740, %v2747
    %v2750 = vunpack.c.l.s4 1966171168
    %v2751 = vunpack.c.0.s8 %v2750
    %v2752 = vlaneseq
    %v2753 = vshrl.u32 %v2752, 7
    %v2754 = vsub.s32 %v2751, %v2753
    %v2755 = vrot.slane %v2741, %v2754
    %v2756 = vcombine.low %v2748, %v2755
    %v2757 = vcombine.low %v2696, %v2697
    %v2759 = vunpack.c.l.s4 1966171168
    %v2760 = vunpack.c.0.s8 %v2759
    %v2761 = vlaneseq
    %v2762 = vshrl.u32 %v2761, 7
    %v2763 = vsub.s32 %v2760, %v2762
    %v2764 = vrot.slane %v2757, %v2763
    %v2766 = vunpack.c.l.s4 1966171168
    %v2767 = vunpack.c.0.s8 %v2766
    %v2768 = vlaneseq
    %v2769 = vshrl.u32 %v2768, 7
    %v2770 = vsub.s32 %v2767, %v2769
    %v2771 = vrot.slane %v2764, %v2770
    %v2774 = vsel %vm533, %v2756, 0.0
    %2775 = vadd.xlane.f32.xlu0 %v2774
    %v2776 = vpop.xlane.xlu0 %2775
    %v2777 = vsel %vm537, %v2771, 0.0
    %2778 = vadd.xlane.f32.xlu0 %v2777
    %v2779 = vpop.xlane.xlu0 %2778
    %v2780 = vmul.f32 %v2776, %v541
    %v2781 = vmul.f32 %v2779, %v541
    %v2784 = vlaneseq
    %v2785 = vshrl.u32 %v2784, 7
    %v2786 = vsub.s32 0, %v2785
    %v2787 = vrot.slane %v2780, %v2786
    %v2788 = vlaneseq
    %v2789 = vshrl.u32 %v2788, 7
    %v2790 = vsub.s32 1, %v2789
    %v2791 = vrot.slane %v2780, %v2790
    %v2792 = vlaneseq
    %v2793 = vshrl.u32 %v2792, 7
    %v2794 = vsub.s32 2, %v2793
    %v2795 = vrot.slane %v2780, %v2794
    %v2796 = vlaneseq
    %v2797 = vshrl.u32 %v2796, 7
    %v2798 = vsub.s32 3, %v2797
    %v2799 = vrot.slane %v2780, %v2798
    %v2800 = vlaneseq
    %v2801 = vshrl.u32 %v2800, 7
    %v2802 = vsub.s32 4, %v2801
    %v2803 = vrot.slane %v2780, %v2802
    %v2804 = vlaneseq
    %v2805 = vshrl.u32 %v2804, 7
    %v2806 = vsub.s32 5, %v2805
    %v2807 = vrot.slane %v2780, %v2806
    %v2808 = vlaneseq
    %v2809 = vshrl.u32 %v2808, 7
    %v2810 = vsub.s32 6, %v2809
    %v2811 = vrot.slane %v2780, %v2810
    %v2812 = vlaneseq
    %v2813 = vshrl.u32 %v2812, 7
    %v2814 = vsub.s32 7, %v2813
    %v2815 = vrot.slane %v2780, %v2814
    %v2816 = vlaneseq
    %v2817 = vshrl.u32 %v2816, 7
    %v2818 = vsub.s32 0, %v2817
    %v2819 = vrot.slane %v2781, %v2818
    %v2820 = vlaneseq
    %v2821 = vshrl.u32 %v2820, 7
    %v2822 = vsub.s32 1, %v2821
    %v2823 = vrot.slane %v2781, %v2822
    %v2834 = vsub.f32 %v2688, %v2787
    %v2835 = vsub.f32 %v2689, %v2791
    %v2836 = vsub.f32 %v2690, %v2795
    %v2837 = vsub.f32 %v2691, %v2799
    %v2838 = vsub.f32 %v2692, %v2803
    %v2839 = vsub.f32 %v2693, %v2807
    %v2840 = vsub.f32 %v2694, %v2811
    %v2841 = vsub.f32 %v2695, %v2815
    %v2842 = vsub.f32 %v2696, %v2819
    %v2843 = vsub.f32 %v2697, %v2823
    %v2844 = vmul.f32 %v2834, %v2834
    %v2845 = vmul.f32 %v2835, %v2835
    %v2846 = vmul.f32 %v2836, %v2836
    %v2847 = vmul.f32 %v2837, %v2837
    %v2848 = vmul.f32 %v2838, %v2838
    %v2849 = vmul.f32 %v2839, %v2839
    %v2850 = vmul.f32 %v2840, %v2840
    %v2851 = vmul.f32 %v2841, %v2841
    %v2852 = vmul.f32 %v2842, %v2842
    %v2853 = vmul.f32 %v2843, %v2843
    %v2864 = vcombine.low %v2844, %v2845
    %v2865 = vcombine.low %v2846, %v2847
    %v2866 = vcombine.low %v2848, %v2849
    %v2867 = vcombine.low %v2850, %v2851
    %v2869 = vunpack.c.l.s4 1966171168
    %v2870 = vunpack.c.0.s8 %v2869
    %v2871 = vlaneseq
    %v2872 = vshrl.u32 %v2871, 7
    %v2873 = vsub.s32 %v2870, %v2872
    %v2874 = vrot.slane %v2864, %v2873
    %v2876 = vunpack.c.l.s4 1966171168
    %v2877 = vunpack.c.0.s8 %v2876
    %v2878 = vlaneseq
    %v2879 = vshrl.u32 %v2878, 7
    %v2880 = vsub.s32 %v2877, %v2879
    %v2881 = vrot.slane %v2865, %v2880
    %v2883 = vunpack.c.l.s4 1966171168
    %v2884 = vunpack.c.0.s8 %v2883
    %v2885 = vlaneseq
    %v2886 = vshrl.u32 %v2885, 7
    %v2887 = vsub.s32 %v2884, %v2886
    %v2888 = vrot.slane %v2866, %v2887
    %v2890 = vunpack.c.l.s4 1966171168
    %v2891 = vunpack.c.0.s8 %v2890
    %v2892 = vlaneseq
    %v2893 = vshrl.u32 %v2892, 7
    %v2894 = vsub.s32 %v2891, %v2893
    %v2895 = vrot.slane %v2867, %v2894
    %v2896 = vcombine.low %v2874, %v2881
    %v2897 = vcombine.low %v2888, %v2895
    %v2899 = vunpack.c.l.s4 1966171168
    %v2900 = vunpack.c.0.s8 %v2899
    %v2901 = vlaneseq
    %v2902 = vshrl.u32 %v2901, 7
    %v2903 = vsub.s32 %v2900, %v2902
    %v2904 = vrot.slane %v2896, %v2903
    %v2906 = vunpack.c.l.s4 1966171168
    %v2907 = vunpack.c.0.s8 %v2906
    %v2908 = vlaneseq
    %v2909 = vshrl.u32 %v2908, 7
    %v2910 = vsub.s32 %v2907, %v2909
    %v2911 = vrot.slane %v2897, %v2910
    %v2912 = vcombine.low %v2904, %v2911
    %v2913 = vcombine.low %v2852, %v2853
    %v2915 = vunpack.c.l.s4 1966171168
    %v2916 = vunpack.c.0.s8 %v2915
    %v2917 = vlaneseq
    %v2918 = vshrl.u32 %v2917, 7
    %v2919 = vsub.s32 %v2916, %v2918
    %v2920 = vrot.slane %v2913, %v2919
    %v2922 = vunpack.c.l.s4 1966171168
    %v2923 = vunpack.c.0.s8 %v2922
    %v2924 = vlaneseq
    %v2925 = vshrl.u32 %v2924, 7
    %v2926 = vsub.s32 %v2923, %v2925
    %v2927 = vrot.slane %v2920, %v2926
    %v2930 = vsel %vm533, %v2912, 0.0
    %2931 = vadd.xlane.f32.xlu0 %v2930
    %v2932 = vpop.xlane.xlu0 %2931
    %v2933 = vsel %vm537, %v2927, 0.0
    %2934 = vadd.xlane.f32.xlu0 %v2933
    %v2935 = vpop.xlane.xlu0 %2934
    %v2936 = vmul.f32 %v2932, %v541
    %v2937 = vmul.f32 %v2935, %v541
    %v2938 = vadd.f32 %v2936, 1e-05
    %v2939 = vadd.f32 %v2937, 1e-05
    %v2940 = vrsqrt.pop %v2938
    %v2941 = vrsqrt.pop %v2939
    %v2944 = vlaneseq
    %v2945 = vshrl.u32 %v2944, 7
    %v2946 = vsub.s32 0, %v2945
    %v2947 = vrot.slane %v2940, %v2946
    %v2948 = vlaneseq
    %v2949 = vshrl.u32 %v2948, 7
    %v2950 = vsub.s32 1, %v2949
    %v2951 = vrot.slane %v2940, %v2950
    %v2952 = vlaneseq
    %v2953 = vshrl.u32 %v2952, 7
    %v2954 = vsub.s32 2, %v2953
    %v2955 = vrot.slane %v2940, %v2954
    %v2956 = vlaneseq
    %v2957 = vshrl.u32 %v2956, 7
    %v2958 = vsub.s32 3, %v2957
    %v2959 = vrot.slane %v2940, %v2958
    %v2960 = vlaneseq
    %v2961 = vshrl.u32 %v2960, 7
    %v2962 = vsub.s32 4, %v2961
    %v2963 = vrot.slane %v2940, %v2962
    %v2964 = vlaneseq
    %v2965 = vshrl.u32 %v2964, 7
    %v2966 = vsub.s32 5, %v2965
    %v2967 = vrot.slane %v2940, %v2966
    %v2968 = vlaneseq
    %v2969 = vshrl.u32 %v2968, 7
    %v2970 = vsub.s32 6, %v2969
    %v2971 = vrot.slane %v2940, %v2970
    %v2972 = vlaneseq
    %v2973 = vshrl.u32 %v2972, 7
    %v2974 = vsub.s32 7, %v2973
    %v2975 = vrot.slane %v2940, %v2974
    %v2976 = vlaneseq
    %v2977 = vshrl.u32 %v2976, 7
    %v2978 = vsub.s32 0, %v2977
    %v2979 = vrot.slane %v2941, %v2978
    %v2980 = vlaneseq
    %v2981 = vshrl.u32 %v2980, 7
    %v2982 = vsub.s32 1, %v2981
    %v2983 = vrot.slane %v2941, %v2982
    %v2994 = vmul.f32 %v2834, %v2947
    %v2995 = vmul.f32 %v2835, %v2951
    %v2996 = vmul.f32 %v2836, %v2955
    %v2997 = vmul.f32 %v2837, %v2959
    %v2998 = vmul.f32 %v2838, %v2963
    %v2999 = vmul.f32 %v2839, %v2967
    %v3000 = vmul.f32 %v2840, %v2971
    %v3001 = vmul.f32 %v2841, %v2975
    %v3002 = vmul.f32 %v2842, %v2979
    %v3003 = vmul.f32 %v2843, %v2983
    %v3005 = vlaneseq
    %v3006 = vshrl.u32 %v3005, 7
    %v3007 = vsub.s32 0, %v3006
    %v3008 = vrot.slane %v922, %v3007
    %v3009 = vcombine.high %v3008, %v3008
    %v3011 = vunpack.c.l.s4 1966171168
    %v3012 = vunpack.c.0.s8 %v3011
    %v3013 = vlaneseq
    %v3014 = vshrl.u32 %v3013, 7
    %v3015 = vsub.s32 %v3012, %v3014
    %v3016 = vrot.slane %v3008, %v3015
    %v3018 = vunpack.c.l.s4 1966171168
    %v3019 = vunpack.c.0.s8 %v3018
    %v3020 = vlaneseq
    %v3021 = vshrl.u32 %v3020, 7
    %v3022 = vsub.s32 %v3019, %v3021
    %v3023 = vrot.slane %v3009, %v3022
    %v3024 = vcombine.high %v3016, %v3016
    %v3025 = vcombine.high %v3023, %v3023
    %v3027 = vunpack.c.l.s4 1966171168
    %v3028 = vunpack.c.0.s8 %v3027
    %v3029 = vlaneseq
    %v3030 = vshrl.u32 %v3029, 7
    %v3031 = vsub.s32 %v3028, %v3030
    %v3032 = vrot.slane %v3016, %v3031
    %v3034 = vunpack.c.l.s4 1966171168
    %v3035 = vunpack.c.0.s8 %v3034
    %v3036 = vlaneseq
    %v3037 = vshrl.u32 %v3036, 7
    %v3038 = vsub.s32 %v3035, %v3037
    %v3039 = vrot.slane %v3023, %v3038
    %v3041 = vunpack.c.l.s4 1966171168
    %v3042 = vunpack.c.0.s8 %v3041
    %v3043 = vlaneseq
    %v3044 = vshrl.u32 %v3043, 7
    %v3045 = vsub.s32 %v3042, %v3044
    %v3046 = vrot.slane %v3024, %v3045
    %v3048 = vunpack.c.l.s4 1966171168
    %v3049 = vunpack.c.0.s8 %v3048
    %v3050 = vlaneseq
    %v3051 = vshrl.u32 %v3050, 7
    %v3052 = vsub.s32 %v3049, %v3051
    %v3053 = vrot.slane %v3025, %v3052
    %v3054 = vcombine.high %v3032, %v3032
    %v3055 = vcombine.high %v3039, %v3039
    %v3056 = vcombine.high %v3046, %v3046
    %v3057 = vcombine.high %v3053, %v3053
    %v3066 = vmul.f32 %v2994, %v3032
    %v3067 = vmul.f32 %v2995, %v3046
    %v3068 = vmul.f32 %v2996, %v3054
    %v3069 = vmul.f32 %v2997, %v3056
    %v3070 = vmul.f32 %v2998, %v3039
    %v3071 = vmul.f32 %v2999, %v3053
    %v3072 = vmul.f32 %v3000, %v3055
    %v3073 = vmul.f32 %v3001, %v3057
    %v3074 = vmul.f32 %v3002, %v3032
    %v3075 = vmul.f32 %v3003, %v3046
    %v3077 = vlaneseq
    %v3078 = vshrl.u32 %v3077, 7
    %v3079 = vsub.s32 0, %v3078
    %v3080 = vrot.slane %v923, %v3079
    %v3081 = vcombine.high %v3080, %v3080
    %v3083 = vunpack.c.l.s4 1966171168
    %v3084 = vunpack.c.0.s8 %v3083
    %v3085 = vlaneseq
    %v3086 = vshrl.u32 %v3085, 7
    %v3087 = vsub.s32 %v3084, %v3086
    %v3088 = vrot.slane %v3080, %v3087
    %v3090 = vunpack.c.l.s4 1966171168
    %v3091 = vunpack.c.0.s8 %v3090
    %v3092 = vlaneseq
    %v3093 = vshrl.u32 %v3092, 7
    %v3094 = vsub.s32 %v3091, %v3093
    %v3095 = vrot.slane %v3081, %v3094
    %v3096 = vcombine.high %v3088, %v3088
    %v3097 = vcombine.high %v3095, %v3095
    %v3099 = vunpack.c.l.s4 1966171168
    %v3100 = vunpack.c.0.s8 %v3099
    %v3101 = vlaneseq
    %v3102 = vshrl.u32 %v3101, 7
    %v3103 = vsub.s32 %v3100, %v3102
    %v3104 = vrot.slane %v3088, %v3103
    %v3106 = vunpack.c.l.s4 1966171168
    %v3107 = vunpack.c.0.s8 %v3106
    %v3108 = vlaneseq
    %v3109 = vshrl.u32 %v3108, 7
    %v3110 = vsub.s32 %v3107, %v3109
    %v3111 = vrot.slane %v3095, %v3110
    %v3113 = vunpack.c.l.s4 1966171168
    %v3114 = vunpack.c.0.s8 %v3113
    %v3115 = vlaneseq
    %v3116 = vshrl.u32 %v3115, 7
    %v3117 = vsub.s32 %v3114, %v3116
    %v3118 = vrot.slane %v3096, %v3117
    %v3120 = vunpack.c.l.s4 1966171168
    %v3121 = vunpack.c.0.s8 %v3120
    %v3122 = vlaneseq
    %v3123 = vshrl.u32 %v3122, 7
    %v3124 = vsub.s32 %v3121, %v3123
    %v3125 = vrot.slane %v3097, %v3124
    %v3126 = vcombine.high %v3104, %v3104
    %v3127 = vcombine.high %v3111, %v3111
    %v3128 = vcombine.high %v3118, %v3118
    %v3129 = vcombine.high %v3125, %v3125
    %v3138 = vadd.f32 %v3066, %v3104
    %v3139 = vadd.f32 %v3067, %v3118
    %v3140 = vadd.f32 %v3068, %v3126
    %v3141 = vadd.f32 %v3069, %v3128
    %v3142 = vadd.f32 %v3070, %v3111
    %v3143 = vadd.f32 %v3071, %v3125
    %v3144 = vadd.f32 %v3072, %v3127
    %v3145 = vadd.f32 %v3073, %v3129
    %v3146 = vadd.f32 %v3074, %v3104
    %v3147 = vadd.f32 %v3075, %v3118
    %v3158 = vcombine.low %v3138, %v3139
    %v3159 = vcombine.low %v3140, %v3141
    %v3160 = vcombine.low %v3142, %v3143
    %v3161 = vcombine.low %v3144, %v3145
    %v3163 = vunpack.c.l.s4 1966171168
    %v3164 = vunpack.c.0.s8 %v3163
    %v3165 = vlaneseq
    %v3166 = vshrl.u32 %v3165, 7
    %v3167 = vsub.s32 %v3164, %v3166
    %v3168 = vrot.slane %v3158, %v3167
    %v3170 = vunpack.c.l.s4 1966171168
    %v3171 = vunpack.c.0.s8 %v3170
    %v3172 = vlaneseq
    %v3173 = vshrl.u32 %v3172, 7
    %v3174 = vsub.s32 %v3171, %v3173
    %v3175 = vrot.slane %v3159, %v3174
    %v3177 = vunpack.c.l.s4 1966171168
    %v3178 = vunpack.c.0.s8 %v3177
    %v3179 = vlaneseq
    %v3180 = vshrl.u32 %v3179, 7
    %v3181 = vsub.s32 %v3178, %v3180
    %v3182 = vrot.slane %v3160, %v3181
    %v3184 = vunpack.c.l.s4 1966171168
    %v3185 = vunpack.c.0.s8 %v3184
    %v3186 = vlaneseq
    %v3187 = vshrl.u32 %v3186, 7
    %v3188 = vsub.s32 %v3185, %v3187
    %v3189 = vrot.slane %v3161, %v3188
    %v3190 = vcombine.low %v3168, %v3175
    %v3191 = vcombine.low %v3182, %v3189
    %v3193 = vunpack.c.l.s4 1966171168
    %v3194 = vunpack.c.0.s8 %v3193
    %v3195 = vlaneseq
    %v3196 = vshrl.u32 %v3195, 7
    %v3197 = vsub.s32 %v3194, %v3196
    %v3198 = vrot.slane %v3190, %v3197
    %v3200 = vunpack.c.l.s4 1966171168
    %v3201 = vunpack.c.0.s8 %v3200
    %v3202 = vlaneseq
    %v3203 = vshrl.u32 %v3202, 7
    %v3204 = vsub.s32 %v3201, %v3203
    %v3205 = vrot.slane %v3191, %v3204
    %v3206 = vcombine.low %v3198, %v3205
    %v3207 = vcombine.low %v3146, %v3147
    %v3209 = vunpack.c.l.s4 1966171168
    %v3210 = vunpack.c.0.s8 %v3209
    %v3211 = vlaneseq
    %v3212 = vshrl.u32 %v3211, 7
    %v3213 = vsub.s32 %v3210, %v3212
    %v3214 = vrot.slane %v3207, %v3213
    %v3216 = vunpack.c.l.s4 1966171168
    %v3217 = vunpack.c.0.s8 %v3216
    %v3218 = vlaneseq
    %v3219 = vshrl.u32 %v3218, 7
    %v3220 = vsub.s32 %v3217, %v3219
    %v3221 = vrot.slane %v3214, %v3220
    %v3224 = vpack.c.bf16 %v3221, %v3206
    %v3226 = vlaneseq
    %v3227 = vshrl.u32 %v3226, 7
    %v3228 = vsub.s32 0, %v3227
    %v3229 = vrot.slane %v928, %v3228
    %v3235 = vunpack.c.l.b16 %v924
    %v3236 = vunpack.c.l.b16 %v925
    %v3237 = vunpack.c.l.b16 %v926
    %v3238 = vunpack.c.l.b16 %v927
    %v3239 = vpack.c.b16 %v3236, %v3235
    %v3240 = vpack.c.b16 %v3238, %v3237
    %v3244 = vsel %vm533, %v3224, 0
    %3246 = vmatprep.subr.bf16.mxu0 0
    %3247 = vmatpush1.bf16.msra.mxu0 0
    %3248 = vmatprep.subr.bf16.mxu0 0
    %3249 = vmatpush1.bf16.msra.mxu0 0
    %3250 = vmatprep.subr.bf16.mxu0 0
    %3251 = vmatpush1.bf16.msra.mxu0 0
    %3252 = vmatprep.subr.bf16.mxu0 0
    %3253 = vmatpush1.bf16.msra.mxu0 0
    %3254 = vmatprep.subr.bf16.mxu0 0
    %3255 = vmatpush1.bf16.msra.mxu0 0
    %3256 = vmatprep.subr.bf16.mxu0 0
    %3257 = vmatpush1.bf16.msra.mxu0 0
    %3258 = vmatprep.subr.bf16.mxu0 0
    %3259 = vmatpush1.bf16.msra.mxu0 %v3240
    %3260 = vmatprep.subr.bf16.mxu0 0
    %3261 = vmatpush1.bf16.msra.mxu0 %v3239
    %3262 = vmatprep.subr.bf16.mxu0 0
    %3263 = vmatpush2.bf16.msra.mxu0 0
    %3264 = vmatprep.subr.bf16.mxu0 0
    %3265 = vmatpush2.bf16.msra.mxu0 0
    %3266 = vmatprep.subr.bf16.mxu0 0
    %3267 = vmatpush2.bf16.msra.mxu0 0
    %3268 = vmatprep.subr.bf16.mxu0 0
    %3269 = vmatpush2.bf16.msra.mxu0 0
    %3270 = vmatprep.subr.bf16.mxu0 0
    %3271 = vmatpush2.bf16.msra.mxu0 0
    %3272 = vmatprep.subr.bf16.mxu0 0
    %3273 = vmatpush2.bf16.msra.mxu0 0
    %3274 = vmatprep.subr.bf16.mxu0 0
    %3275 = vmatpush2.bf16.msra.mxu0 0
    %3276 = vmatprep.subr.bf16.mxu0 0
    %3277 = vmatpush2.bf16.msra.mxu0 0
    %3278 = vmatprep.mubr.bf16.mxu0 0
    %3279 = vmatmul.mubr.bf16.gmra.mxu0 %v3244
    %v3280 = vpop.f32.mrf.mxu0
    %v3281 = vadd.f32 %v3229, %v3280
    %v3282 = vpop.f32.mrf.mxu0
    %v3283 = vpop.f32.mrf.mxu0
    %v3284 = vadd.f32 %v3229, %v3283
    %v3285 = vpop.f32.mrf.mxu0
    %3286 = vdwg.mxu0
    %v3287 = vmul.f32 %v3281, 1.702
    %v3288 = vmul.f32 %v3284, 1.702
    %v3289 = vxor.u32 %v3287, 2147483648
    %v3290 = vxor.u32 %v3288, 2147483648
    %v3291 = vmul.f32 %v3289, 1.442695
    %v3292 = vpow.pop %v3291
    %v3293 = vmul.f32 %v3290, 1.442695
    %v3294 = vpow.pop %v3293
    %v3295 = vadd.f32 %v3292, 1.0
    %v3296 = vadd.f32 %v3294, 1.0
    %v3297 = vrcp.pop %v3295
    %v3298 = vmul.f32 1.0, %v3297
    %v3299 = vrcp.pop %v3296
    %v3300 = vmul.f32 1.0, %v3299
    %v3301 = vmul.f32 %v3281, %v3298
    %v3302 = vmul.f32 %v3284, %v3300
    %v3303 = vpack.c.bf16 %v3302, %v3301
    %v3305 = vlaneseq
    %v3306 = vshrl.u32 %v3305, 7
    %v3307 = vsub.s32 0, %v3306
    %v3308 = vrot.slane %v945, %v3307
    %v3326 = vunpack.c.l.b16 %v929
    %v3327 = vunpack.c.l.b16 %v930
    %v3328 = vunpack.c.l.b16 %v931
    %v3329 = vunpack.c.l.b16 %v932
    %v3330 = vunpack.c.l.b16 %v933
    %v3331 = vunpack.c.l.b16 %v934
    %v3332 = vunpack.c.l.b16 %v935
    %v3333 = vunpack.c.l.b16 %v936
    %v3334 = vunpack.c.l.b16 %v937
    %v3335 = vunpack.c.l.b16 %v938
    %v3336 = vunpack.c.l.b16 %v939
    %v3337 = vunpack.c.l.b16 %v940
    %v3338 = vunpack.c.l.b16 %v941
    %v3339 = vunpack.c.l.b16 %v942
    %v3340 = vunpack.c.l.b16 %v943
    %v3341 = vunpack.c.l.b16 %v944
    %v3342 = vpack.c.b16 %v3327, %v3326
    %v3343 = vpack.c.b16 %v3329, %v3328
    %v3344 = vpack.c.b16 %v3331, %v3330
    %v3345 = vpack.c.b16 %v3333, %v3332
    %v3346 = vpack.c.b16 %v3335, %v3334
    %v3347 = vpack.c.b16 %v3337, %v3336
    %v3348 = vpack.c.b16 %v3339, %v3338
    %v3349 = vpack.c.b16 %v3341, %v3340
    %3358 = vmatprep.subr.bf16.mxu0 0
    %3359 = vmatpush1.bf16.msra.mxu0 %v3349
    %3360 = vmatprep.subr.bf16.mxu0 0
    %3361 = vmatpush1.bf16.msra.mxu0 %v3348
    %3362 = vmatprep.subr.bf16.mxu0 0
    %3363 = vmatpush1.bf16.msra.mxu0 %v3347
    %3364 = vmatprep.subr.bf16.mxu0 0
    %3365 = vmatpush1.bf16.msra.mxu0 %v3346
    %3366 = vmatprep.subr.bf16.mxu0 0
    %3367 = vmatpush1.bf16.msra.mxu0 %v3345
    %3368 = vmatprep.subr.bf16.mxu0 0
    %3369 = vmatpush1.bf16.msra.mxu0 %v3344
    %3370 = vmatprep.subr.bf16.mxu0 0
    %3371 = vmatpush1.bf16.msra.mxu0 %v3343
    %3372 = vmatprep.subr.bf16.mxu0 0
    %3373 = vmatpush1.bf16.msra.mxu0 %v3342
    %3374 = vmatprep.subr.bf16.mxu0 0
    %3375 = vmatpush2.bf16.msra.mxu0 0
    %3376 = vmatprep.subr.bf16.mxu0 0
    %3377 = vmatpush2.bf16.msra.mxu0 0
    %3378 = vmatprep.subr.bf16.mxu0 0
    %3379 = vmatpush2.bf16.msra.mxu0 0
    %3380 = vmatprep.subr.bf16.mxu0 0
    %3381 = vmatpush2.bf16.msra.mxu0 0
    %3382 = vmatprep.subr.bf16.mxu0 0
    %3383 = vmatpush2.bf16.msra.mxu0 0
    %3384 = vmatprep.subr.bf16.mxu0 0
    %3385 = vmatpush2.bf16.msra.mxu0 0
    %3386 = vmatprep.subr.bf16.mxu0 0
    %3387 = vmatpush2.bf16.msra.mxu0 0
    %3388 = vmatprep.subr.bf16.mxu0 0
    %3389 = vmatpush2.bf16.msra.mxu0 0
    %3390 = vmatprep.mubr.bf16.mxu0 0
    %3391 = vmatmul.mubr.bf16.gmra.mxu0 %v3303
    %v3392 = vpop.f32.mrf.mxu0
    %v3393 = vadd.f32 %v3308, %v3392
    %v3394 = vpop.f32.mrf.mxu0
    %v3395 = vpop.f32.mrf.mxu0
    %v3396 = vpop.f32.mrf.mxu0
    %3397 = vdwg.mxu0
    %v3399 = vcombine.high %v3393, %v3393
    %v3401 = vunpack.c.l.s4 1966171168
    %v3402 = vunpack.c.0.s8 %v3401
    %v3403 = vlaneseq
    %v3404 = vshrl.u32 %v3403, 7
    %v3405 = vsub.s32 %v3402, %v3404
    %v3406 = vrot.slane %v3393, %v3405
    %v3408 = vunpack.c.l.s4 1966171168
    %v3409 = vunpack.c.0.s8 %v3408
    %v3410 = vlaneseq
    %v3411 = vshrl.u32 %v3410, 7
    %v3412 = vsub.s32 %v3409, %v3411
    %v3413 = vrot.slane %v3399, %v3412
    %v3414 = vcombine.high %v3413, %v3413
    %v3416 = vunpack.c.l.s4 1966171168
    %v3417 = vunpack.c.0.s8 %v3416
    %v3418 = vlaneseq
    %v3419 = vshrl.u32 %v3418, 7
    %v3420 = vsub.s32 %v3417, %v3419
    %v3421 = vrot.slane %v3406, %v3420
    %v3423 = vunpack.c.l.s4 1966171168
    %v3424 = vunpack.c.0.s8 %v3423
    %v3425 = vlaneseq
    %v3426 = vshrl.u32 %v3425, 7
    %v3427 = vsub.s32 %v3424, %v3426
    %v3428 = vrot.slane %v3414, %v3427
    %v3431 = vadd.f32 %v2688, %v3421
    %v3432 = vadd.f32 %v2693, %v3428
    %v3433 = vld [vmem:[%s35] sm:$0x1]
    %v3434 = vld [vmem:[%s37] sm:$0x1]
    %v3437 = vcombine.low %v3431, %v3432
    %v3439 = vunpack.c.l.s4 1966171168
    %v3440 = vunpack.c.0.s8 %v3439
    %v3441 = vlaneseq
    %v3442 = vshrl.u32 %v3441, 7
    %v3443 = vsub.s32 %v3440, %v3442
    %v3444 = vrot.slane %v3437, %v3443
    %v3446 = vunpack.c.l.s4 1966171168
    %v3447 = vunpack.c.0.s8 %v3446
    %v3448 = vlaneseq
    %v3449 = vshrl.u32 %v3448, 7
    %v3450 = vsub.s32 %v3447, %v3449
    %v3451 = vrot.slane %v3444, %v3450
    %v3453 = vsel %vm537, %v3451, 0.0
    %3454 = vadd.xlane.f32.xlu0 %v3453
    %v3455 = vpop.xlane.xlu0 %3454
    %v3456 = vmul.f32 %v3455, %v541
    %v3458 = vlaneseq
    %v3459 = vshrl.u32 %v3458, 7
    %v3460 = vsub.s32 0, %v3459
    %v3461 = vrot.slane %v3456, %v3460
    %v3462 = vlaneseq
    %v3463 = vshrl.u32 %v3462, 7
    %v3464 = vsub.s32 1, %v3463
    %v3465 = vrot.slane %v3456, %v3464
    %v3468 = vsub.f32 %v3431, %v3461
    %v3469 = vsub.f32 %v3432, %v3465
    %v3470 = vmul.f32 %v3468, %v3468
    %v3471 = vmul.f32 %v3469, %v3469
    %v3474 = vcombine.low %v3470, %v3471
    %v3476 = vunpack.c.l.s4 1966171168
    %v3477 = vunpack.c.0.s8 %v3476
    %v3478 = vlaneseq
    %v3479 = vshrl.u32 %v3478, 7
    %v3480 = vsub.s32 %v3477, %v3479
    %v3481 = vrot.slane %v3474, %v3480
    %v3483 = vunpack.c.l.s4 1966171168
    %v3484 = vunpack.c.0.s8 %v3483
    %v3485 = vlaneseq
    %v3486 = vshrl.u32 %v3485, 7
    %v3487 = vsub.s32 %v3484, %v3486
    %v3488 = vrot.slane %v3481, %v3487
    %v3490 = vsel %vm537, %v3488, 0.0
    %3491 = vadd.xlane.f32.xlu0 %v3490
    %v3492 = vpop.xlane.xlu0 %3491
    %v3493 = vmul.f32 %v3492, %v541
    %v3494 = vadd.f32 %v3493, 1e-05
    %v3495 = vrsqrt.pop %v3494
    %v3497 = vlaneseq
    %v3498 = vshrl.u32 %v3497, 7
    %v3499 = vsub.s32 0, %v3498
    %v3500 = vrot.slane %v3495, %v3499
    %v3501 = vlaneseq
    %v3502 = vshrl.u32 %v3501, 7
    %v3503 = vsub.s32 1, %v3502
    %v3504 = vrot.slane %v3495, %v3503
    %v3507 = vmul.f32 %v3468, %v3500
    %v3508 = vmul.f32 %v3469, %v3504
    %v3510 = vlaneseq
    %v3511 = vshrl.u32 %v3510, 7
    %v3512 = vsub.s32 0, %v3511
    %v3513 = vrot.slane %v3433, %v3512
    %v3515 = vunpack.c.l.s4 1966171168
    %v3516 = vunpack.c.0.s8 %v3515
    %v3517 = vlaneseq
    %v3518 = vshrl.u32 %v3517, 7
    %v3519 = vsub.s32 %v3516, %v3518
    %v3520 = vrot.slane %v3513, %v3519
    %v3521 = vcombine.high %v3520, %v3520
    %v3523 = vunpack.c.l.s4 1966171168
    %v3524 = vunpack.c.0.s8 %v3523
    %v3525 = vlaneseq
    %v3526 = vshrl.u32 %v3525, 7
    %v3527 = vsub.s32 %v3524, %v3526
    %v3528 = vrot.slane %v3520, %v3527
    %v3530 = vunpack.c.l.s4 1966171168
    %v3531 = vunpack.c.0.s8 %v3530
    %v3532 = vlaneseq
    %v3533 = vshrl.u32 %v3532, 7
    %v3534 = vsub.s32 %v3531, %v3533
    %v3535 = vrot.slane %v3521, %v3534
    %v3538 = vmul.f32 %v3507, %v3528
    %v3539 = vmul.f32 %v3508, %v3535
    %v3541 = vlaneseq
    %v3542 = vshrl.u32 %v3541, 7
    %v3543 = vsub.s32 0, %v3542
    %v3544 = vrot.slane %v3434, %v3543
    %v3546 = vunpack.c.l.s4 1966171168
    %v3547 = vunpack.c.0.s8 %v3546
    %v3548 = vlaneseq
    %v3549 = vshrl.u32 %v3548, 7
    %v3550 = vsub.s32 %v3547, %v3549
    %v3551 = vrot.slane %v3544, %v3550
    %v3552 = vcombine.high %v3551, %v3551
    %v3554 = vunpack.c.l.s4 1966171168
    %v3555 = vunpack.c.0.s8 %v3554
    %v3556 = vlaneseq
    %v3557 = vshrl.u32 %v3556, 7
    %v3558 = vsub.s32 %v3555, %v3557
    %v3559 = vrot.slane %v3551, %v3558
    %v3561 = vunpack.c.l.s4 1966171168
    %v3562 = vunpack.c.0.s8 %v3561
    %v3563 = vlaneseq
    %v3564 = vshrl.u32 %v3563, 7
    %v3565 = vsub.s32 %v3562, %v3564
    %v3566 = vrot.slane %v3552, %v3565
    %v3569 = vadd.f32 %v3538, %v3559
    %v3570 = vadd.f32 %v3539, %v3566
    %v3571 = vpack.c.bf16 %v3569, %v3569
    %v3572 = vpack.c.bf16 %v3570, %v3570
    %v3573 = vld [vmem:[%s39] sm:$0xf]
    %v3574 = vld [vmem:[%s39 + $0x4] sm:$0xf]
    %v3575 = vld [vmem:[%s39 + $0x8] sm:$0xf]
    %v3576 = vld [vmem:[%s39 + $0xc] sm:$0xf]
    %v3579 = vunpack.c.l.b16 %v3571
    %v3580 = vunpack.c.l.b16 %v3572
    %v3581 = vrot.slane %v3580, 7
    %vm3582 = vcmask 1041409
    %v3583 = vsel %vm3582, %v3581, %v3579
    %v3584 = vpack.c.b16 %v3583, %v3583
    %v3589 = vunpack.c.l.b16 %v3573
    %v3590 = vunpack.c.l.b16 %v3574
    %v3591 = vunpack.c.l.b16 %v3575
    %v3592 = vunpack.c.l.b16 %v3576
    %v3593 = vpack.c.b16 %v3590, %v3589
    %v3594 = vpack.c.b16 %v3592, %v3591
    %v3598 = vsel %vm533, %v3584, 0
    %3600 = vmatprep.subr.bf16.mxu0 0
    %3601 = vmatpush1.bf16.msra.mxu0 0
    %3602 = vmatprep.subr.bf16.mxu0 0
    %3603 = vmatpush1.bf16.msra.mxu0 0
    %3604 = vmatprep.subr.bf16.mxu0 0
    %3605 = vmatpush1.bf16.msra.mxu0 0
    %3606 = vmatprep.subr.bf16.mxu0 0
    %3607 = vmatpush1.bf16.msra.mxu0 0
    %3608 = vmatprep.subr.bf16.mxu0 0
    %3609 = vmatpush1.bf16.msra.mxu0 0
    %3610 = vmatprep.subr.bf16.mxu0 0
    %3611 = vmatpush1.bf16.msra.mxu0 0
    %3612 = vmatprep.subr.bf16.mxu0 0
    %3613 = vmatpush1.bf16.msra.mxu0 %v3594
    %3614 = vmatprep.subr.bf16.mxu0 0
    %3615 = vmatpush1.bf16.msra.mxu0 %v3593
    %3616 = vmatprep.subr.bf16.mxu0 0
    %3617 = vmatpush2.bf16.msra.mxu0 0
    %3618 = vmatprep.subr.bf16.mxu0 0
    %3619 = vmatpush2.bf16.msra.mxu0 0
    %3620 = vmatprep.subr.bf16.mxu0 0
    %3621 = vmatpush2.bf16.msra.mxu0 0
    %3622 = vmatprep.subr.bf16.mxu0 0
    %3623 = vmatpush2.bf16.msra.mxu0 0
    %3624 = vmatprep.subr.bf16.mxu0 0
    %3625 = vmatpush2.bf16.msra.mxu0 0
    %3626 = vmatprep.subr.bf16.mxu0 0
    %3627 = vmatpush2.bf16.msra.mxu0 0
    %3628 = vmatprep.subr.bf16.mxu0 0
    %3629 = vmatpush2.bf16.msra.mxu0 0
    %3630 = vmatprep.subr.bf16.mxu0 0
    %3631 = vmatpush2.bf16.msra.mxu0 0
    %3632 = vmatprep.mubr.bf16.mxu0 0
    %3633 = vmatmul.mubr.bf16.gmra.mxu0 %v3598
    %v3634 = vpop.f32.mrf.mxu0
    %v3635 = vadd.f32 0.0, %v3634
    %v3636 = vpop.f32.mrf.mxu0
    %v3637 = vpop.f32.mrf.mxu0
    %v3638 = vpop.f32.mrf.mxu0
    %3639 = vdwg.mxu0
    %v3640 = vld [vmem:[%s41] sm:$0xff]
    %v3641 = vld [vmem:[%s41 + $0x8] sm:$0xff]
    %v3642 = vld [vmem:[%s41 + $0x10] sm:$0xff]
    %v3643 = vld [vmem:[%s43] sm:$0xff]
    %v3644 = vadd.f32 %v3640, %v3643
    %v3645 = vadd.f32 %v3641, %v3643
    %v3646 = vadd.f32 %v3642, %v3643
    %v3647 = vld [vmem:[%s45] sm:$0x1]
    %v3648 = vld [vmem:[%s47] sm:$0x1]
    %v3649 = vld [vmem:[%s49] sm:$0xf]
    %v3650 = vld [vmem:[%s49 + $0x4] sm:$0xf]
    %v3651 = vld [vmem:[%s49 + $0x8] sm:$0xf]
    %v3652 = vld [vmem:[%s49 + $0xc] sm:$0xf]
    %v3653 = vld [vmem:[%s51] sm:$0x1]
    %v3654 = vld [vmem:[%s53] sm:$0xf]
    %v3655 = vld [vmem:[%s53 + $0x4] sm:$0xf]
    %v3656 = vld [vmem:[%s53 + $0x8] sm:$0xf]
    %v3657 = vld [vmem:[%s53 + $0xc] sm:$0xf]
    %v3658 = vld [vmem:[%s55] sm:$0x1]
    %v3659 = vld [vmem:[%s57] sm:$0x1]
    %v3660 = vld [vmem:[%s59] sm:$0x1]
    %v3661 = vld [vmem:[%s61] sm:$0xf]
    %v3662 = vld [vmem:[%s61 + $0x4] sm:$0xf]
    %v3663 = vld [vmem:[%s61 + $0x8] sm:$0xf]
    %v3664 = vld [vmem:[%s61 + $0xc] sm:$0xf]
    %v3665 = vld [vmem:[%s63] sm:$0x1]
    %v3666 = vld [vmem:[%s65] sm:$0xf]
    %v3667 = vld [vmem:[%s65 + $0x4] sm:$0xf]
    %v3668 = vld [vmem:[%s65 + $0x8] sm:$0xf]
    %v3669 = vld [vmem:[%s65 + $0xc] sm:$0xf]
    %v3670 = vld [vmem:[%s65 + $0x10] sm:$0xf]
    %v3671 = vld [vmem:[%s65 + $0x14] sm:$0xf]
    %v3672 = vld [vmem:[%s65 + $0x18] sm:$0xf]
    %v3673 = vld [vmem:[%s65 + $0x1c] sm:$0xf]
    %v3674 = vld [vmem:[%s65 + $0x20] sm:$0xf]
    %v3675 = vld [vmem:[%s65 + $0x24] sm:$0xf]
    %v3676 = vld [vmem:[%s65 + $0x28] sm:$0xf]
    %v3677 = vld [vmem:[%s65 + $0x2c] sm:$0xf]
    %v3678 = vld [vmem:[%s65 + $0x30] sm:$0xf]
    %v3679 = vld [vmem:[%s65 + $0x34] sm:$0xf]
    %v3680 = vld [vmem:[%s65 + $0x38] sm:$0xf]
    %v3681 = vld [vmem:[%s65 + $0x3c] sm:$0xf]
    %v3682 = vld [vmem:[%s67] sm:$0x1]
    %v3683 = vsel %vm533, %v3644, 0.0
    %3684 = vadd.xlane.f32.xlu0 %v3683
    %v3685 = vpop.xlane.xlu0 %3684
    %v3686 = vsel %vm533, %v3645, 0.0
    %3687 = vadd.xlane.f32.xlu0 %v3686
    %v3688 = vpop.xlane.xlu0 %3687
    %v3689 = vsel %vm533, %v3646, 0.0
    %3690 = vadd.xlane.f32.xlu0 %v3689
    %v3691 = vpop.xlane.xlu0 %3690
    %v3692 = vmul.f32 %v3685, %v541
    %v3693 = vmul.f32 %v3688, %v541
    %v3694 = vmul.f32 %v3691, %v541
    %v3695 = vsub.f32 %v3644, %v3692
    %v3696 = vsub.f32 %v3645, %v3693
    %v3697 = vsub.f32 %v3646, %v3694
    %v3698 = vmul.f32 %v3695, %v3695
    %v3699 = vmul.f32 %v3696, %v3696
    %v3700 = vmul.f32 %v3697, %v3697
    %v3701 = vsel %vm533, %v3698, 0.0
    %3702 = vadd.xlane.f32.xlu0 %v3701
    %v3703 = vpop.xlane.xlu0 %3702
    %v3704 = vsel %vm533, %v3699, 0.0
    %3705 = vadd.xlane.f32.xlu0 %v3704
    %v3706 = vpop.xlane.xlu0 %3705
    %v3707 = vsel %vm533, %v3700, 0.0
    %3708 = vadd.xlane.f32.xlu0 %v3707
    %v3709 = vpop.xlane.xlu0 %3708
    %v3710 = vmul.f32 %v3703, %v541
    %v3711 = vmul.f32 %v3706, %v541
    %v3712 = vmul.f32 %v3709, %v541
    %v3713 = vadd.f32 %v3710, 1e-05
    %v3714 = vadd.f32 %v3711, 1e-05
    %v3715 = vadd.f32 %v3712, 1e-05
    %v3716 = vrsqrt.pop %v3713
    %v3717 = vrsqrt.pop %v3714
    %v3718 = vrsqrt.pop %v3715
    %v3719 = vmul.f32 %v3695, %v3716
    %v3720 = vmul.f32 %v3696, %v3717
    %v3721 = vmul.f32 %v3697, %v3718
    %v3723 = vlaneseq
    %v3724 = vshrl.u32 %v3723, 7
    %v3725 = vsub.s32 0, %v3724
    %v3726 = vrot.slane %v3647, %v3725
    %v3728 = vmul.f32 %v3719, %v3726
    %v3729 = vmul.f32 %v3720, %v3726
    %v3730 = vmul.f32 %v3721, %v3726
    %v3732 = vlaneseq
    %v3733 = vshrl.u32 %v3732, 7
    %v3734 = vsub.s32 0, %v3733
    %v3735 = vrot.slane %v3648, %v3734
    %v3737 = vadd.f32 %v3728, %v3735
    %v3738 = vadd.f32 %v3729, %v3735
    %v3739 = vadd.f32 %v3730, %v3735
    %v3740 = vpack.c.bf16 %v3738, %v3737
    %v3741 = vpack.c.bf16 %v3739, %v3739
    %v3743 = vlaneseq
    %v3744 = vshrl.u32 %v3743, 7
    %v3745 = vsub.s32 0, %v3744
    %v3746 = vrot.slane %v3653, %v3745
    %v3752 = vunpack.c.l.b16 %v3649
    %v3753 = vunpack.c.l.b16 %v3650
    %v3754 = vunpack.c.l.b16 %v3651
    %v3755 = vunpack.c.l.b16 %v3652
    %v3756 = vpack.c.b16 %v3753, %v3752
    %v3757 = vpack.c.b16 %v3755, %v3754
    %v3761 = vsel %vm533, %v3740, 0
    %v3764 = vsel %vm533, %v3741, 0
    %3766 = vmatprep.subr.bf16.mxu0 0
    %3767 = vmatpush1.bf16.msra.mxu0 0
    %3768 = vmatprep.subr.bf16.mxu0 0
    %3769 = vmatpush1.bf16.msra.mxu0 0
    %3770 = vmatprep.subr.bf16.mxu0 0
    %3771 = vmatpush1.bf16.msra.mxu0 0
    %3772 = vmatprep.subr.bf16.mxu0 0
    %3773 = vmatpush1.bf16.msra.mxu0 0
    %3774 = vmatprep.subr.bf16.mxu0 0
    %3775 = vmatpush1.bf16.msra.mxu0 0
    %3776 = vmatprep.subr.bf16.mxu0 0
    %3777 = vmatpush1.bf16.msra.mxu0 0
    %3778 = vmatprep.subr.bf16.mxu0 0
    %3779 = vmatpush1.bf16.msra.mxu0 %v3757
    %3780 = vmatprep.subr.bf16.mxu0 0
    %3781 = vmatpush1.bf16.msra.mxu0 %v3756
    %3782 = vmatprep.subr.bf16.mxu0 0
    %3783 = vmatpush2.bf16.msra.mxu0 0
    %3784 = vmatprep.subr.bf16.mxu0 0
    %3785 = vmatpush2.bf16.msra.mxu0 0
    %3786 = vmatprep.subr.bf16.mxu0 0
    %3787 = vmatpush2.bf16.msra.mxu0 0
    %3788 = vmatprep.subr.bf16.mxu0 0
    %3789 = vmatpush2.bf16.msra.mxu0 0
    %3790 = vmatprep.subr.bf16.mxu0 0
    %3791 = vmatpush2.bf16.msra.mxu0 0
    %3792 = vmatprep.subr.bf16.mxu0 0
    %3793 = vmatpush2.bf16.msra.mxu0 0
    %3794 = vmatprep.subr.bf16.mxu0 0
    %3795 = vmatpush2.bf16.msra.mxu0 0
    %3796 = vmatprep.subr.bf16.mxu0 0
    %3797 = vmatpush2.bf16.msra.mxu0 0
    %3798 = vmatprep.mubr.bf16.mxu0 0
    %3799 = vmatmul.mubr.bf16.gmra.mxu0 %v3761
    %v3800 = vpop.f32.mrf.mxu0
    %v3801 = vadd.f32 %v3746, %v3800
    %v3802 = vpop.f32.mrf.mxu0
    %v3803 = vpop.f32.mrf.mxu0
    %v3804 = vadd.f32 %v3746, %v3803
    %v3805 = vpop.f32.mrf.mxu0
    %3806 = vmatprep.mubr.bf16.mxu0 0
    %3807 = vmatmul.mubr.bf16.gmra.mxu0 %v3764
    %v3808 = vpop.f32.mrf.mxu0
    %v3809 = vadd.f32 %v3746, %v3808
    %v3810 = vpop.f32.mrf.mxu0
    %v3811 = vpop.f32.mrf.mxu0
    %v3812 = vpop.f32.mrf.mxu0
    %3813 = vdwg.mxu0
    %v3814 = vlaneseq
    %v3815 = vshrl.u32 %v3814, 7
    %v3816 = vlaneseq
    %v3817 = vand.u32 %v3816, 127
    %vm3818 = vcmp.le.s32.totalorder %v3817, %v3815
    %v3819 = vsel %vm3818, 0.0, -1e+30
    %v3820 = vpack.c.bf16 %v3801, %v3801
    %v3821 = vpack.c.bf16 %v3804, %v3804
    %v3822 = vpack.c.bf16 %v3809, %v3809
    %3824 = vrot.lane.b32.xlu0 %v3820, 96
    %v3825 = vpop.permute.xlu0 %3824
    %v3827 = vsel %vm1693, %v3820, 0
    %v3830 = vsel %vm1693, %v3825, 0
    %3832 = vmatprep.subr.bf16.mxu0 0
    %3833 = vmatpush1.bf16.xpose.msra.mxu0 0
    %3834 = vmatprep.subr.bf16.mxu0 0
    %3835 = vmatpush1.bf16.xpose.msra.mxu0 0
    %3836 = vmatprep.subr.bf16.mxu0 0
    %3837 = vmatpush1.bf16.xpose.msra.mxu0 0
    %3838 = vmatprep.subr.bf16.mxu0 0
    %3839 = vmatpush1.bf16.xpose.msra.mxu0 0
    %3840 = vmatprep.subr.bf16.mxu0 0
    %3841 = vmatpush1.bf16.xpose.msra.mxu0 0
    %3842 = vmatprep.subr.bf16.mxu0 0
    %3843 = vmatpush1.bf16.xpose.msra.mxu0 0
    %3844 = vmatprep.subr.bf16.mxu0 0
    %3845 = vmatpush1.bf16.xpose.msra.mxu0 0
    %3846 = vmatprep.subr.bf16.mxu0 0
    %3847 = vmatpush1.bf16.xpose.msra.mxu0 %v3830
    %3848 = vmatprep.subr.bf16.mxu0 0
    %3849 = vmatpush2.bf16.xpose.msra.mxu0 0
    %3850 = vmatprep.subr.bf16.mxu0 0
    %3851 = vmatpush2.bf16.xpose.msra.mxu0 0
    %3852 = vmatprep.subr.bf16.mxu0 0
    %3853 = vmatpush2.bf16.xpose.msra.mxu0 0
    %3854 = vmatprep.subr.bf16.mxu0 0
    %3855 = vmatpush2.bf16.xpose.msra.mxu0 0
    %3856 = vmatprep.subr.bf16.mxu0 0
    %3857 = vmatpush2.bf16.xpose.msra.mxu0 0
    %3858 = vmatprep.subr.bf16.mxu0 0
    %3859 = vmatpush2.bf16.xpose.msra.mxu0 0
    %3860 = vmatprep.subr.bf16.mxu0 0
    %3861 = vmatpush2.bf16.xpose.msra.mxu0 0
    %3862 = vmatprep.subr.bf16.mxu0 0
    %3863 = vmatpush2.bf16.xpose.msra.mxu0 0
    %3864 = vmatprep.mubr.bf16.mxu0 0
    %3865 = vmatmul.mubr.bf16.gmra.mxu0 %v3827
    %v3866 = vpop.f32.mrf.mxu0
    %v3867 = vadd.f32 0.0, %v3866
    %v3868 = vpop.f32.mrf.mxu0
    %v3869 = vpop.f32.mrf.mxu0
    %v3870 = vpop.f32.mrf.mxu0
    %3871 = vdwg.mxu0
    %3873 = vrot.lane.b32.xlu0 %v3821, 96
    %v3874 = vpop.permute.xlu0 %3873
    %v3876 = vsel %vm1693, %v3821, 0
    %v3879 = vsel %vm1693, %v3874, 0
    %3881 = vmatprep.subr.bf16.mxu0 0
    %3882 = vmatpush1.bf16.xpose.msra.mxu0 0
    %3883 = vmatprep.subr.bf16.mxu0 0
    %3884 = vmatpush1.bf16.xpose.msra.mxu0 0
    %3885 = vmatprep.subr.bf16.mxu0 0
    %3886 = vmatpush1.bf16.xpose.msra.mxu0 0
    %3887 = vmatprep.subr.bf16.mxu0 0
    %3888 = vmatpush1.bf16.xpose.msra.mxu0 0
    %3889 = vmatprep.subr.bf16.mxu0 0
    %3890 = vmatpush1.bf16.xpose.msra.mxu0 0
    %3891 = vmatprep.subr.bf16.mxu0 0
    %3892 = vmatpush1.bf16.xpose.msra.mxu0 0
    %3893 = vmatprep.subr.bf16.mxu0 0
    %3894 = vmatpush1.bf16.xpose.msra.mxu0 0
    %3895 = vmatprep.subr.bf16.mxu0 0
    %3896 = vmatpush1.bf16.xpose.msra.mxu0 %v3879
    %3897 = vmatprep.subr.bf16.mxu0 0
    %3898 = vmatpush2.bf16.xpose.msra.mxu0 0
    %3899 = vmatprep.subr.bf16.mxu0 0
    %3900 = vmatpush2.bf16.xpose.msra.mxu0 0
    %3901 = vmatprep.subr.bf16.mxu0 0
    %3902 = vmatpush2.bf16.xpose.msra.mxu0 0
    %3903 = vmatprep.subr.bf16.mxu0 0
    %3904 = vmatpush2.bf16.xpose.msra.mxu0 0
    %3905 = vmatprep.subr.bf16.mxu0 0
    %3906 = vmatpush2.bf16.xpose.msra.mxu0 0
    %3907 = vmatprep.subr.bf16.mxu0 0
    %3908 = vmatpush2.bf16.xpose.msra.mxu0 0
    %3909 = vmatprep.subr.bf16.mxu0 0
    %3910 = vmatpush2.bf16.xpose.msra.mxu0 0
    %3911 = vmatprep.subr.bf16.mxu0 0
    %3912 = vmatpush2.bf16.xpose.msra.mxu0 0
    %3913 = vmatprep.mubr.bf16.mxu0 0
    %3914 = vmatmul.mubr.bf16.gmra.mxu0 %v3876
    %v3915 = vpop.f32.mrf.mxu0
    %v3916 = vadd.f32 0.0, %v3915
    %v3917 = vpop.f32.mrf.mxu0
    %v3918 = vpop.f32.mrf.mxu0
    %v3919 = vpop.f32.mrf.mxu0
    %3920 = vdwg.mxu0
    %3922 = vrot.lane.b32.xlu0 %v3822, 96
    %v3923 = vpop.permute.xlu0 %3922
    %v3925 = vsel %vm1693, %v3822, 0
    %v3928 = vsel %vm1693, %v3923, 0
    %3930 = vmatprep.subr.bf16.mxu0 0
    %3931 = vmatpush1.bf16.xpose.msra.mxu0 0
    %3932 = vmatprep.subr.bf16.mxu0 0
    %3933 = vmatpush1.bf16.xpose.msra.mxu0 0
    %3934 = vmatprep.subr.bf16.mxu0 0
    %3935 = vmatpush1.bf16.xpose.msra.mxu0 0
    %3936 = vmatprep.subr.bf16.mxu0 0
    %3937 = vmatpush1.bf16.xpose.msra.mxu0 0
    %3938 = vmatprep.subr.bf16.mxu0 0
    %3939 = vmatpush1.bf16.xpose.msra.mxu0 0
    %3940 = vmatprep.subr.bf16.mxu0 0
    %3941 = vmatpush1.bf16.xpose.msra.mxu0 0
    %3942 = vmatprep.subr.bf16.mxu0 0
    %3943 = vmatpush1.bf16.xpose.msra.mxu0 0
    %3944 = vmatprep.subr.bf16.mxu0 0
    %3945 = vmatpush1.bf16.xpose.msra.mxu0 %v3928
    %3946 = vmatprep.subr.bf16.mxu0 0
    %3947 = vmatpush2.bf16.xpose.msra.mxu0 0
    %3948 = vmatprep.subr.bf16.mxu0 0
    %3949 = vmatpush2.bf16.xpose.msra.mxu0 0
    %3950 = vmatprep.subr.bf16.mxu0 0
    %3951 = vmatpush2.bf16.xpose.msra.mxu0 0
    %3952 = vmatprep.subr.bf16.mxu0 0
    %3953 = vmatpush2.bf16.xpose.msra.mxu0 0
    %3954 = vmatprep.subr.bf16.mxu0 0
    %3955 = vmatpush2.bf16.xpose.msra.mxu0 0
    %3956 = vmatprep.subr.bf16.mxu0 0
    %3957 = vmatpush2.bf16.xpose.msra.mxu0 0
    %3958 = vmatprep.subr.bf16.mxu0 0
    %3959 = vmatpush2.bf16.xpose.msra.mxu0 0
    %3960 = vmatprep.subr.bf16.mxu0 0
    %3961 = vmatpush2.bf16.xpose.msra.mxu0 0
    %3962 = vmatprep.mubr.bf16.mxu0 0
    %3963 = vmatmul.mubr.bf16.gmra.mxu0 %v3925
    %v3964 = vpop.f32.mrf.mxu0
    %v3965 = vadd.f32 0.0, %v3964
    %v3966 = vpop.f32.mrf.mxu0
    %v3967 = vpop.f32.mrf.mxu0
    %v3968 = vpop.f32.mrf.mxu0
    %3969 = vdwg.mxu0
    %v3970 = vmul.f32 %v3867, 0.25
    %v3971 = vmul.f32 %v3916, 0.25
    %v3972 = vmul.f32 %v3965, 0.25
    %v3973 = vadd.f32 %v3970, %v3819
    %v3974 = vadd.f32 %v3971, %v3819
    %v3975 = vadd.f32 %v3972, %v3819
    %vm3976 = vcmask 64512
    %v3977 = vsel %vm3976, %v3973, -inf
    %3978 = vmax.xlane.f32.xlu0 %v3977
    %v3979 = vpop.xlane.xlu0 %3978
    %v3980 = vsel %vm3976, %v3974, -inf
    %3981 = vmax.xlane.f32.xlu0 %v3980
    %v3982 = vpop.xlane.xlu0 %3981
    %v3983 = vsel %vm3976, %v3975, -inf
    %3984 = vmax.xlane.f32.xlu0 %v3983
    %v3985 = vpop.xlane.xlu0 %3984
    %v3986 = vsub.f32 %v3973, %v3979
    %v3987 = vsub.f32 %v3974, %v3982
    %v3988 = vsub.f32 %v3975, %v3985
    %v3989 = vmul.f32 %v3986, 1.442695
    %v3990 = vpow.pop %v3989
    %v3991 = vmul.f32 %v3987, 1.442695
    %v3992 = vpow.pop %v3991
    %v3993 = vmul.f32 %v3988, 1.442695
    %v3994 = vpow.pop %v3993
    %v3995 = vsel %vm3976, %v3990, 0.0
    %3996 = vadd.xlane.f32.xlu0 %v3995
    %v3997 = vpop.xlane.xlu0 %3996
    %v3998 = vsel %vm3976, %v3992, 0.0
    %3999 = vadd.xlane.f32.xlu0 %v3998
    %v4000 = vpop.xlane.xlu0 %3999
    %v4001 = vsel %vm3976, %v3994, 0.0
    %4002 = vadd.xlane.f32.xlu0 %v4001
    %v4003 = vpop.xlane.xlu0 %4002
    %v4004 = vrcp.pop %v3997
    %v4005 = vrcp.pop %v4000
    %v4006 = vrcp.pop %v4003
    %v4007 = vmul.f32 %v3990, %v4004
    %v4008 = vmul.f32 %v3992, %v4005
    %v4009 = vmul.f32 %v3994, %v4006
    %v4010 = vpack.c.bf16 %v4007, %v4007
    %v4011 = vpack.c.bf16 %v4008, %v4008
    %v4012 = vpack.c.bf16 %v4009, %v4009
    %4013 = vrot.lane.b32.xlu0 %v3820, 64
    %v4014 = vpop.permute.xlu0 %4013
    %v4016 = vsel %vm3976, %v4010, 0
    %vm4018 = vcmask 1043456
    %v4020 = vsel %vm4018, %v4014, 0
    %4022 = vmatprep.subr.bf16.mxu0 0
    %4023 = vmatpush1.bf16.msra.mxu0 0
    %4024 = vmatprep.subr.bf16.mxu0 0
    %4025 = vmatpush1.bf16.msra.mxu0 0
    %4026 = vmatprep.subr.bf16.mxu0 0
    %4027 = vmatpush1.bf16.msra.mxu0 0
    %4028 = vmatprep.subr.bf16.mxu0 0
    %4029 = vmatpush1.bf16.msra.mxu0 0
    %4030 = vmatprep.subr.bf16.mxu0 0
    %4031 = vmatpush1.bf16.msra.mxu0 0
    %4032 = vmatprep.subr.bf16.mxu0 0
    %4033 = vmatpush1.bf16.msra.mxu0 0
    %4034 = vmatprep.subr.bf16.mxu0 0
    %4035 = vmatpush1.bf16.msra.mxu0 0
    %4036 = vmatprep.subr.bf16.mxu0 0
    %4037 = vmatpush1.bf16.msra.mxu0 %v4020
    %4038 = vmatprep.subr.bf16.mxu0 0
    %4039 = vmatpush2.bf16.msra.mxu0 0
    %4040 = vmatprep.subr.bf16.mxu0 0
    %4041 = vmatpush2.bf16.msra.mxu0 0
    %4042 = vmatprep.subr.bf16.mxu0 0
    %4043 = vmatpush2.bf16.msra.mxu0 0
    %4044 = vmatprep.subr.bf16.mxu0 0
    %4045 = vmatpush2.bf16.msra.mxu0 0
    %4046 = vmatprep.subr.bf16.mxu0 0
    %4047 = vmatpush2.bf16.msra.mxu0 0
    %4048 = vmatprep.subr.bf16.mxu0 0
    %4049 = vmatpush2.bf16.msra.mxu0 0
    %4050 = vmatprep.subr.bf16.mxu0 0
    %4051 = vmatpush2.bf16.msra.mxu0 0
    %4052 = vmatprep.subr.bf16.mxu0 0
    %4053 = vmatpush2.bf16.msra.mxu0 0
    %4054 = vmatprep.mubr.bf16.mxu0 0
    %4055 = vmatmul.mubr.bf16.gmra.mxu0 %v4016
    %v4056 = vpop.f32.mrf.mxu0
    %v4057 = vadd.f32 0.0, %v4056
    %v4058 = vpop.f32.mrf.mxu0
    %v4059 = vpop.f32.mrf.mxu0
    %v4060 = vpop.f32.mrf.mxu0
    %4061 = vdwg.mxu0
    %4062 = vrot.lane.b32.xlu0 %v3821, 64
    %v4063 = vpop.permute.xlu0 %4062
    %v4065 = vsel %vm3976, %v4011, 0
    %v4068 = vsel %vm4018, %v4063, 0
    %4070 = vmatprep.subr.bf16.mxu0 0
    %4071 = vmatpush1.bf16.msra.mxu0 0
    %4072 = vmatprep.subr.bf16.mxu0 0
    %4073 = vmatpush1.bf16.msra.mxu0 0
    %4074 = vmatprep.subr.bf16.mxu0 0
    %4075 = vmatpush1.bf16.msra.mxu0 0
    %4076 = vmatprep.subr.bf16.mxu0 0
    %4077 = vmatpush1.bf16.msra.mxu0 0
    %4078 = vmatprep.subr.bf16.mxu0 0
    %4079 = vmatpush1.bf16.msra.mxu0 0
    %4080 = vmatprep.subr.bf16.mxu0 0
    %4081 = vmatpush1.bf16.msra.mxu0 0
    %4082 = vmatprep.subr.bf16.mxu0 0
    %4083 = vmatpush1.bf16.msra.mxu0 0
    %4084 = vmatprep.subr.bf16.mxu0 0
    %4085 = vmatpush1.bf16.msra.mxu0 %v4068
    %4086 = vmatprep.subr.bf16.mxu0 0
    %4087 = vmatpush2.bf16.msra.mxu0 0
    %4088 = vmatprep.subr.bf16.mxu0 0
    %4089 = vmatpush2.bf16.msra.mxu0 0
    %4090 = vmatprep.subr.bf16.mxu0 0
    %4091 = vmatpush2.bf16.msra.mxu0 0
    %4092 = vmatprep.subr.bf16.mxu0 0
    %4093 = vmatpush2.bf16.msra.mxu0 0
    %4094 = vmatprep.subr.bf16.mxu0 0
    %4095 = vmatpush2.bf16.msra.mxu0 0
    %4096 = vmatprep.subr.bf16.mxu0 0
    %4097 = vmatpush2.bf16.msra.mxu0 0
    %4098 = vmatprep.subr.bf16.mxu0 0
    %4099 = vmatpush2.bf16.msra.mxu0 0
    %4100 = vmatprep.subr.bf16.mxu0 0
    %4101 = vmatpush2.bf16.msra.mxu0 0
    %4102 = vmatprep.mubr.bf16.mxu0 0
    %4103 = vmatmul.mubr.bf16.gmra.mxu0 %v4065
    %v4104 = vpop.f32.mrf.mxu0
    %v4105 = vadd.f32 0.0, %v4104
    %v4106 = vpop.f32.mrf.mxu0
    %v4107 = vpop.f32.mrf.mxu0
    %v4108 = vpop.f32.mrf.mxu0
    %4109 = vdwg.mxu0
    %4110 = vrot.lane.b32.xlu0 %v3822, 64
    %v4111 = vpop.permute.xlu0 %4110
    %v4113 = vsel %vm3976, %v4012, 0
    %v4116 = vsel %vm4018, %v4111, 0
    %4118 = vmatprep.subr.bf16.mxu0 0
    %4119 = vmatpush1.bf16.msra.mxu0 0
    %4120 = vmatprep.subr.bf16.mxu0 0
    %4121 = vmatpush1.bf16.msra.mxu0 0
    %4122 = vmatprep.subr.bf16.mxu0 0
    %4123 = vmatpush1.bf16.msra.mxu0 0
    %4124 = vmatprep.subr.bf16.mxu0 0
    %4125 = vmatpush1.bf16.msra.mxu0 0
    %4126 = vmatprep.subr.bf16.mxu0 0
    %4127 = vmatpush1.bf16.msra.mxu0 0
    %4128 = vmatprep.subr.bf16.mxu0 0
    %4129 = vmatpush1.bf16.msra.mxu0 0
    %4130 = vmatprep.subr.bf16.mxu0 0
    %4131 = vmatpush1.bf16.msra.mxu0 0
    %4132 = vmatprep.subr.bf16.mxu0 0
    %4133 = vmatpush1.bf16.msra.mxu0 %v4116
    %4134 = vmatprep.subr.bf16.mxu0 0
    %4135 = vmatpush2.bf16.msra.mxu0 0
    %4136 = vmatprep.subr.bf16.mxu0 0
    %4137 = vmatpush2.bf16.msra.mxu0 0
    %4138 = vmatprep.subr.bf16.mxu0 0
    %4139 = vmatpush2.bf16.msra.mxu0 0
    %4140 = vmatprep.subr.bf16.mxu0 0
    %4141 = vmatpush2.bf16.msra.mxu0 0
    %4142 = vmatprep.subr.bf16.mxu0 0
    %4143 = vmatpush2.bf16.msra.mxu0 0
    %4144 = vmatprep.subr.bf16.mxu0 0
    %4145 = vmatpush2.bf16.msra.mxu0 0
    %4146 = vmatprep.subr.bf16.mxu0 0
    %4147 = vmatpush2.bf16.msra.mxu0 0
    %4148 = vmatprep.subr.bf16.mxu0 0
    %4149 = vmatpush2.bf16.msra.mxu0 0
    %4150 = vmatprep.mubr.bf16.mxu0 0
    %4151 = vmatmul.mubr.bf16.gmra.mxu0 %v4113
    %v4152 = vpop.f32.mrf.mxu0
    %v4153 = vadd.f32 0.0, %v4152
    %v4154 = vpop.f32.mrf.mxu0
    %v4155 = vpop.f32.mrf.mxu0
    %v4156 = vpop.f32.mrf.mxu0
    %4157 = vdwg.mxu0
    %v4158 = vpack.c.bf16 %v4105, %v4057
    %v4159 = vpack.c.bf16 %v4153, %v4153
    %4160 = vrot.lane.b32.xlu0 %v3820, 112
    %v4161 = vpop.permute.xlu0 %4160
    %4162 = vrot.lane.b32.xlu0 %v3820, 80
    %v4163 = vpop.permute.xlu0 %4162
    %v4165 = vsel %vm1693, %v4161, 0
    %v4168 = vsel %vm1693, %v4163, 0
    %4170 = vmatprep.subr.bf16.mxu0 0
    %4171 = vmatpush1.bf16.xpose.msra.mxu0 0
    %4172 = vmatprep.subr.bf16.mxu0 0
    %4173 = vmatpush1.bf16.xpose.msra.mxu0 0
    %4174 = vmatprep.subr.bf16.mxu0 0
    %4175 = vmatpush1.bf16.xpose.msra.mxu0 0
    %4176 = vmatprep.subr.bf16.mxu0 0
    %4177 = vmatpush1.bf16.xpose.msra.mxu0 0
    %4178 = vmatprep.subr.bf16.mxu0 0
    %4179 = vmatpush1.bf16.xpose.msra.mxu0 0
    %4180 = vmatprep.subr.bf16.mxu0 0
    %4181 = vmatpush1.bf16.xpose.msra.mxu0 0
    %4182 = vmatprep.subr.bf16.mxu0 0
    %4183 = vmatpush1.bf16.xpose.msra.mxu0 0
    %4184 = vmatprep.subr.bf16.mxu0 0
    %4185 = vmatpush1.bf16.xpose.msra.mxu0 %v4168
    %4186 = vmatprep.subr.bf16.mxu0 0
    %4187 = vmatpush2.bf16.xpose.msra.mxu0 0
    %4188 = vmatprep.subr.bf16.mxu0 0
    %4189 = vmatpush2.bf16.xpose.msra.mxu0 0
    %4190 = vmatprep.subr.bf16.mxu0 0
    %4191 = vmatpush2.bf16.xpose.msra.mxu0 0
    %4192 = vmatprep.subr.bf16.mxu0 0
    %4193 = vmatpush2.bf16.xpose.msra.mxu0 0
    %4194 = vmatprep.subr.bf16.mxu0 0
    %4195 = vmatpush2.bf16.xpose.msra.mxu0 0
    %4196 = vmatprep.subr.bf16.mxu0 0
    %4197 = vmatpush2.bf16.xpose.msra.mxu0 0
    %4198 = vmatprep.subr.bf16.mxu0 0
    %4199 = vmatpush2.bf16.xpose.msra.mxu0 0
    %4200 = vmatprep.subr.bf16.mxu0 0
    %4201 = vmatpush2.bf16.xpose.msra.mxu0 0
    %4202 = vmatprep.mubr.bf16.mxu0 0
    %4203 = vmatmul.mubr.bf16.gmra.mxu0 %v4165
    %v4204 = vpop.f32.mrf.mxu0
    %v4205 = vadd.f32 0.0, %v4204
    %v4206 = vpop.f32.mrf.mxu0
    %v4207 = vpop.f32.mrf.mxu0
    %v4208 = vpop.f32.mrf.mxu0
    %4209 = vdwg.mxu0
    %4210 = vrot.lane.b32.xlu0 %v3821, 112
    %v4211 = vpop.permute.xlu0 %4210
    %4212 = vrot.lane.b32.xlu0 %v3821, 80
    %v4213 = vpop.permute.xlu0 %4212
    %v4215 = vsel %vm1693, %v4211, 0
    %v4218 = vsel %vm1693, %v4213, 0
    %4220 = vmatprep.subr.bf16.mxu0 0
    %4221 = vmatpush1.bf16.xpose.msra.mxu0 0
    %4222 = vmatprep.subr.bf16.mxu0 0
    %4223 = vmatpush1.bf16.xpose.msra.mxu0 0
    %4224 = vmatprep.subr.bf16.mxu0 0
    %4225 = vmatpush1.bf16.xpose.msra.mxu0 0
    %4226 = vmatprep.subr.bf16.mxu0 0
    %4227 = vmatpush1.bf16.xpose.msra.mxu0 0
    %4228 = vmatprep.subr.bf16.mxu0 0
    %4229 = vmatpush1.bf16.xpose.msra.mxu0 0
    %4230 = vmatprep.subr.bf16.mxu0 0
    %4231 = vmatpush1.bf16.xpose.msra.mxu0 0
    %4232 = vmatprep.subr.bf16.mxu0 0
    %4233 = vmatpush1.bf16.xpose.msra.mxu0 0
    %4234 = vmatprep.subr.bf16.mxu0 0
    %4235 = vmatpush1.bf16.xpose.msra.mxu0 %v4218
    %4236 = vmatprep.subr.bf16.mxu0 0
    %4237 = vmatpush2.bf16.xpose.msra.mxu0 0
    %4238 = vmatprep.subr.bf16.mxu0 0
    %4239 = vmatpush2.bf16.xpose.msra.mxu0 0
    %4240 = vmatprep.subr.bf16.mxu0 0
    %4241 = vmatpush2.bf16.xpose.msra.mxu0 0
    %4242 = vmatprep.subr.bf16.mxu0 0
    %4243 = vmatpush2.bf16.xpose.msra.mxu0 0
    %4244 = vmatprep.subr.bf16.mxu0 0
    %4245 = vmatpush2.bf16.xpose.msra.mxu0 0
    %4246 = vmatprep.subr.bf16.mxu0 0
    %4247 = vmatpush2.bf16.xpose.msra.mxu0 0
    %4248 = vmatprep.subr.bf16.mxu0 0
    %4249 = vmatpush2.bf16.xpose.msra.mxu0 0
    %4250 = vmatprep.subr.bf16.mxu0 0
    %4251 = vmatpush2.bf16.xpose.msra.mxu0 0
    %4252 = vmatprep.mubr.bf16.mxu0 0
    %4253 = vmatmul.mubr.bf16.gmra.mxu0 %v4215
    %v4254 = vpop.f32.mrf.mxu0
    %v4255 = vadd.f32 0.0, %v4254
    %v4256 = vpop.f32.mrf.mxu0
    %v4257 = vpop.f32.mrf.mxu0
    %v4258 = vpop.f32.mrf.mxu0
    %4259 = vdwg.mxu0
    %4260 = vrot.lane.b32.xlu0 %v3822, 112
    %v4261 = vpop.permute.xlu0 %4260
    %4262 = vrot.lane.b32.xlu0 %v3822, 80
    %v4263 = vpop.permute.xlu0 %4262
    %v4265 = vsel %vm1693, %v4261, 0
    %v4268 = vsel %vm1693, %v4263, 0
    %4270 = vmatprep.subr.bf16.mxu0 0
    %4271 = vmatpush1.bf16.xpose.msra.mxu0 0
    %4272 = vmatprep.subr.bf16.mxu0 0
    %4273 = vmatpush1.bf16.xpose.msra.mxu0 0
    %4274 = vmatprep.subr.bf16.mxu0 0
    %4275 = vmatpush1.bf16.xpose.msra.mxu0 0
    %4276 = vmatprep.subr.bf16.mxu0 0
    %4277 = vmatpush1.bf16.xpose.msra.mxu0 0
    %4278 = vmatprep.subr.bf16.mxu0 0
    %4279 = vmatpush1.bf16.xpose.msra.mxu0 0
    %4280 = vmatprep.subr.bf16.mxu0 0
    %4281 = vmatpush1.bf16.xpose.msra.mxu0 0
    %4282 = vmatprep.subr.bf16.mxu0 0
    %4283 = vmatpush1.bf16.xpose.msra.mxu0 0
    %4284 = vmatprep.subr.bf16.mxu0 0
    %4285 = vmatpush1.bf16.xpose.msra.mxu0 %v4268
    %4286 = vmatprep.subr.bf16.mxu0 0
    %4287 = vmatpush2.bf16.xpose.msra.mxu0 0
    %4288 = vmatprep.subr.bf16.mxu0 0
    %4289 = vmatpush2.bf16.xpose.msra.mxu0 0
    %4290 = vmatprep.subr.bf16.mxu0 0
    %4291 = vmatpush2.bf16.xpose.msra.mxu0 0
    %4292 = vmatprep.subr.bf16.mxu0 0
    %4293 = vmatpush2.bf16.xpose.msra.mxu0 0
    %4294 = vmatprep.subr.bf16.mxu0 0
    %4295 = vmatpush2.bf16.xpose.msra.mxu0 0
    %4296 = vmatprep.subr.bf16.mxu0 0
    %4297 = vmatpush2.bf16.xpose.msra.mxu0 0
    %4298 = vmatprep.subr.bf16.mxu0 0
    %4299 = vmatpush2.bf16.xpose.msra.mxu0 0
    %4300 = vmatprep.subr.bf16.mxu0 0
    %4301 = vmatpush2.bf16.xpose.msra.mxu0 0
    %4302 = vmatprep.mubr.bf16.mxu0 0
    %4303 = vmatmul.mubr.bf16.gmra.mxu0 %v4265
    %v4304 = vpop.f32.mrf.mxu0
    %v4305 = vadd.f32 0.0, %v4304
    %v4306 = vpop.f32.mrf.mxu0
    %v4307 = vpop.f32.mrf.mxu0
    %v4308 = vpop.f32.mrf.mxu0
    %4309 = vdwg.mxu0
    %v4310 = vmul.f32 %v4205, 0.25
    %v4311 = vmul.f32 %v4255, 0.25
    %v4312 = vmul.f32 %v4305, 0.25
    %v4313 = vadd.f32 %v4310, %v3819
    %v4314 = vadd.f32 %v4311, %v3819
    %v4315 = vadd.f32 %v4312, %v3819
    %v4316 = vsel %vm3976, %v4313, -inf
    %4317 = vmax.xlane.f32.xlu0 %v4316
    %v4318 = vpop.xlane.xlu0 %4317
    %v4319 = vsel %vm3976, %v4314, -inf
    %4320 = vmax.xlane.f32.xlu0 %v4319
    %v4321 = vpop.xlane.xlu0 %4320
    %v4322 = vsel %vm3976, %v4315, -inf
    %4323 = vmax.xlane.f32.xlu0 %v4322
    %v4324 = vpop.xlane.xlu0 %4323
    %v4325 = vsub.f32 %v4313, %v4318
    %v4326 = vsub.f32 %v4314, %v4321
    %v4327 = vsub.f32 %v4315, %v4324
    %v4328 = vmul.f32 %v4325, 1.442695
    %v4329 = vpow.pop %v4328
    %v4330 = vmul.f32 %v4326, 1.442695
    %v4331 = vpow.pop %v4330
    %v4332 = vmul.f32 %v4327, 1.442695
    %v4333 = vpow.pop %v4332
    %v4334 = vsel %vm3976, %v4329, 0.0
    %4335 = vadd.xlane.f32.xlu0 %v4334
    %v4336 = vpop.xlane.xlu0 %4335
    %v4337 = vsel %vm3976, %v4331, 0.0
    %4338 = vadd.xlane.f32.xlu0 %v4337
    %v4339 = vpop.xlane.xlu0 %4338
    %v4340 = vsel %vm3976, %v4333, 0.0
    %4341 = vadd.xlane.f32.xlu0 %v4340
    %v4342 = vpop.xlane.xlu0 %4341
    %v4343 = vrcp.pop %v4336
    %v4344 = vrcp.pop %v4339
    %v4345 = vrcp.pop %v4342
    %v4346 = vmul.f32 %v4329, %v4343
    %v4347 = vmul.f32 %v4331, %v4344
    %v4348 = vmul.f32 %v4333, %v4345
    %v4349 = vpack.c.bf16 %v4346, %v4346
    %v4350 = vpack.c.bf16 %v4347, %v4347
    %v4351 = vpack.c.bf16 %v4348, %v4348
    %4352 = vrot.lane.b32.xlu0 %v3820, 48
    %v4353 = vpop.permute.xlu0 %4352
    %v4355 = vsel %vm3976, %v4349, 0
    %v4358 = vsel %vm4018, %v4353, 0
    %4360 = vmatprep.subr.bf16.mxu0 0
    %4361 = vmatpush1.bf16.msra.mxu0 0
    %4362 = vmatprep.subr.bf16.mxu0 0
    %4363 = vmatpush1.bf16.msra.mxu0 0
    %4364 = vmatprep.subr.bf16.mxu0 0
    %4365 = vmatpush1.bf16.msra.mxu0 0
    %4366 = vmatprep.subr.bf16.mxu0 0
    %4367 = vmatpush1.bf16.msra.mxu0 0
    %4368 = vmatprep.subr.bf16.mxu0 0
    %4369 = vmatpush1.bf16.msra.mxu0 0
    %4370 = vmatprep.subr.bf16.mxu0 0
    %4371 = vmatpush1.bf16.msra.mxu0 0
    %4372 = vmatprep.subr.bf16.mxu0 0
    %4373 = vmatpush1.bf16.msra.mxu0 0
    %4374 = vmatprep.subr.bf16.mxu0 0
    %4375 = vmatpush1.bf16.msra.mxu0 %v4358
    %4376 = vmatprep.subr.bf16.mxu0 0
    %4377 = vmatpush2.bf16.msra.mxu0 0
    %4378 = vmatprep.subr.bf16.mxu0 0
    %4379 = vmatpush2.bf16.msra.mxu0 0
    %4380 = vmatprep.subr.bf16.mxu0 0
    %4381 = vmatpush2.bf16.msra.mxu0 0
    %4382 = vmatprep.subr.bf16.mxu0 0
    %4383 = vmatpush2.bf16.msra.mxu0 0
    %4384 = vmatprep.subr.bf16.mxu0 0
    %4385 = vmatpush2.bf16.msra.mxu0 0
    %4386 = vmatprep.subr.bf16.mxu0 0
    %4387 = vmatpush2.bf16.msra.mxu0 0
    %4388 = vmatprep.subr.bf16.mxu0 0
    %4389 = vmatpush2.bf16.msra.mxu0 0
    %4390 = vmatprep.subr.bf16.mxu0 0
    %4391 = vmatpush2.bf16.msra.mxu0 0
    %4392 = vmatprep.mubr.bf16.mxu0 0
    %4393 = vmatmul.mubr.bf16.gmra.mxu0 %v4355
    %v4394 = vpop.f32.mrf.mxu0
    %v4395 = vadd.f32 0.0, %v4394
    %v4396 = vpop.f32.mrf.mxu0
    %v4397 = vpop.f32.mrf.mxu0
    %v4398 = vpop.f32.mrf.mxu0
    %4399 = vdwg.mxu0
    %4400 = vrot.lane.b32.xlu0 %v3821, 48
    %v4401 = vpop.permute.xlu0 %4400
    %v4403 = vsel %vm3976, %v4350, 0
    %v4406 = vsel %vm4018, %v4401, 0
    %4408 = vmatprep.subr.bf16.mxu0 0
    %4409 = vmatpush1.bf16.msra.mxu0 0
    %4410 = vmatprep.subr.bf16.mxu0 0
    %4411 = vmatpush1.bf16.msra.mxu0 0
    %4412 = vmatprep.subr.bf16.mxu0 0
    %4413 = vmatpush1.bf16.msra.mxu0 0
    %4414 = vmatprep.subr.bf16.mxu0 0
    %4415 = vmatpush1.bf16.msra.mxu0 0
    %4416 = vmatprep.subr.bf16.mxu0 0
    %4417 = vmatpush1.bf16.msra.mxu0 0
    %4418 = vmatprep.subr.bf16.mxu0 0
    %4419 = vmatpush1.bf16.msra.mxu0 0
    %4420 = vmatprep.subr.bf16.mxu0 0
    %4421 = vmatpush1.bf16.msra.mxu0 0
    %4422 = vmatprep.subr.bf16.mxu0 0
    %4423 = vmatpush1.bf16.msra.mxu0 %v4406
    %4424 = vmatprep.subr.bf16.mxu0 0
    %4425 = vmatpush2.bf16.msra.mxu0 0
    %4426 = vmatprep.subr.bf16.mxu0 0
    %4427 = vmatpush2.bf16.msra.mxu0 0
    %4428 = vmatprep.subr.bf16.mxu0 0
    %4429 = vmatpush2.bf16.msra.mxu0 0
    %4430 = vmatprep.subr.bf16.mxu0 0
    %4431 = vmatpush2.bf16.msra.mxu0 0
    %4432 = vmatprep.subr.bf16.mxu0 0
    %4433 = vmatpush2.bf16.msra.mxu0 0
    %4434 = vmatprep.subr.bf16.mxu0 0
    %4435 = vmatpush2.bf16.msra.mxu0 0
    %4436 = vmatprep.subr.bf16.mxu0 0
    %4437 = vmatpush2.bf16.msra.mxu0 0
    %4438 = vmatprep.subr.bf16.mxu0 0
    %4439 = vmatpush2.bf16.msra.mxu0 0
    %4440 = vmatprep.mubr.bf16.mxu0 0
    %4441 = vmatmul.mubr.bf16.gmra.mxu0 %v4403
    %v4442 = vpop.f32.mrf.mxu0
    %v4443 = vadd.f32 0.0, %v4442
    %v4444 = vpop.f32.mrf.mxu0
    %v4445 = vpop.f32.mrf.mxu0
    %v4446 = vpop.f32.mrf.mxu0
    %4447 = vdwg.mxu0
    %4448 = vrot.lane.b32.xlu0 %v3822, 48
    %v4449 = vpop.permute.xlu0 %4448
    %v4451 = vsel %vm3976, %v4351, 0
    %v4454 = vsel %vm4018, %v4449, 0
    %4456 = vmatprep.subr.bf16.mxu0 0
    %4457 = vmatpush1.bf16.msra.mxu0 0
    %4458 = vmatprep.subr.bf16.mxu0 0
    %4459 = vmatpush1.bf16.msra.mxu0 0
    %4460 = vmatprep.subr.bf16.mxu0 0
    %4461 = vmatpush1.bf16.msra.mxu0 0
    %4462 = vmatprep.subr.bf16.mxu0 0
    %4463 = vmatpush1.bf16.msra.mxu0 0
    %4464 = vmatprep.subr.bf16.mxu0 0
    %4465 = vmatpush1.bf16.msra.mxu0 0
    %4466 = vmatprep.subr.bf16.mxu0 0
    %4467 = vmatpush1.bf16.msra.mxu0 0
    %4468 = vmatprep.subr.bf16.mxu0 0
    %4469 = vmatpush1.bf16.msra.mxu0 0
    %4470 = vmatprep.subr.bf16.mxu0 0
    %4471 = vmatpush1.bf16.msra.mxu0 %v4454
    %4472 = vmatprep.subr.bf16.mxu0 0
    %4473 = vmatpush2.bf16.msra.mxu0 0
    %4474 = vmatprep.subr.bf16.mxu0 0
    %4475 = vmatpush2.bf16.msra.mxu0 0
    %4476 = vmatprep.subr.bf16.mxu0 0
    %4477 = vmatpush2.bf16.msra.mxu0 0
    %4478 = vmatprep.subr.bf16.mxu0 0
    %4479 = vmatpush2.bf16.msra.mxu0 0
    %4480 = vmatprep.subr.bf16.mxu0 0
    %4481 = vmatpush2.bf16.msra.mxu0 0
    %4482 = vmatprep.subr.bf16.mxu0 0
    %4483 = vmatpush2.bf16.msra.mxu0 0
    %4484 = vmatprep.subr.bf16.mxu0 0
    %4485 = vmatpush2.bf16.msra.mxu0 0
    %4486 = vmatprep.subr.bf16.mxu0 0
    %4487 = vmatpush2.bf16.msra.mxu0 0
    %4488 = vmatprep.mubr.bf16.mxu0 0
    %4489 = vmatmul.mubr.bf16.gmra.mxu0 %v4451
    %v4490 = vpop.f32.mrf.mxu0
    %v4491 = vadd.f32 0.0, %v4490
    %v4492 = vpop.f32.mrf.mxu0
    %v4493 = vpop.f32.mrf.mxu0
    %v4494 = vpop.f32.mrf.mxu0
    %4495 = vdwg.mxu0
    %v4496 = vpack.c.bf16 %v4443, %v4395
    %v4497 = vpack.c.bf16 %v4491, %v4491
    %v4500 = vunpack.c.l.b16 %v3656
    %v4501 = vunpack.c.l.b16 %v3657
    %v4502 = vpack.c.b16 %v4501, %v4500
    %v4505 = vsel %vm1693, %v4496, 0
    %v4508 = vsel %vm1693, %v4497, 0
    %4510 = vmatprep.subr.bf16.mxu0 0
    %4511 = vmatpush1.bf16.msra.mxu0 0
    %4512 = vmatprep.subr.bf16.mxu0 0
    %4513 = vmatpush1.bf16.msra.mxu0 0
    %4514 = vmatprep.subr.bf16.mxu0 0
    %4515 = vmatpush1.bf16.msra.mxu0 0
    %4516 = vmatprep.subr.bf16.mxu0 0
    %4517 = vmatpush1.bf16.msra.mxu0 0
    %4518 = vmatprep.subr.bf16.mxu0 0
    %4519 = vmatpush1.bf16.msra.mxu0 0
    %4520 = vmatprep.subr.bf16.mxu0 0
    %4521 = vmatpush1.bf16.msra.mxu0 0
    %4522 = vmatprep.subr.bf16.mxu0 0
    %4523 = vmatpush1.bf16.msra.mxu0 0
    %4524 = vmatprep.subr.bf16.mxu0 0
    %4525 = vmatpush1.bf16.msra.mxu0 %v4502
    %4526 = vmatprep.subr.bf16.mxu0 0
    %4527 = vmatpush2.bf16.msra.mxu0 0
    %4528 = vmatprep.subr.bf16.mxu0 0
    %4529 = vmatpush2.bf16.msra.mxu0 0
    %4530 = vmatprep.subr.bf16.mxu0 0
    %4531 = vmatpush2.bf16.msra.mxu0 0
    %4532 = vmatprep.subr.bf16.mxu0 0
    %4533 = vmatpush2.bf16.msra.mxu0 0
    %4534 = vmatprep.subr.bf16.mxu0 0
    %4535 = vmatpush2.bf16.msra.mxu0 0
    %4536 = vmatprep.subr.bf16.mxu0 0
    %4537 = vmatpush2.bf16.msra.mxu0 0
    %4538 = vmatprep.subr.bf16.mxu0 0
    %4539 = vmatpush2.bf16.msra.mxu0 0
    %4540 = vmatprep.subr.bf16.mxu0 0
    %4541 = vmatpush2.bf16.msra.mxu0 0
    %4542 = vmatprep.mubr.bf16.mxu0 0
    %4543 = vmatmul.mubr.bf16.gmra.mxu0 %v4505
    %v4544 = vpop.f32.mrf.mxu0
    %v4545 = vadd.f32 0.0, %v4544
    %v4546 = vpop.f32.mrf.mxu0
    %v4547 = vpop.f32.mrf.mxu0
    %v4548 = vadd.f32 0.0, %v4547
    %v4549 = vpop.f32.mrf.mxu0
    %4550 = vmatprep.mubr.bf16.mxu0 0
    %4551 = vmatmul.mubr.bf16.gmra.mxu0 %v4508
    %v4552 = vpop.f32.mrf.mxu0
    %v4553 = vadd.f32 0.0, %v4552
    %v4554 = vpop.f32.mrf.mxu0
    %v4555 = vpop.f32.mrf.mxu0
    %v4556 = vpop.f32.mrf.mxu0
    %4557 = vdwg.mxu0
    %v4560 = vunpack.c.l.b16 %v3654
    %v4561 = vunpack.c.l.b16 %v3655
    %v4562 = vpack.c.b16 %v4561, %v4560
    %v4565 = vsel %vm1693, %v4158, 0
    %v4568 = vsel %vm1693, %v4159, 0
    %4570 = vmatprep.subr.bf16.mxu0 0
    %4571 = vmatpush1.bf16.msra.mxu0 0
    %4572 = vmatprep.subr.bf16.mxu0 0
    %4573 = vmatpush1.bf16.msra.mxu0 0
    %4574 = vmatprep.subr.bf16.mxu0 0
    %4575 = vmatpush1.bf16.msra.mxu0 0
    %4576 = vmatprep.subr.bf16.mxu0 0
    %4577 = vmatpush1.bf16.msra.mxu0 0
    %4578 = vmatprep.subr.bf16.mxu0 0
    %4579 = vmatpush1.bf16.msra.mxu0 0
    %4580 = vmatprep.subr.bf16.mxu0 0
    %4581 = vmatpush1.bf16.msra.mxu0 0
    %4582 = vmatprep.subr.bf16.mxu0 0
    %4583 = vmatpush1.bf16.msra.mxu0 0
    %4584 = vmatprep.subr.bf16.mxu0 0
    %4585 = vmatpush1.bf16.msra.mxu0 %v4562
    %4586 = vmatprep.subr.bf16.mxu0 0
    %4587 = vmatpush2.bf16.msra.mxu0 0
    %4588 = vmatprep.subr.bf16.mxu0 0
    %4589 = vmatpush2.bf16.msra.mxu0 0
    %4590 = vmatprep.subr.bf16.mxu0 0
    %4591 = vmatpush2.bf16.msra.mxu0 0
    %4592 = vmatprep.subr.bf16.mxu0 0
    %4593 = vmatpush2.bf16.msra.mxu0 0
    %4594 = vmatprep.subr.bf16.mxu0 0
    %4595 = vmatpush2.bf16.msra.mxu0 0
    %4596 = vmatprep.subr.bf16.mxu0 0
    %4597 = vmatpush2.bf16.msra.mxu0 0
    %4598 = vmatprep.subr.bf16.mxu0 0
    %4599 = vmatpush2.bf16.msra.mxu0 0
    %4600 = vmatprep.subr.bf16.mxu0 0
    %4601 = vmatpush2.bf16.msra.mxu0 0
    %4602 = vmatprep.mubr.bf16.mxu0 0
    %4603 = vmatmul.mubr.bf16.gmra.mxu0 %v4565
    %v4604 = vpop.f32.mrf.mxu0
    %v4605 = vadd.f32 %v4545, %v4604
    %v4606 = vpop.f32.mrf.mxu0
    %v4607 = vpop.f32.mrf.mxu0
    %v4608 = vadd.f32 %v4548, %v4607
    %v4609 = vpop.f32.mrf.mxu0
    %4610 = vmatprep.mubr.bf16.mxu0 0
    %4611 = vmatmul.mubr.bf16.gmra.mxu0 %v4568
    %v4612 = vpop.f32.mrf.mxu0
    %v4613 = vadd.f32 %v4553, %v4612
    %v4614 = vpop.f32.mrf.mxu0
    %v4615 = vpop.f32.mrf.mxu0
    %v4616 = vpop.f32.mrf.mxu0
    %4617 = vdwg.mxu0
    %v4618 = vadd.f32 %v3644, %v4605
    %v4619 = vadd.f32 %v3645, %v4608
    %v4620 = vadd.f32 %v3646, %v4613
    %v4622 = vlaneseq
    %v4623 = vshrl.u32 %v4622, 7
    %v4624 = vsub.s32 0, %v4623
    %v4625 = vrot.slane %v3658, %v4624
    %v4627 = vadd.f32 %v4618, %v4625
    %v4628 = vadd.f32 %v4619, %v4625
    %v4629 = vadd.f32 %v4620, %v4625
    %v4630 = vsel %vm533, %v4627, 0.0
    %4631 = vadd.xlane.f32.xlu0 %v4630
    %v4632 = vpop.xlane.xlu0 %4631
    %v4633 = vsel %vm533, %v4628, 0.0
    %4634 = vadd.xlane.f32.xlu0 %v4633
    %v4635 = vpop.xlane.xlu0 %4634
    %v4636 = vsel %vm533, %v4629, 0.0
    %4637 = vadd.xlane.f32.xlu0 %v4636
    %v4638 = vpop.xlane.xlu0 %4637
    %v4639 = vmul.f32 %v4632, %v541
    %v4640 = vmul.f32 %v4635, %v541
    %v4641 = vmul.f32 %v4638, %v541
    %v4642 = vsub.f32 %v4627, %v4639
    %v4643 = vsub.f32 %v4628, %v4640
    %v4644 = vsub.f32 %v4629, %v4641
    %v4645 = vmul.f32 %v4642, %v4642
    %v4646 = vmul.f32 %v4643, %v4643
    %v4647 = vmul.f32 %v4644, %v4644
    %v4648 = vsel %vm533, %v4645, 0.0
    %4649 = vadd.xlane.f32.xlu0 %v4648
    %v4650 = vpop.xlane.xlu0 %4649
    %v4651 = vsel %vm533, %v4646, 0.0
    %4652 = vadd.xlane.f32.xlu0 %v4651
    %v4653 = vpop.xlane.xlu0 %4652
    %v4654 = vsel %vm533, %v4647, 0.0
    %4655 = vadd.xlane.f32.xlu0 %v4654
    %v4656 = vpop.xlane.xlu0 %4655
    %v4657 = vmul.f32 %v4650, %v541
    %v4658 = vmul.f32 %v4653, %v541
    %v4659 = vmul.f32 %v4656, %v541
    %v4660 = vadd.f32 %v4657, 1e-05
    %v4661 = vadd.f32 %v4658, 1e-05
    %v4662 = vadd.f32 %v4659, 1e-05
    %v4663 = vrsqrt.pop %v4660
    %v4664 = vrsqrt.pop %v4661
    %v4665 = vrsqrt.pop %v4662
    %v4666 = vmul.f32 %v4642, %v4663
    %v4667 = vmul.f32 %v4643, %v4664
    %v4668 = vmul.f32 %v4644, %v4665
    %v4670 = vlaneseq
    %v4671 = vshrl.u32 %v4670, 7
    %v4672 = vsub.s32 0, %v4671
    %v4673 = vrot.slane %v3659, %v4672
    %v4675 = vmul.f32 %v4666, %v4673
    %v4676 = vmul.f32 %v4667, %v4673
    %v4677 = vmul.f32 %v4668, %v4673
    %v4679 = vlaneseq
    %v4680 = vshrl.u32 %v4679, 7
    %v4681 = vsub.s32 0, %v4680
    %v4682 = vrot.slane %v3660, %v4681
    %v4684 = vadd.f32 %v4675, %v4682
    %v4685 = vadd.f32 %v4676, %v4682
    %v4686 = vadd.f32 %v4677, %v4682
    %v4687 = vpack.c.bf16 %v4685, %v4684
    %v4688 = vpack.c.bf16 %v4686, %v4686
    %v4690 = vlaneseq
    %v4691 = vshrl.u32 %v4690, 7
    %v4692 = vsub.s32 0, %v4691
    %v4693 = vrot.slane %v3665, %v4692
    %v4699 = vunpack.c.l.b16 %v3661
    %v4700 = vunpack.c.l.b16 %v3662
    %v4701 = vunpack.c.l.b16 %v3663
    %v4702 = vunpack.c.l.b16 %v3664
    %v4703 = vpack.c.b16 %v4700, %v4699
    %v4704 = vpack.c.b16 %v4702, %v4701
    %v4708 = vsel %vm533, %v4687, 0
    %v4711 = vsel %vm533, %v4688, 0
    %4713 = vmatprep.subr.bf16.mxu0 0
    %4714 = vmatpush1.bf16.msra.mxu0 0
    %4715 = vmatprep.subr.bf16.mxu0 0
    %4716 = vmatpush1.bf16.msra.mxu0 0
    %4717 = vmatprep.subr.bf16.mxu0 0
    %4718 = vmatpush1.bf16.msra.mxu0 0
    %4719 = vmatprep.subr.bf16.mxu0 0
    %4720 = vmatpush1.bf16.msra.mxu0 0
    %4721 = vmatprep.subr.bf16.mxu0 0
    %4722 = vmatpush1.bf16.msra.mxu0 0
    %4723 = vmatprep.subr.bf16.mxu0 0
    %4724 = vmatpush1.bf16.msra.mxu0 0
    %4725 = vmatprep.subr.bf16.mxu0 0
    %4726 = vmatpush1.bf16.msra.mxu0 %v4704
    %4727 = vmatprep.subr.bf16.mxu0 0
    %4728 = vmatpush1.bf16.msra.mxu0 %v4703
    %4729 = vmatprep.subr.bf16.mxu0 0
    %4730 = vmatpush2.bf16.msra.mxu0 0
    %4731 = vmatprep.subr.bf16.mxu0 0
    %4732 = vmatpush2.bf16.msra.mxu0 0
    %4733 = vmatprep.subr.bf16.mxu0 0
    %4734 = vmatpush2.bf16.msra.mxu0 0
    %4735 = vmatprep.subr.bf16.mxu0 0
    %4736 = vmatpush2.bf16.msra.mxu0 0
    %4737 = vmatprep.subr.bf16.mxu0 0
    %4738 = vmatpush2.bf16.msra.mxu0 0
    %4739 = vmatprep.subr.bf16.mxu0 0
    %4740 = vmatpush2.bf16.msra.mxu0 0
    %4741 = vmatprep.subr.bf16.mxu0 0
    %4742 = vmatpush2.bf16.msra.mxu0 0
    %4743 = vmatprep.subr.bf16.mxu0 0
    %4744 = vmatpush2.bf16.msra.mxu0 0
    %4745 = vmatprep.mubr.bf16.mxu0 0
    %4746 = vmatmul.mubr.bf16.gmra.mxu0 %v4708
    %v4747 = vpop.f32.mrf.mxu0
    %v4748 = vadd.f32 %v4693, %v4747
    %v4749 = vpop.f32.mrf.mxu0
    %v4750 = vpop.f32.mrf.mxu0
    %v4751 = vadd.f32 %v4693, %v4750
    %v4752 = vpop.f32.mrf.mxu0
    %4753 = vmatprep.mubr.bf16.mxu0 0
    %4754 = vmatmul.mubr.bf16.gmra.mxu0 %v4711
    %v4755 = vpop.f32.mrf.mxu0
    %v4756 = vadd.f32 %v4693, %v4755
    %v4757 = vpop.f32.mrf.mxu0
    %v4758 = vpop.f32.mrf.mxu0
    %v4759 = vpop.f32.mrf.mxu0
    %4760 = vdwg.mxu0
    %v4761 = vmul.f32 %v4748, 1.702
    %v4762 = vmul.f32 %v4751, 1.702
    %v4763 = vmul.f32 %v4756, 1.702
    %v4764 = vxor.u32 %v4761, 2147483648
    %v4765 = vxor.u32 %v4762, 2147483648
    %v4766 = vxor.u32 %v4763, 2147483648
    %v4767 = vmul.f32 %v4764, 1.442695
    %v4768 = vpow.pop %v4767
    %v4769 = vmul.f32 %v4765, 1.442695
    %v4770 = vpow.pop %v4769
    %v4771 = vmul.f32 %v4766, 1.442695
    %v4772 = vpow.pop %v4771
    %v4773 = vadd.f32 %v4768, 1.0
    %v4774 = vadd.f32 %v4770, 1.0
    %v4775 = vadd.f32 %v4772, 1.0
    %v4776 = vrcp.pop %v4773
    %v4777 = vmul.f32 1.0, %v4776
    %v4778 = vrcp.pop %v4774
    %v4779 = vmul.f32 1.0, %v4778
    %v4780 = vrcp.pop %v4775
    %v4781 = vmul.f32 1.0, %v4780
    %v4782 = vmul.f32 %v4748, %v4777
    %v4783 = vmul.f32 %v4751, %v4779
    %v4784 = vmul.f32 %v4756, %v4781
    %v4785 = vpack.c.bf16 %v4783, %v4782
    %v4786 = vpack.c.bf16 %v4784, %v4784
    %v4788 = vlaneseq
    %v4789 = vshrl.u32 %v4788, 7
    %v4790 = vsub.s32 0, %v4789
    %v4791 = vrot.slane %v3682, %v4790
    %v4809 = vunpack.c.l.b16 %v3666
    %v4810 = vunpack.c.l.b16 %v3667
    %v4811 = vunpack.c.l.b16 %v3668
    %v4812 = vunpack.c.l.b16 %v3669
    %v4813 = vunpack.c.l.b16 %v3670
    %v4814 = vunpack.c.l.b16 %v3671
    %v4815 = vunpack.c.l.b16 %v3672
    %v4816 = vunpack.c.l.b16 %v3673
    %v4817 = vunpack.c.l.b16 %v3674
    %v4818 = vunpack.c.l.b16 %v3675
    %v4819 = vunpack.c.l.b16 %v3676
    %v4820 = vunpack.c.l.b16 %v3677
    %v4821 = vunpack.c.l.b16 %v3678
    %v4822 = vunpack.c.l.b16 %v3679
    %v4823 = vunpack.c.l.b16 %v3680
    %v4824 = vunpack.c.l.b16 %v3681
    %v4825 = vpack.c.b16 %v4810, %v4809
    %v4826 = vpack.c.b16 %v4812, %v4811
    %v4827 = vpack.c.b16 %v4814, %v4813
    %v4828 = vpack.c.b16 %v4816, %v4815
    %v4829 = vpack.c.b16 %v4818, %v4817
    %v4830 = vpack.c.b16 %v4820, %v4819
    %v4831 = vpack.c.b16 %v4822, %v4821
    %v4832 = vpack.c.b16 %v4824, %v4823
    %4841 = vmatprep.subr.bf16.mxu0 0
    %4842 = vmatpush1.bf16.msra.mxu0 %v4832
    %4843 = vmatprep.subr.bf16.mxu0 0
    %4844 = vmatpush1.bf16.msra.mxu0 %v4831
    %4845 = vmatprep.subr.bf16.mxu0 0
    %4846 = vmatpush1.bf16.msra.mxu0 %v4830
    %4847 = vmatprep.subr.bf16.mxu0 0
    %4848 = vmatpush1.bf16.msra.mxu0 %v4829
    %4849 = vmatprep.subr.bf16.mxu0 0
    %4850 = vmatpush1.bf16.msra.mxu0 %v4828
    %4851 = vmatprep.subr.bf16.mxu0 0
    %4852 = vmatpush1.bf16.msra.mxu0 %v4827
    %4853 = vmatprep.subr.bf16.mxu0 0
    %4854 = vmatpush1.bf16.msra.mxu0 %v4826
    %4855 = vmatprep.subr.bf16.mxu0 0
    %4856 = vmatpush1.bf16.msra.mxu0 %v4825
    %4857 = vmatprep.subr.bf16.mxu0 0
    %4858 = vmatpush2.bf16.msra.mxu0 0
    %4859 = vmatprep.subr.bf16.mxu0 0
    %4860 = vmatpush2.bf16.msra.mxu0 0
    %4861 = vmatprep.subr.bf16.mxu0 0
    %4862 = vmatpush2.bf16.msra.mxu0 0
    %4863 = vmatprep.subr.bf16.mxu0 0
    %4864 = vmatpush2.bf16.msra.mxu0 0
    %4865 = vmatprep.subr.bf16.mxu0 0
    %4866 = vmatpush2.bf16.msra.mxu0 0
    %4867 = vmatprep.subr.bf16.mxu0 0
    %4868 = vmatpush2.bf16.msra.mxu0 0
    %4869 = vmatprep.subr.bf16.mxu0 0
    %4870 = vmatpush2.bf16.msra.mxu0 0
    %4871 = vmatprep.subr.bf16.mxu0 0
    %4872 = vmatpush2.bf16.msra.mxu0 0
    %4873 = vmatprep.mubr.bf16.mxu0 0
    %4874 = vmatmul.mubr.bf16.gmra.mxu0 %v4785
    %v4875 = vpop.f32.mrf.mxu0
    %v4876 = vadd.f32 %v4791, %v4875
    %v4877 = vpop.f32.mrf.mxu0
    %v4878 = vpop.f32.mrf.mxu0
    %v4879 = vadd.f32 %v4791, %v4878
    %v4880 = vpop.f32.mrf.mxu0
    %4881 = vmatprep.mubr.bf16.mxu0 0
    %4882 = vmatmul.mubr.bf16.gmra.mxu0 %v4786
    %v4883 = vpop.f32.mrf.mxu0
    %v4884 = vadd.f32 %v4791, %v4883
    %v4885 = vpop.f32.mrf.mxu0
    %v4886 = vpop.f32.mrf.mxu0
    %v4887 = vpop.f32.mrf.mxu0
    %4888 = vdwg.mxu0
    %v4889 = vadd.f32 %v4627, %v4876
    %v4890 = vadd.f32 %v4628, %v4879
    %v4891 = vadd.f32 %v4629, %v4884
    %v4892 = vld [vmem:[%s69] sm:$0x1]
    %v4893 = vld [vmem:[%s71] sm:$0x1]
    %v4894 = vsel %vm533, %v4889, 0.0
    %4895 = vadd.xlane.f32.xlu0 %v4894
    %v4896 = vpop.xlane.xlu0 %4895
    %v4897 = vsel %vm533, %v4890, 0.0
    %4898 = vadd.xlane.f32.xlu0 %v4897
    %v4899 = vpop.xlane.xlu0 %4898
    %v4900 = vsel %vm533, %v4891, 0.0
    %4901 = vadd.xlane.f32.xlu0 %v4900
    %v4902 = vpop.xlane.xlu0 %4901
    %v4903 = vmul.f32 %v4896, %v541
    %v4904 = vmul.f32 %v4899, %v541
    %v4905 = vmul.f32 %v4902, %v541
    %v4906 = vsub.f32 %v4889, %v4903
    %v4907 = vsub.f32 %v4890, %v4904
    %v4908 = vsub.f32 %v4891, %v4905
    %v4909 = vmul.f32 %v4906, %v4906
    %v4910 = vmul.f32 %v4907, %v4907
    %v4911 = vmul.f32 %v4908, %v4908
    %v4912 = vsel %vm533, %v4909, 0.0
    %4913 = vadd.xlane.f32.xlu0 %v4912
    %v4914 = vpop.xlane.xlu0 %4913
    %v4915 = vsel %vm533, %v4910, 0.0
    %4916 = vadd.xlane.f32.xlu0 %v4915
    %v4917 = vpop.xlane.xlu0 %4916
    %v4918 = vsel %vm533, %v4911, 0.0
    %4919 = vadd.xlane.f32.xlu0 %v4918
    %v4920 = vpop.xlane.xlu0 %4919
    %v4921 = vmul.f32 %v4914, %v541
    %v4922 = vmul.f32 %v4917, %v541
    %v4923 = vmul.f32 %v4920, %v541
    %v4924 = vadd.f32 %v4921, 1e-05
    %v4925 = vadd.f32 %v4922, 1e-05
    %v4926 = vadd.f32 %v4923, 1e-05
    %v4927 = vrsqrt.pop %v4924
    %v4928 = vrsqrt.pop %v4925
    %v4929 = vrsqrt.pop %v4926
    %v4930 = vmul.f32 %v4906, %v4927
    %v4931 = vmul.f32 %v4907, %v4928
    %v4932 = vmul.f32 %v4908, %v4929
    %v4934 = vlaneseq
    %v4935 = vshrl.u32 %v4934, 7
    %v4936 = vsub.s32 0, %v4935
    %v4937 = vrot.slane %v4892, %v4936
    %v4939 = vmul.f32 %v4930, %v4937
    %v4940 = vmul.f32 %v4931, %v4937
    %v4941 = vmul.f32 %v4932, %v4937
    %v4943 = vlaneseq
    %v4944 = vshrl.u32 %v4943, 7
    %v4945 = vsub.s32 0, %v4944
    %v4946 = vrot.slane %v4893, %v4945
    %v4948 = vadd.f32 %v4939, %v4946
    %v4949 = vadd.f32 %v4940, %v4946
    %v4950 = vadd.f32 %v4941, %v4946
    %v4951 = vld [vmem:[%s73] sm:$0x7]
    %vm4952 = vcmask 195584
    %v4954 = vsel %vm4952, %v4951, 0
    %4956 = vmatprep.subr.mxu0 0.0
    %4957 = vmatpush1.msra.mxu0 0.0
    %4958 = vmatprep.subr.mxu0 0.0
    %4959 = vmatpush1.msra.mxu0 0.0
    %4960 = vmatprep.subr.mxu0 0.0
    %4961 = vmatpush1.msra.mxu0 0.0
    %4962 = vmatprep.subr.mxu0 0.0
    %4963 = vmatpush1.msra.mxu0 0.0
    %4964 = vmatprep.subr.mxu0 0.0
    %4965 = vmatpush1.msra.mxu0 0.0
    %4966 = vmatprep.subr.mxu0 0.0
    %4967 = vmatpush1.msra.mxu0 0.0
    %4968 = vmatprep.subr.mxu0 0.0
    %4969 = vmatpush1.msra.mxu0 0.0
    %4970 = vmatprep.subr.mxu0 0.0
    %4971 = vmatpush1.msra.mxu0 0.0
    %4972 = vmatprep.subr.mxu0 0.0
    %4973 = vmatpush1.msra.mxu0 0.0
    %4974 = vmatprep.subr.mxu0 0.0
    %4975 = vmatpush1.msra.mxu0 0.0
    %4976 = vmatprep.subr.mxu0 0.0
    %4977 = vmatpush1.msra.mxu0 0.0
    %4978 = vmatprep.subr.mxu0 0.0
    %4979 = vmatpush1.msra.mxu0 0.0
    %4980 = vmatprep.subr.mxu0 0.0
    %4981 = vmatpush1.msra.mxu0 0.0
    %4982 = vmatprep.subr.mxu0 0.0
    %4983 = vmatpush1.msra.mxu0 %v4950
    %4984 = vmatprep.subr.mxu0 0.0
    %4985 = vmatpush1.msra.mxu0 %v4949
    %4986 = vmatprep.subr.mxu0 0.0
    %4987 = vmatpush1.msra.mxu0 %v4948
    %4988 = vmatprep.subr.mxu0 0.0
    %4989 = vmatpush2.msra.mxu0 0.0
    %4990 = vmatprep.subr.mxu0 0.0
    %4991 = vmatpush2.msra.mxu0 0.0
    %4992 = vmatprep.subr.mxu0 0.0
    %4993 = vmatpush2.msra.mxu0 0.0
    %4994 = vmatprep.subr.mxu0 0.0
    %4995 = vmatpush2.msra.mxu0 0.0
    %4996 = vmatprep.subr.mxu0 0.0
    %4997 = vmatpush2.msra.mxu0 0.0
    %4998 = vmatprep.subr.mxu0 0.0
    %4999 = vmatpush2.msra.mxu0 0.0
    %5000 = vmatprep.subr.mxu0 0.0
    %5001 = vmatpush2.msra.mxu0 0.0
    %5002 = vmatprep.subr.mxu0 0.0
    %5003 = vmatpush2.msra.mxu0 0.0
    %5004 = vmatprep.subr.mxu0 0.0
    %5005 = vmatpush2.msra.mxu0 0.0
    %5006 = vmatprep.subr.mxu0 0.0
    %5007 = vmatpush2.msra.mxu0 0.0
    %5008 = vmatprep.subr.mxu0 0.0
    %5009 = vmatpush2.msra.mxu0 0.0
    %5010 = vmatprep.subr.mxu0 0.0
    %5011 = vmatpush2.msra.mxu0 0.0
    %5012 = vmatprep.subr.mxu0 0.0
    %5013 = vmatpush2.msra.mxu0 0.0
    %5014 = vmatprep.subr.mxu0 0.0
    %5015 = vmatpush2.msra.mxu0 0.0
    %5016 = vmatprep.subr.mxu0 0.0
    %5017 = vmatpush2.msra.mxu0 0.0
    %5018 = vmatprep.subr.mxu0 0.0
    %5019 = vmatpush2.msra.mxu0 0.0
    %5020 = vmatprep.mubr.f32.mxu0 0.0
    %5021 = vmatmul.mubr.f32.gmra.mxu0 %v4954
    %v5022 = vpop.f32.mrf.mxu0
    %v5023 = vadd.f32 0.0, %v5022
    %v5024 = vpop.f32.mrf.mxu0
    %5025 = vdwg.mxu0
    %v5026 = vpack.c.bf16 %v5023, %v5023
    %v5027 = vld [vmem:[%s75] sm:$0xf]
    %v5028 = vld [vmem:[%s75 + $0x4] sm:$0xf]
    %v5029 = vld [vmem:[%s75 + $0x8] sm:$0xf]
    %v5030 = vld [vmem:[%s75 + $0xc] sm:$0xf]
    %v5035 = vunpack.c.l.b16 %v5027
    %v5036 = vunpack.c.l.b16 %v5028
    %v5037 = vunpack.c.l.b16 %v5029
    %v5038 = vunpack.c.l.b16 %v5030
    %v5039 = vpack.c.b16 %v5036, %v5035
    %v5040 = vpack.c.b16 %v5038, %v5037
    %v5044 = vsel %vm533, %v5026, 0
    %5046 = vmatprep.subr.bf16.mxu0 0
    %5047 = vmatpush1.bf16.msra.mxu0 0
    %5048 = vmatprep.subr.bf16.mxu0 0
    %5049 = vmatpush1.bf16.msra.mxu0 0
    %5050 = vmatprep.subr.bf16.mxu0 0
    %5051 = vmatpush1.bf16.msra.mxu0 0
    %5052 = vmatprep.subr.bf16.mxu0 0
    %5053 = vmatpush1.bf16.msra.mxu0 0
    %5054 = vmatprep.subr.bf16.mxu0 0
    %5055 = vmatpush1.bf16.msra.mxu0 0
    %5056 = vmatprep.subr.bf16.mxu0 0
    %5057 = vmatpush1.bf16.msra.mxu0 0
    %5058 = vmatprep.subr.bf16.mxu0 0
    %5059 = vmatpush1.bf16.msra.mxu0 %v5040
    %5060 = vmatprep.subr.bf16.mxu0 0
    %5061 = vmatpush1.bf16.msra.mxu0 %v5039
    %5062 = vmatprep.subr.bf16.mxu0 0
    %5063 = vmatpush2.bf16.msra.mxu0 0
    %5064 = vmatprep.subr.bf16.mxu0 0
    %5065 = vmatpush2.bf16.msra.mxu0 0
    %5066 = vmatprep.subr.bf16.mxu0 0
    %5067 = vmatpush2.bf16.msra.mxu0 0
    %5068 = vmatprep.subr.bf16.mxu0 0
    %5069 = vmatpush2.bf16.msra.mxu0 0
    %5070 = vmatprep.subr.bf16.mxu0 0
    %5071 = vmatpush2.bf16.msra.mxu0 0
    %5072 = vmatprep.subr.bf16.mxu0 0
    %5073 = vmatpush2.bf16.msra.mxu0 0
    %5074 = vmatprep.subr.bf16.mxu0 0
    %5075 = vmatpush2.bf16.msra.mxu0 0
    %5076 = vmatprep.subr.bf16.mxu0 0
    %5077 = vmatpush2.bf16.msra.mxu0 0
    %5078 = vmatprep.mubr.bf16.mxu0 0
    %5079 = vmatmul.mubr.bf16.gmra.mxu0 %v5044
    %v5080 = vpop.f32.mrf.mxu0
    %v5081 = vadd.f32 0.0, %v5080
    %v5082 = vpop.f32.mrf.mxu0
    %v5083 = vpop.f32.mrf.mxu0
    %v5084 = vpop.f32.mrf.mxu0
    %5085 = vdwg.mxu0
    %v5086 = vmul.f32 %v3635, %v3635
    %v5087 = vsel %vm537, %v5086, 0.0
    %5088 = vadd.xlane.f32.xlu0 %v5087
    %v5089 = vpop.xlane.xlu0 %5088
    %v5090 = vadd.f32 %v5089, 1e-12
    %v5091 = vrsqrt.pop %v5090
    %v5092 = vmul.f32 %v3635, %v5091
    %v5093 = vmul.f32 %v5081, %v5081
    %vm5094 = vcmask 256000
    %v5095 = vsel %vm5094, %v5093, 0.0
    %5096 = vadd.xlane.f32.xlu0 %v5095
    %v5097 = vpop.xlane.xlu0 %5096
    %v5098 = vadd.f32 %v5097, 1e-12
    %v5099 = vrsqrt.pop %v5098
    %v5100 = vmul.f32 %v5081, %v5099
    %5101 = vst.msk [vmem:[#allocation4] sm:$0x7] %vm5094, %v5100
    %v5103 = vsel %vm533, %v5092, 0
    %v5106 = vsel %vm533, %v5100, 0
    %5108 = vmatprep.subr.mxu0 0.0
    %5109 = vmatpush1.xpose.msra.mxu0 0.0
    %5110 = vmatprep.subr.mxu0 0.0
    %5111 = vmatpush1.xpose.msra.mxu0 0.0
    %5112 = vmatprep.subr.mxu0 0.0
    %5113 = vmatpush1.xpose.msra.mxu0 0.0
    %5114 = vmatprep.subr.mxu0 0.0
    %5115 = vmatpush1.xpose.msra.mxu0 0.0
    %5116 = vmatprep.subr.mxu0 0.0
    %5117 = vmatpush1.xpose.msra.mxu0 0.0
    %5118 = vmatprep.subr.mxu0 0.0
    %5119 = vmatpush1.xpose.msra.mxu0 0.0
    %5120 = vmatprep.subr.mxu0 0.0
    %5121 = vmatpush1.xpose.msra.mxu0 0.0
    %5122 = vmatprep.subr.mxu0 0.0
    %5123 = vmatpush1.xpose.msra.mxu0 0.0
    %5124 = vmatprep.subr.mxu0 0.0
    %5125 = vmatpush1.xpose.msra.mxu0 0.0
    %5126 = vmatprep.subr.mxu0 0.0
    %5127 = vmatpush1.xpose.msra.mxu0 0.0
    %5128 = vmatprep.subr.mxu0 0.0
    %5129 = vmatpush1.xpose.msra.mxu0 0.0
    %5130 = vmatprep.subr.mxu0 0.0
    %5131 = vmatpush1.xpose.msra.mxu0 0.0
    %5132 = vmatprep.subr.mxu0 0.0
    %5133 = vmatpush1.xpose.msra.mxu0 0.0
    %5134 = vmatprep.subr.mxu0 0.0
    %5135 = vmatpush1.xpose.msra.mxu0 0.0
    %5136 = vmatprep.subr.mxu0 0.0
    %5137 = vmatpush1.xpose.msra.mxu0 0.0
    %5138 = vmatprep.subr.mxu0 0.0
    %5139 = vmatpush1.xpose.msra.mxu0 %v5106
    %5140 = vmatprep.subr.mxu0 0.0
    %5141 = vmatpush2.xpose.msra.mxu0 0.0
    %5142 = vmatprep.subr.mxu0 0.0
    %5143 = vmatpush2.xpose.msra.mxu0 0.0
    %5144 = vmatprep.subr.mxu0 0.0
    %5145 = vmatpush2.xpose.msra.mxu0 0.0
    %5146 = vmatprep.subr.mxu0 0.0
    %5147 = vmatpush2.xpose.msra.mxu0 0.0
    %5148 = vmatprep.subr.mxu0 0.0
    %5149 = vmatpush2.xpose.msra.mxu0 0.0
    %5150 = vmatprep.subr.mxu0 0.0
    %5151 = vmatpush2.xpose.msra.mxu0 0.0
    %5152 = vmatprep.subr.mxu0 0.0
    %5153 = vmatpush2.xpose.msra.mxu0 0.0
    %5154 = vmatprep.subr.mxu0 0.0
    %5155 = vmatpush2.xpose.msra.mxu0 0.0
    %5156 = vmatprep.subr.mxu0 0.0
    %5157 = vmatpush2.xpose.msra.mxu0 0.0
    %5158 = vmatprep.subr.mxu0 0.0
    %5159 = vmatpush2.xpose.msra.mxu0 0.0
    %5160 = vmatprep.subr.mxu0 0.0
    %5161 = vmatpush2.xpose.msra.mxu0 0.0
    %5162 = vmatprep.subr.mxu0 0.0
    %5163 = vmatpush2.xpose.msra.mxu0 0.0
    %5164 = vmatprep.subr.mxu0 0.0
    %5165 = vmatpush2.xpose.msra.mxu0 0.0
    %5166 = vmatprep.subr.mxu0 0.0
    %5167 = vmatpush2.xpose.msra.mxu0 0.0
    %5168 = vmatprep.subr.mxu0 0.0
    %5169 = vmatpush2.xpose.msra.mxu0 0.0
    %5170 = vmatprep.subr.mxu0 0.0
    %5171 = vmatpush2.xpose.msra.mxu0 0.0
    %5172 = vmatprep.mubr.f32.mxu0 0.0
    %5173 = vmatmul.mubr.f32.gmra.mxu0 %v5103
    %v5174 = vpop.f32.mrf.mxu0
    %v5175 = vadd.f32 0.0, %v5174
    %v5176 = vpop.f32.mrf.mxu0
    %5177 = vdwg.mxu0
    %v5178 = vmul.f32 %v5175, 14.285714
    %vm5179 = vcmask 17408
    %5180 = vst.msk [vmem:[#allocation2] sm:$0x3] %vm5179, %v5178
    // Predicated region
    $region154: #{clip_test_time_tuning_forward.1} parent=1 // pred_check
      _
    $region155: #{clip_test_time_tuning_forward.1} parent=1 // pred_check_branch
      %5182 = sbr.rel (0) target = $region157
    $region156: #{clip_test_time_tuning_forward.1} parent=1 // pred_region
      %s5184 = ssub.s32 32, 32
      %5185 = vsyncadd [#allocation3], %s5184
      %s5187 = sshll.u32 [#allocation2], 4
      %s5188 = int_to_ptr.vmem [resolvable:$true] %s5187
      %5190 = dma.vmem_to_hbm [thread:$0]  %s5188, 32, %s77, [#allocation3]
    $region157: #{clip_test_time_tuning_forward.1} parent=1 // pred_fallthru
      _
    // Predicated region
    $region158: #{clip_test_time_tuning_forward.1} parent=1 // pred_check
      _
    $region159: #{clip_test_time_tuning_forward.1} parent=1 // pred_check_branch
      %5192 = sbr.rel (0) target = $region161
    $region160: #{clip_test_time_tuning_forward.1} parent=1 // pred_region
      %s5194 = ssub.s32 64, 64
      %5195 = vsyncadd [#allocation5], %s5194
      %s5197 = sshll.u32 [#allocation4], 4
      %s5198 = int_to_ptr.vmem [resolvable:$true] %s5197
      %5200 = dma.vmem_to_hbm [thread:$0]  %s5198, 64, %s79, [#allocation5]
    $region161: #{clip_test_time_tuning_forward.1} parent=1 // pred_fallthru
      _
    // Predicated region
    $region162: #{clip_test_time_tuning_forward.1} parent=1 // pred_check
      _
    $region163: #{clip_test_time_tuning_forward.1} parent=1 // pred_check_branch
      %5202 = sbr.rel (0) target = $region165
    $region164: #{clip_test_time_tuning_forward.1} parent=1 // pred_region
      %5203 = dma.done [#allocation3], 32
    $region165: #{clip_test_time_tuning_forward.1} parent=1 // pred_fallthru
      _
    // Predicated region
    $region166: #{clip_test_time_tuning_forward.1} parent=1 // pred_check
      _
    $region167: #{clip_test_time_tuning_forward.1} parent=1 // pred_check_branch
      %5205 = sbr.rel (0) target = $region169
    $region168: #{clip_test_time_tuning_forward.1} parent=1 // pred_region
      %5206 = dma.done [#allocation5], 64
    $region169: #{clip_test_time_tuning_forward.1} parent=1 // pred_fallthru
      _
    %5207 = vsyncpa [#allocation3], 1
    %5208 = vsyncpa [#allocation5], 1

</llo_original>
